<compile_context>
chip_gen: v7x
topology: tpu7x:2x2x1
jax: 0.10.0
libtpu: 0.0.40
codegen_flags: <defaults>
</compile_context>

<pallas_src>
import jax
import jax.numpy as jnp
from jax.experimental import pallas as pl
from jax.experimental.pallas import tpu as pltpu

NUM_STORES = 10
NUM_BANKS = 40
INPUT_DIM = 5
HIDDEN = 32
HEADS = 2
NEG_SLOPE = 0.2
NEG_INF = -1e30


# ----------------------------------------------------------------------------
# Fused kernel
# ----------------------------------------------------------------------------
def _masked_softmax_parts(e, adj_bias):
    """leaky_relu(e) + additive mask, row-stabilized exp, and approx 1/rowsum."""
    e = jnp.where(e > 0, e, NEG_SLOPE * e) + adj_bias
    e = e - jnp.max(e, axis=-1, keepdims=True)
    p = jnp.exp(e)
    inv = pl.reciprocal(jnp.sum(p, axis=-1, keepdims=True), approx=True)
    return p, inv


def fused_gnn_kernel(
    x_ref, adjb_ref, growt_ref, gcolt_ref,
    w1_ref, as1_ref, ad1_ref, b1_ref,          # conv1 (heads fused along lanes)
    w2_ref, as2_ref, ad2_ref, b2_ref,          # conv2 (single head)
    wm1rt_ref, wm1ct_ref, bm1_ref,             # edge MLP layer 1 (pre-transposed)
    wm2t_ref, bm2_ref, wm3t_ref, bm3_ref,      # edge MLP layers 2-3
    w4t_ref, b4_ref,                           # edge MLP layer 4
    out_ref,
):
    f32 = jnp.float32
    C = as2_ref.shape[1]
    H = as1_ref.shape[1] // C

    x = x_ref[...]                                                    # [N, Din]
    adjb = adjb_ref[...]                                              # [N, N]

    # ---- conv1 (GAT, H heads) + ReLU, fused with conv2's input projection ----
    hh1 = jnp.dot(x, w1_ref[...], preferred_element_type=f32)         # [N, H*C]
    hh2 = jnp.zeros((x.shape[0], C), dtype=f32)
    for h in range(H):
        lo, hi = h * C, (h + 1) * C
        hh_h = hh1[:, lo:hi]                                           # [N, C]
        a_s = jnp.sum(hh_h * as1_ref[:, lo:hi], axis=-1, keepdims=True)  # [N,1]
        a_d = jnp.sum(hh_h * ad1_ref[:, lo:hi], axis=-1, keepdims=True)  # [N,1]
        # e[i, j] = leaky_relu(a_src[j] + a_dst[i])  for edge j -> i
        p, inv = _masked_softmax_parts(a_d + a_s.T, adjb)
        head = jnp.dot(p, hh_h, preferred_element_type=f32) * inv       # alpha @ h
        x1_h = jnp.maximum(head + b1_ref[:, lo:hi], 0.0)                # [N, C]
        # project this head's slice through conv2's weight block:
        # avoids materializing the [N, H*C] concat entirely.
        hh2 = hh2 + jnp.dot(x1_h, w2_ref[lo:hi, :], preferred_element_type=f32)

    # ---- conv2 (GAT, 1 head) + ReLU ----
    a_s2 = jnp.sum(hh2 * as2_ref[...], axis=-1, keepdims=True)          # [N, 1]
    a_d2 = jnp.sum(hh2 * ad2_ref[...], axis=-1, keepdims=True)          # [N, 1]
    p2, inv2 = _masked_softmax_parts(a_d2 + a_s2.T, adjb)
    x2 = jnp.maximum(
        jnp.dot(p2, hh2, preferred_element_type=f32) * inv2 + b2_ref[...], 0.0
    )                                                                    # [N, C]

    # ---- edge stage, transposed orientation (lane axis = edges, E_PAD dense) ----
    # Layer-1 projection hoisted before the gather (node granularity, N << E):
    #   relu(G_row @ x2 @ Wr + G_col @ x2 @ Wc + b)^T
    #     = relu(Wr^T @ x2^T @ G_row^T + Wc^T @ x2^T @ G_col^T + b^T)
    x2t = x2.T                                                           # [C, N]
    prt = jnp.dot(wm1rt_ref[...], x2t, preferred_element_type=f32)       # [C, N]
    pct = jnp.dot(wm1ct_ref[...], x2t, preferred_element_type=f32)       # [C, N]
    h1 = jnp.maximum(
        jnp.dot(prt, growt_ref[...], preferred_element_type=f32)
        + jnp.dot(pct, gcolt_ref[...], preferred_element_type=f32)
        + bm1_ref[...], 0.0)                                             # [C, E_pad]
    h2 = jnp.maximum(
        jnp.dot(wm2t_ref[...], h1, preferred_element_type=f32) + bm2_ref[...], 0.0)
    h3 = jnp.maximum(
        jnp.dot(wm3t_ref[...], h2, preferred_element_type=f32) + bm3_ref[...], 0.0)
    # lane-dense [1, E_pad] score row (unmasked stores)
    out_ref[...] = jnp.dot(w4t_ref[...], h3, preferred_element_type=f32) + b4_ref[...]


# ----------------------------------------------------------------------------
# Wrapper (single pallas_call, no grid, everything resident in VMEM)
# ----------------------------------------------------------------------------
def foodbank_gnn_forward(x, adj_bias, g_row_t, g_col_t, kparams, *, num_edges):
    e_pad = g_row_t.shape[1]
    vmem = pl.BlockSpec(memory_space=pltpu.MemorySpace.VMEM)
    args = (x, adj_bias, g_row_t, g_col_t) + tuple(kparams)
    out = pl.pallas_call(
        fused_gnn_kernel,
        out_shape=jax.ShapeDtypeStruct((1, e_pad), jnp.float32),
        in_specs=[vmem] * len(args),
        out_specs=vmem,
    )(*args)
    return out[0, :num_edges]


# ----------------------------------------------------------------------------
# Pure-JAX reference (same math, exact division, natural layouts)
# ----------------------------------------------------------------------------
def reference_forward(x, adj_bias, edge_src, edge_dst, params):
    (w1, as1, ad1, b1, w2, as2, ad2, b2,
     wm1, bm1, wm2, bm2, wm3, bm3, w4, b4) = params
    C = as2.shape[1]
    H = as1.shape[1] // C

    def gat(feat, w, a_src, a_dst, bias, heads):
        hh = feat @ w
        outs = []
        for h in range(heads):
            lo, hi = h * C, (h + 1) * C
            hh_h = hh[:, lo:hi]
            s = jnp.sum(hh_h * a_src[:, lo:hi], axis=-1, keepdims=True)
            d = jnp.sum(hh_h * a_dst[:, lo:hi], axis=-1, keepdims=True)
            e = d + s.T
            e = jnp.where(e > 0, e, NEG_SLOPE * e) + adj_bias
            alpha = jax.nn.softmax(e, axis=-1)
            outs.append(alpha @ hh_h)
        return jnp.maximum(jnp.concatenate(outs, axis=-1) + bias, 0.0)

    x1 = gat(x, w1, as1, ad1, b1, H)
    x2 = gat(x1, w2, as2, ad2, b2, 1)
    ef = jnp.concatenate([x2[edge_src], x2[edge_dst]], axis=1)
    h = jnp.maximum(ef @ wm1 + bm1, 0.0)
    h = jnp.maximum(h @ wm2 + bm2, 0.0)
    h = jnp.maximum(h @ wm3 + bm3, 0.0)
    return (h @ w4 + b4).reshape(-1)


# ----------------------------------------------------------------------------
# Deterministic parameter / data construction
# ----------------------------------------------------------------------------
def init_params(key, input_dim, hidden, heads):
    ks = jax.random.split(key, 16)

    def rnd(k, shape, scale=0.1):
        return (scale * jax.random.normal(k, shape)).astype(jnp.float32)

    hc = heads * hidden
    return (
        # conv1 (per-head weight blocks laid out along lanes)
        rnd(ks[0], (input_dim, hc)),      # W1   [Din, H*C]
        rnd(ks[1], (1, hc)),              # att_src1
        rnd(ks[2], (1, hc)),              # att_dst1
        rnd(ks[3], (1, hc)),              # bias1
        # conv2 (single head)
        rnd(ks[4], (hc, hidden)),         # W2   [H*C, C]
        rnd(ks[5], (1, hidden)),          # att_src2
        rnd(ks[6], (1, hidden)),          # att_dst2
        rnd(ks[7], (1, hidden)),          # bias2
        # edge MLP (natural PyTorch-like layout)
        rnd(ks[8], (2 * hidden, hidden)), rnd(ks[9], (1, hidden)),
        rnd(ks[10], (hidden, hidden)),    rnd(ks[11], (1, hidden)),
        rnd(ks[12], (hidden, hidden)),    rnd(ks[13], (1, hidden)),
        rnd(ks[14], (hidden, 1)),         rnd(ks[15], (1, 1)),
    )


def prepare_kernel_params(params):
    """Kernel layout: conv params unchanged; edge-MLP weights pre-transposed so
    the edge stage runs with the edge axis on lanes; biases as [C, 1] columns."""
    (w1, as1, ad1, b1, w2, as2, ad2, b2,
     wm1, bm1, wm2, bm2, wm3, bm3, w4, b4) = params
    C = as2.shape[1]
    return (
        w1, as1, ad1, b1, w2, as2, ad2, b2,
        wm1[:C].T, wm1[C:].T, bm1.T,
        wm2.T, bm2.T,
        wm3.T, bm3.T,
        w4.T, b4,
    )


def build_graph(key, num_stores, num_banks, input_dim):
    n = num_stores + num_banks
    e = num_stores * num_banks
    e_pad = ((e + 127) // 128) * 128
    # node features normalized to [0, 1] like create_data
    x = jax.random.uniform(key, (n, input_dim), dtype=jnp.float32)
    # complete bipartite store -> bank edges (same structure as create_data)
    src = jnp.repeat(jnp.arange(num_stores, dtype=jnp.int32), num_banks)
    dst = num_stores + jnp.tile(jnp.arange(num_banks, dtype=jnp.int32), num_stores)
    # additive attention mask: 0 where edge src->dst exists or self-loop, else -inf
    adj_bias = jnp.full((n, n), NEG_INF, dtype=jnp.float32)
    adj_bias = adj_bias.at[dst, src].set(0.0)
    adj_bias = adj_bias.at[jnp.arange(n), jnp.arange(n)].set(0.0)
    # pre-transposed, edge-padded one-hot gather matrices [N, E_pad] so the
    # in-kernel gather matmul produces lane-dense [C, E_pad] edge features
    eidx = jnp.arange(e)
    g_row_t = jnp.zeros((n, e_pad), jnp.float32).at[src, eidx].set(1.0)
    g_col_t = jnp.zeros((n, e_pad), jnp.float32).at[dst, eidx].set(1.0)
    return x, adj_bias, src, dst, g_row_t, g_col_t


if __name__ == "__main__":
    key = jax.random.PRNGKey(0)
    k_data, k_param = jax.random.split(key)

    x, adj_bias, src, dst, g_row_t, g_col_t = build_graph(
        k_data, NUM_STORES, NUM_BANKS, INPUT_DIM)
    params = init_params(k_param, INPUT_DIM, HIDDEN, HEADS)
    kparams = prepare_kernel_params(params)

    E = NUM_STORES * NUM_BANKS
    fwd = jax.jit(foodbank_gnn_forward, static_argnames=("num_edges",))
    scores = jax.block_until_ready(
        fwd(x, adj_bias, g_row_t, g_col_t, kparams, num_edges=E))

    assert scores.shape == (E,)
    assert scores.dtype == jnp.float32

    ref = reference_forward(x, adj_bias, src, dst, params)
    assert jnp.allclose(scores, ref, rtol=2e-2, atol=2e-3)
    print("KERNEL_OK")
</pallas_src>

<mosaic_0001>
module attributes {stable_mosaic.version = 11 : i64} {
  func.func @fused_gnn_kernel(%arg0: memref<50x5xf32, #tpu.memory_space<vmem>>, %arg1: memref<50x50xf32, #tpu.memory_space<vmem>>, %arg2: memref<50x512xf32, #tpu.memory_space<vmem>>, %arg3: memref<50x512xf32, #tpu.memory_space<vmem>>, %arg4: memref<5x64xf32, #tpu.memory_space<vmem>>, %arg5: memref<1x64xf32, #tpu.memory_space<vmem>>, %arg6: memref<1x64xf32, #tpu.memory_space<vmem>>, %arg7: memref<1x64xf32, #tpu.memory_space<vmem>>, %arg8: memref<64x32xf32, #tpu.memory_space<vmem>>, %arg9: memref<1x32xf32, #tpu.memory_space<vmem>>, %arg10: memref<1x32xf32, #tpu.memory_space<vmem>>, %arg11: memref<1x32xf32, #tpu.memory_space<vmem>>, %arg12: memref<32x32xf32, #tpu.memory_space<vmem>>, %arg13: memref<32x32xf32, #tpu.memory_space<vmem>>, %arg14: memref<32x1xf32, #tpu.memory_space<vmem>>, %arg15: memref<32x32xf32, #tpu.memory_space<vmem>>, %arg16: memref<32x1xf32, #tpu.memory_space<vmem>>, %arg17: memref<32x32xf32, #tpu.memory_space<vmem>>, %arg18: memref<32x1xf32, #tpu.memory_space<vmem>>, %arg19: memref<1x32xf32, #tpu.memory_space<vmem>>, %arg20: memref<1x1xf32, #tpu.memory_space<vmem>>, %arg21: memref<1x512xf32, #tpu.memory_space<vmem>>) attributes {dimension_semantics = [], scalar_prefetch = 0 : i64, scratch_operands = 0 : i64, tpu.core_type = #tpu.core_type<tc>} {
    %c0 = arith.constant 0 : index
    %c0_0 = arith.constant 0 : index
    %0 = vector.load %arg0[%c0, %c0_0] : memref<50x5xf32, #tpu.memory_space<vmem>>, vector<50x5xf32>
    %c0_1 = arith.constant 0 : index
    %c0_2 = arith.constant 0 : index
    %1 = vector.load %arg1[%c0_1, %c0_2] : memref<50x50xf32, #tpu.memory_space<vmem>>, vector<50x50xf32>
    %c0_3 = arith.constant 0 : index
    %c0_4 = arith.constant 0 : index
    %2 = vector.load %arg4[%c0_3, %c0_4] : memref<5x64xf32, #tpu.memory_space<vmem>>, vector<5x64xf32>
    %cst = arith.constant dense<0.000000e+00> : vector<50x64xf32>
    %3 = tpu.matmul %0, %2, %cst {dimension_numbers = #tpu.dot_dimension_numbers<[1], [0], [0], [1], [0, 0, 1, 1], [], []>} : vector<50x5xf32>, vector<5x64xf32>, vector<50x64xf32> -> vector<50x64xf32>
    %cst_5 = arith.constant 0.000000e+00 : f32
    %4 = vector.broadcast %cst_5 : f32 to vector<50x32xf32>
    %5 = vector.extract_strided_slice %3 {offsets = [0, 0], sizes = [50, 32], strides = [1, 1]} : vector<50x64xf32> to vector<50x32xf32>
    %c0_6 = arith.constant 0 : index
    %c0_7 = arith.constant 0 : index
    %6 = vector.load %arg5[%c0_6, %c0_7] : memref<1x64xf32, #tpu.memory_space<vmem>>, vector<1x32xf32>
    %7 = vector.broadcast %6 : vector<1x32xf32> to vector<50x32xf32>
    %8 = arith.mulf %5, %7 : vector<50x32xf32>
    %cst_8 = arith.constant dense<0.000000e+00> : vector<50xf32>
    %9 = vector.multi_reduction <add>, %8, %cst_8 [1] : vector<50x32xf32> to vector<50xf32>
    %10 = vector.shape_cast %9 : vector<50xf32> to vector<50x1xf32>
    %c0_9 = arith.constant 0 : index
    %c0_10 = arith.constant 0 : index
    %11 = vector.load %arg6[%c0_9, %c0_10] : memref<1x64xf32, #tpu.memory_space<vmem>>, vector<1x32xf32>
    %12 = vector.broadcast %11 : vector<1x32xf32> to vector<50x32xf32>
    %13 = arith.mulf %5, %12 : vector<50x32xf32>
    %cst_11 = arith.constant dense<0.000000e+00> : vector<50xf32>
    %14 = vector.multi_reduction <add>, %13, %cst_11 [1] : vector<50x32xf32> to vector<50xf32>
    %15 = vector.shape_cast %14 : vector<50xf32> to vector<50x1xf32>
    %16 = tpu.transpose %10, [1, 0] : vector<50x1xf32> -> vector<1x50xf32>
    %17 = vector.broadcast %15 : vector<50x1xf32> to vector<50x50xf32>
    %18 = vector.broadcast %16 : vector<1x50xf32> to vector<50x50xf32>
    %19 = arith.addf %17, %18 : vector<50x50xf32>
    %cst_12 = arith.constant 0.000000e+00 : f32
    %20 = vector.broadcast %cst_12 : f32 to vector<50x50xf32>
    %21 = arith.cmpf ogt, %19, %20 : vector<50x50xf32>
    %cst_13 = arith.constant 2.000000e-01 : f32
    %22 = vector.broadcast %cst_13 : f32 to vector<50x50xf32>
    %23 = arith.mulf %22, %19 : vector<50x50xf32>
    %24 = arith.select %21, %19, %23 : vector<50x50xi1>, vector<50x50xf32>
    %25 = arith.addf %24, %1 : vector<50x50xf32>
    %cst_14 = arith.constant dense<0xFF800000> : vector<50xf32>
    %26 = vector.multi_reduction <maximumf>, %25, %cst_14 [1] : vector<50x50xf32> to vector<50xf32>
    %27 = vector.shape_cast %26 : vector<50xf32> to vector<50x1xf32>
    %28 = vector.broadcast %27 : vector<50x1xf32> to vector<50x50xf32>
    %29 = arith.subf %25, %28 : vector<50x50xf32>
    %30 = math.exp %29 : vector<50x50xf32>
    %cst_15 = arith.constant dense<0.000000e+00> : vector<50xf32>
    %31 = vector.multi_reduction <add>, %30, %cst_15 [1] : vector<50x50xf32> to vector<50xf32>
    %32 = vector.shape_cast %31 : vector<50xf32> to vector<50x1xf32>
    %33 = tpu.reciprocal %32 {approx = true} : vector<50x1xf32> -> vector<50x1xf32>
    %cst_16 = arith.constant dense<0.000000e+00> : vector<50x32xf32>
    %34 = tpu.matmul %30, %5, %cst_16 {dimension_numbers = #tpu.dot_dimension_numbers<[1], [0], [0], [1], [0, 0, 1, 1], [], []>} : vector<50x50xf32>, vector<50x32xf32>, vector<50x32xf32> -> vector<50x32xf32>
    %35 = vector.broadcast %33 : vector<50x1xf32> to vector<50x32xf32>
    %36 = arith.mulf %34, %35 : vector<50x32xf32>
    %c0_17 = arith.constant 0 : index
    %c0_18 = arith.constant 0 : index
    %37 = vector.load %arg7[%c0_17, %c0_18] : memref<1x64xf32, #tpu.memory_space<vmem>>, vector<1x32xf32>
    %38 = vector.broadcast %37 : vector<1x32xf32> to vector<50x32xf32>
    %39 = arith.addf %36, %38 : vector<50x32xf32>
    %cst_19 = arith.constant 0.000000e+00 : f32
    %40 = vector.broadcast %cst_19 : f32 to vector<50x32xf32>
    %41 = arith.maximumf %39, %40 : vector<50x32xf32>
    %c0_20 = arith.constant 0 : index
    %c0_21 = arith.constant 0 : index
    %42 = vector.load %arg8[%c0_20, %c0_21] : memref<64x32xf32, #tpu.memory_space<vmem>>, vector<32x32xf32>
    %cst_22 = arith.constant dense<0.000000e+00> : vector<50x32xf32>
    %43 = tpu.matmul %41, %42, %cst_22 {dimension_numbers = #tpu.dot_dimension_numbers<[1], [0], [0], [1], [0, 0, 1, 1], [], []>} : vector<50x32xf32>, vector<32x32xf32>, vector<50x32xf32> -> vector<50x32xf32>
    %44 = arith.addf %4, %43 : vector<50x32xf32>
    %45 = vector.extract_strided_slice %3 {offsets = [0, 32], sizes = [50, 32], strides = [1, 1]} : vector<50x64xf32> to vector<50x32xf32>
    %c0_23 = arith.constant 0 : index
    %c32 = arith.constant 32 : index
    %46 = vector.load %arg5[%c0_23, %c32] : memref<1x64xf32, #tpu.memory_space<vmem>>, vector<1x32xf32>
    %47 = vector.broadcast %46 : vector<1x32xf32> to vector<50x32xf32>
    %48 = arith.mulf %45, %47 : vector<50x32xf32>
    %cst_24 = arith.constant dense<0.000000e+00> : vector<50xf32>
    %49 = vector.multi_reduction <add>, %48, %cst_24 [1] : vector<50x32xf32> to vector<50xf32>
    %50 = vector.shape_cast %49 : vector<50xf32> to vector<50x1xf32>
    %c0_25 = arith.constant 0 : index
    %c32_26 = arith.constant 32 : index
    %51 = vector.load %arg6[%c0_25, %c32_26] : memref<1x64xf32, #tpu.memory_space<vmem>>, vector<1x32xf32>
    %52 = vector.broadcast %51 : vector<1x32xf32> to vector<50x32xf32>
    %53 = arith.mulf %45, %52 : vector<50x32xf32>
    %cst_27 = arith.constant dense<0.000000e+00> : vector<50xf32>
    %54 = vector.multi_reduction <add>, %53, %cst_27 [1] : vector<50x32xf32> to vector<50xf32>
    %55 = vector.shape_cast %54 : vector<50xf32> to vector<50x1xf32>
    %56 = tpu.transpose %50, [1, 0] : vector<50x1xf32> -> vector<1x50xf32>
    %57 = vector.broadcast %55 : vector<50x1xf32> to vector<50x50xf32>
    %58 = vector.broadcast %56 : vector<1x50xf32> to vector<50x50xf32>
    %59 = arith.addf %57, %58 : vector<50x50xf32>
    %cst_28 = arith.constant 0.000000e+00 : f32
    %60 = vector.broadcast %cst_28 : f32 to vector<50x50xf32>
    %61 = arith.cmpf ogt, %59, %60 : vector<50x50xf32>
    %cst_29 = arith.constant 2.000000e-01 : f32
    %62 = vector.broadcast %cst_29 : f32 to vector<50x50xf32>
    %63 = arith.mulf %62, %59 : vector<50x50xf32>
    %64 = arith.select %61, %59, %63 : vector<50x50xi1>, vector<50x50xf32>
    %65 = arith.addf %64, %1 : vector<50x50xf32>
    %cst_30 = arith.constant dense<0xFF800000> : vector<50xf32>
    %66 = vector.multi_reduction <maximumf>, %65, %cst_30 [1] : vector<50x50xf32> to vector<50xf32>
    %67 = vector.shape_cast %66 : vector<50xf32> to vector<50x1xf32>
    %68 = vector.broadcast %67 : vector<50x1xf32> to vector<50x50xf32>
    %69 = arith.subf %65, %68 : vector<50x50xf32>
    %70 = math.exp %69 : vector<50x50xf32>
    %cst_31 = arith.constant dense<0.000000e+00> : vector<50xf32>
    %71 = vector.multi_reduction <add>, %70, %cst_31 [1] : vector<50x50xf32> to vector<50xf32>
    %72 = vector.shape_cast %71 : vector<50xf32> to vector<50x1xf32>
    %73 = tpu.reciprocal %72 {approx = true} : vector<50x1xf32> -> vector<50x1xf32>
    %cst_32 = arith.constant dense<0.000000e+00> : vector<50x32xf32>
    %74 = tpu.matmul %70, %45, %cst_32 {dimension_numbers = #tpu.dot_dimension_numbers<[1], [0], [0], [1], [0, 0, 1, 1], [], []>} : vector<50x50xf32>, vector<50x32xf32>, vector<50x32xf32> -> vector<50x32xf32>
    %75 = vector.broadcast %73 : vector<50x1xf32> to vector<50x32xf32>
    %76 = arith.mulf %74, %75 : vector<50x32xf32>
    %c0_33 = arith.constant 0 : index
    %c32_34 = arith.constant 32 : index
    %77 = vector.load %arg7[%c0_33, %c32_34] : memref<1x64xf32, #tpu.memory_space<vmem>>, vector<1x32xf32>
    %78 = vector.broadcast %77 : vector<1x32xf32> to vector<50x32xf32>
    %79 = arith.addf %76, %78 : vector<50x32xf32>
    %cst_35 = arith.constant 0.000000e+00 : f32
    %80 = vector.broadcast %cst_35 : f32 to vector<50x32xf32>
    %81 = arith.maximumf %79, %80 : vector<50x32xf32>
    %c32_36 = arith.constant 32 : index
    %c0_37 = arith.constant 0 : index
    %82 = vector.load %arg8[%c32_36, %c0_37] : memref<64x32xf32, #tpu.memory_space<vmem>>, vector<32x32xf32>
    %cst_38 = arith.constant dense<0.000000e+00> : vector<50x32xf32>
    %83 = tpu.matmul %81, %82, %cst_38 {dimension_numbers = #tpu.dot_dimension_numbers<[1], [0], [0], [1], [0, 0, 1, 1], [], []>} : vector<50x32xf32>, vector<32x32xf32>, vector<50x32xf32> -> vector<50x32xf32>
    %84 = arith.addf %44, %83 : vector<50x32xf32>
    %c0_39 = arith.constant 0 : index
    %c0_40 = arith.constant 0 : index
    %85 = vector.load %arg9[%c0_39, %c0_40] : memref<1x32xf32, #tpu.memory_space<vmem>>, vector<1x32xf32>
    %86 = vector.broadcast %85 : vector<1x32xf32> to vector<50x32xf32>
    %87 = arith.mulf %84, %86 : vector<50x32xf32>
    %cst_41 = arith.constant dense<0.000000e+00> : vector<50xf32>
    %88 = vector.multi_reduction <add>, %87, %cst_41 [1] : vector<50x32xf32> to vector<50xf32>
    %89 = vector.shape_cast %88 : vector<50xf32> to vector<50x1xf32>
    %c0_42 = arith.constant 0 : index
    %c0_43 = arith.constant 0 : index
    %90 = vector.load %arg10[%c0_42, %c0_43] : memref<1x32xf32, #tpu.memory_space<vmem>>, vector<1x32xf32>
    %91 = vector.broadcast %90 : vector<1x32xf32> to vector<50x32xf32>
    %92 = arith.mulf %84, %91 : vector<50x32xf32>
    %cst_44 = arith.constant dense<0.000000e+00> : vector<50xf32>
    %93 = vector.multi_reduction <add>, %92, %cst_44 [1] : vector<50x32xf32> to vector<50xf32>
    %94 = vector.shape_cast %93 : vector<50xf32> to vector<50x1xf32>
    %95 = tpu.transpose %89, [1, 0] : vector<50x1xf32> -> vector<1x50xf32>
    %96 = vector.broadcast %94 : vector<50x1xf32> to vector<50x50xf32>
    %97 = vector.broadcast %95 : vector<1x50xf32> to vector<50x50xf32>
    %98 = arith.addf %96, %97 : vector<50x50xf32>
    %cst_45 = arith.constant 0.000000e+00 : f32
    %99 = vector.broadcast %cst_45 : f32 to vector<50x50xf32>
    %100 = arith.cmpf ogt, %98, %99 : vector<50x50xf32>
    %cst_46 = arith.constant 2.000000e-01 : f32
    %101 = vector.broadcast %cst_46 : f32 to vector<50x50xf32>
    %102 = arith.mulf %101, %98 : vector<50x50xf32>
    %103 = arith.select %100, %98, %102 : vector<50x50xi1>, vector<50x50xf32>
    %104 = arith.addf %103, %1 : vector<50x50xf32>
    %cst_47 = arith.constant dense<0xFF800000> : vector<50xf32>
    %105 = vector.multi_reduction <maximumf>, %104, %cst_47 [1] : vector<50x50xf32> to vector<50xf32>
    %106 = vector.shape_cast %105 : vector<50xf32> to vector<50x1xf32>
    %107 = vector.broadcast %106 : vector<50x1xf32> to vector<50x50xf32>
    %108 = arith.subf %104, %107 : vector<50x50xf32>
    %109 = math.exp %108 : vector<50x50xf32>
    %cst_48 = arith.constant dense<0.000000e+00> : vector<50xf32>
    %110 = vector.multi_reduction <add>, %109, %cst_48 [1] : vector<50x50xf32> to vector<50xf32>
    %111 = vector.shape_cast %110 : vector<50xf32> to vector<50x1xf32>
    %112 = tpu.reciprocal %111 {approx = true} : vector<50x1xf32> -> vector<50x1xf32>
    %cst_49 = arith.constant dense<0.000000e+00> : vector<50x32xf32>
    %113 = tpu.matmul %109, %84, %cst_49 {dimension_numbers = #tpu.dot_dimension_numbers<[1], [0], [0], [1], [0, 0, 1, 1], [], []>} : vector<50x50xf32>, vector<50x32xf32>, vector<50x32xf32> -> vector<50x32xf32>
    %114 = vector.broadcast %112 : vector<50x1xf32> to vector<50x32xf32>
    %115 = arith.mulf %113, %114 : vector<50x32xf32>
    %c0_50 = arith.constant 0 : index
    %c0_51 = arith.constant 0 : index
    %116 = vector.load %arg11[%c0_50, %c0_51] : memref<1x32xf32, #tpu.memory_space<vmem>>, vector<1x32xf32>
    %117 = vector.broadcast %116 : vector<1x32xf32> to vector<50x32xf32>
    %118 = arith.addf %115, %117 : vector<50x32xf32>
    %cst_52 = arith.constant 0.000000e+00 : f32
    %119 = vector.broadcast %cst_52 : f32 to vector<50x32xf32>
    %120 = arith.maximumf %118, %119 : vector<50x32xf32>
    %121 = tpu.transpose %120, [1, 0] : vector<50x32xf32> -> vector<32x50xf32>
    %c0_53 = arith.constant 0 : index
    %c0_54 = arith.constant 0 : index
    %122 = vector.load %arg12[%c0_53, %c0_54] : memref<32x32xf32, #tpu.memory_space<vmem>>, vector<32x32xf32>
    %cst_55 = arith.constant dense<0.000000e+00> : vector<32x50xf32>
    %123 = tpu.matmul %122, %121, %cst_55 {dimension_numbers = #tpu.dot_dimension_numbers<[1], [0], [0], [1], [0, 0, 1, 1], [], []>} : vector<32x32xf32>, vector<32x50xf32>, vector<32x50xf32> -> vector<32x50xf32>
    %c0_56 = arith.constant 0 : index
    %c0_57 = arith.constant 0 : index
    %124 = vector.load %arg13[%c0_56, %c0_57] : memref<32x32xf32, #tpu.memory_space<vmem>>, vector<32x32xf32>
    %cst_58 = arith.constant dense<0.000000e+00> : vector<32x50xf32>
    %125 = tpu.matmul %124, %121, %cst_58 {dimension_numbers = #tpu.dot_dimension_numbers<[1], [0], [0], [1], [0, 0, 1, 1], [], []>} : vector<32x32xf32>, vector<32x50xf32>, vector<32x50xf32> -> vector<32x50xf32>
    %c0_59 = arith.constant 0 : index
    %c0_60 = arith.constant 0 : index
    %126 = vector.load %arg2[%c0_59, %c0_60] : memref<50x512xf32, #tpu.memory_space<vmem>>, vector<50x512xf32>
    %cst_61 = arith.constant dense<0.000000e+00> : vector<32x512xf32>
    %127 = tpu.matmul %123, %126, %cst_61 {dimension_numbers = #tpu.dot_dimension_numbers<[1], [0], [0], [1], [0, 0, 1, 1], [], []>} : vector<32x50xf32>, vector<50x512xf32>, vector<32x512xf32> -> vector<32x512xf32>
    %c0_62 = arith.constant 0 : index
    %c0_63 = arith.constant 0 : index
    %128 = vector.load %arg3[%c0_62, %c0_63] : memref<50x512xf32, #tpu.memory_space<vmem>>, vector<50x512xf32>
    %cst_64 = arith.constant dense<0.000000e+00> : vector<32x512xf32>
    %129 = tpu.matmul %125, %128, %cst_64 {dimension_numbers = #tpu.dot_dimension_numbers<[1], [0], [0], [1], [0, 0, 1, 1], [], []>} : vector<32x50xf32>, vector<50x512xf32>, vector<32x512xf32> -> vector<32x512xf32>
    %130 = arith.addf %127, %129 : vector<32x512xf32>
    %c0_65 = arith.constant 0 : index
    %c0_66 = arith.constant 0 : index
    %131 = vector.load %arg14[%c0_65, %c0_66] : memref<32x1xf32, #tpu.memory_space<vmem>>, vector<32x1xf32>
    %132 = vector.broadcast %131 : vector<32x1xf32> to vector<32x512xf32>
    %133 = arith.addf %130, %132 : vector<32x512xf32>
    %cst_67 = arith.constant 0.000000e+00 : f32
    %134 = vector.broadcast %cst_67 : f32 to vector<32x512xf32>
    %135 = arith.maximumf %133, %134 : vector<32x512xf32>
    %c0_68 = arith.constant 0 : index
    %c0_69 = arith.constant 0 : index
    %136 = vector.load %arg15[%c0_68, %c0_69] : memref<32x32xf32, #tpu.memory_space<vmem>>, vector<32x32xf32>
    %cst_70 = arith.constant dense<0.000000e+00> : vector<32x512xf32>
    %137 = tpu.matmul %136, %135, %cst_70 {dimension_numbers = #tpu.dot_dimension_numbers<[1], [0], [0], [1], [0, 0, 1, 1], [], []>} : vector<32x32xf32>, vector<32x512xf32>, vector<32x512xf32> -> vector<32x512xf32>
    %c0_71 = arith.constant 0 : index
    %c0_72 = arith.constant 0 : index
    %138 = vector.load %arg16[%c0_71, %c0_72] : memref<32x1xf32, #tpu.memory_space<vmem>>, vector<32x1xf32>
    %139 = vector.broadcast %138 : vector<32x1xf32> to vector<32x512xf32>
    %140 = arith.addf %137, %139 : vector<32x512xf32>
    %cst_73 = arith.constant 0.000000e+00 : f32
    %141 = vector.broadcast %cst_73 : f32 to vector<32x512xf32>
    %142 = arith.maximumf %140, %141 : vector<32x512xf32>
    %c0_74 = arith.constant 0 : index
    %c0_75 = arith.constant 0 : index
    %143 = vector.load %arg17[%c0_74, %c0_75] : memref<32x32xf32, #tpu.memory_space<vmem>>, vector<32x32xf32>
    %cst_76 = arith.constant dense<0.000000e+00> : vector<32x512xf32>
    %144 = tpu.matmul %143, %142, %cst_76 {dimension_numbers = #tpu.dot_dimension_numbers<[1], [0], [0], [1], [0, 0, 1, 1], [], []>} : vector<32x32xf32>, vector<32x512xf32>, vector<32x512xf32> -> vector<32x512xf32>
    %c0_77 = arith.constant 0 : index
    %c0_78 = arith.constant 0 : index
    %145 = vector.load %arg18[%c0_77, %c0_78] : memref<32x1xf32, #tpu.memory_space<vmem>>, vector<32x1xf32>
    %146 = vector.broadcast %145 : vector<32x1xf32> to vector<32x512xf32>
    %147 = arith.addf %144, %146 : vector<32x512xf32>
    %cst_79 = arith.constant 0.000000e+00 : f32
    %148 = vector.broadcast %cst_79 : f32 to vector<32x512xf32>
    %149 = arith.maximumf %147, %148 : vector<32x512xf32>
    %c0_80 = arith.constant 0 : index
    %c0_81 = arith.constant 0 : index
    %150 = vector.load %arg19[%c0_80, %c0_81] : memref<1x32xf32, #tpu.memory_space<vmem>>, vector<1x32xf32>
    %cst_82 = arith.constant dense<0.000000e+00> : vector<1x512xf32>
    %151 = tpu.matmul %150, %149, %cst_82 {dimension_numbers = #tpu.dot_dimension_numbers<[1], [0], [0], [1], [0, 0, 1, 1], [], []>} : vector<1x32xf32>, vector<32x512xf32>, vector<1x512xf32> -> vector<1x512xf32>
    %c0_83 = arith.constant 0 : index
    %c0_84 = arith.constant 0 : index
    %152 = vector.load %arg20[%c0_83, %c0_84] : memref<1x1xf32, #tpu.memory_space<vmem>>, vector<1x1xf32>
    %153 = vector.broadcast %152 : vector<1x1xf32> to vector<1x512xf32>
    %154 = arith.addf %151, %153 : vector<1x512xf32>
    %c0_85 = arith.constant 0 : index
    %c0_86 = arith.constant 0 : index
    %155 = vector.load %arg21[%c0_85, %c0_86] : memref<1x512xf32, #tpu.memory_space<vmem>>, vector<1x512xf32>
    tpu.vector_store %arg21[%c0_85, %c0_86], %154 {strides = array<i32>} : memref<1x512xf32, #tpu.memory_space<vmem>>, vector<1x512xf32>,
    return
  }
}

</mosaic_0001>

<llo_original>
// kernel: foodbank_gnn_forward.1
$region0: #{foodbank_gnn_forward.1}
  #allocation0 [shape = 'u32[]', space=smem, size = 0x4, offset = 0x4, fixed_abs, tag = 'smem constant byte address 0x4 - core index']
  #allocation1 [shape = 'u32[144,128]{1,0:T(1,128)}', space=vmem, size = 0x12000, scoped, tag = 'internal scratch']
  #allocation2 [shape = 'f32[1,1]{1,0:T(1,128)S(1)}', space=vmem, size = 0x200, scoped, tag = 'scoped memory for foodbank_gnn_forward.1']
  %s0 = inlined_call_operand.vmem [shape: f32[50,5], index: 0, kind: input, shape index: {}]
  %s1 = inlined_call_operand.hbm [shape: f32[50,50], index: 1, kind: input, shape index: {}]
  %s2 = inlined_call_operand.vmem [shape: f32[50,512], index: 2, kind: input, shape index: {}]
  %s3 = inlined_call_operand.hbm [shape: f32[50,512], index: 3, kind: input, shape index: {}]
  %s4 = inlined_call_operand.hbm [shape: f32[5,64], index: 4, kind: input, shape index: {}]
  %s5 = inlined_call_operand.vmem [shape: f32[1,64], index: 5, kind: input, shape index: {}]
  %s6 = inlined_call_operand.hbm [shape: f32[1,64], index: 6, kind: input, shape index: {}]
  %s7 = inlined_call_operand.hbm [shape: f32[1,64], index: 7, kind: input, shape index: {}]
  %s8 = inlined_call_operand.vmem [shape: f32[64,32], index: 8, kind: input, shape index: {}]
  %s9 = inlined_call_operand.vmem [shape: f32[1,32], index: 9, kind: input, shape index: {}]
  %s10 = inlined_call_operand.vmem [shape: f32[1,32], index: 10, kind: input, shape index: {}]
  %s11 = inlined_call_operand.hbm [shape: f32[1,32], index: 11, kind: input, shape index: {}]
  %s12 = inlined_call_operand.vmem [shape: f32[32,32], index: 12, kind: input, shape index: {}]
  %s13 = inlined_call_operand.vmem [shape: f32[32,32], index: 13, kind: input, shape index: {}]
  %s14 = inlined_call_operand.vmem [shape: f32[32,1], index: 14, kind: input, shape index: {}]
  %s15 = inlined_call_operand.hbm [shape: f32[32,32], index: 15, kind: input, shape index: {}]
  %s16 = inlined_call_operand.vmem [shape: f32[32,1], index: 16, kind: input, shape index: {}]
  %s17 = inlined_call_operand.vmem [shape: f32[32,32], index: 17, kind: input, shape index: {}]
  %s18 = inlined_call_operand.vmem [shape: f32[32,1], index: 18, kind: input, shape index: {}]
  %s19 = inlined_call_operand.vmem [shape: f32[1,32], index: 19, kind: input, shape index: {}]
  %s20 = inlined_call_operand.<no memory space> [shape: f32[1,1], index: 20, kind: input, shape index: {}]
  %s21 = inlined_call_operand.hbm [shape: f32[1,512], index: 21, kind: output, shape index: {}]
  %s22 = sld [smem:[#allocation0]]
  $region122: #{foodbank_gnn_forward.1} parent=0
    _
  %s24 = ssub.s32 1, %s22
  %s25 = scalar_select 0, %s24, %s22
  %v26 = vstv %s20
  %27 = vst [vmem:[#allocation2] sm:$0x1] %v26
  $region1: #{foodbank_gnn_forward.1} parent=0
    #allocation3 [shape = 'u8[28672]{0}', space=vmem, size = 0x7000, scoped, tag = 'input window, operand 1, single buffered']
    #allocation4 [shape = 's32[1]{0}', space=sflag, size = 0x4, scoped, tag = 'scoped memory for foodbank_gnn_forward.1']
    #allocation5 [shape = 's32[1]{0}', space=sflag, size = 0x4, scoped, tag = 'scoped memory for foodbank_gnn_forward.1']
    #allocation6 [shape = 'u8[114688]{0}', space=vmem, size = 0x1c000, scoped, tag = 'input window, operand 3, single buffered']
    #allocation7 [shape = 's32[1]{0}', space=sflag, size = 0x4, scoped, tag = 'scoped memory for foodbank_gnn_forward.1']
    #allocation8 [shape = 'u8[4096]{0}', space=vmem, size = 0x1000, scoped, tag = 'input window, operand 4, single buffered']
    #allocation9 [shape = 'u8[512]{0}', space=vmem, size = 0x400, scoped, tag = 'input window, operand 6, single buffered']
    #allocation10 [shape = 's32[1]{0}', space=sflag, size = 0x4, scoped, tag = 'scoped memory for foodbank_gnn_forward.1']
    #allocation11 [shape = 'u8[512]{0}', space=vmem, size = 0x400, scoped, tag = 'input window, operand 7, single buffered']
    #allocation12 [shape = 'u8[512]{0}', space=vmem, size = 0x400, scoped, tag = 'input window, operand 11, single buffered']
    #allocation13 [shape = 's32[1]{0}', space=sflag, size = 0x4, scoped, tag = 'scoped memory for foodbank_gnn_forward.1']
    #allocation14 [shape = 'u8[16384]{0}', space=vmem, size = 0x4000, scoped, tag = 'input window, operand 15, single buffered']
    #allocation15 [shape = 'u8[2048]{0}', space=vmem, size = 0x800, scoped, tag = 'output window, operand 0, single buffered']
    %28 = vsyncpa [#allocation4], 0
    %29 = vsyncpa [#allocation7], 0
    %30 = vsyncpa [#allocation10], 0
    %31 = vsyncpa [#allocation13], 0
    %32 = vsyncpa [#allocation5], 0
    // Predicated region
    $region2: #{foodbank_gnn_forward.1} parent=1 // pred_check
      _
    $region3: #{foodbank_gnn_forward.1} parent=1 // pred_check_branch
      %34 = sbr.rel (0) target = $region5
    $region4: #{foodbank_gnn_forward.1} parent=1 // pred_region
      _
    $region5: #{foodbank_gnn_forward.1} parent=1 // pred_fallthru
      _
    // Predicated region
    $region6: #{foodbank_gnn_forward.1} parent=1 // pred_check
      _
    $region7: #{foodbank_gnn_forward.1} parent=1 // pred_check_branch
      %36 = sbr.rel (0) target = $region9
    $region8: #{foodbank_gnn_forward.1} parent=1 // pred_region
      %s38 = ssub.s32 896, 896
      %39 = vsyncadd [#allocation4], %s38
      %s40 = sshll.u32 [#allocation3], 4
      %s41 = int_to_ptr.vmem [resolvable:$true] %s40
      %46 = dma.hbm_to_vmem [thread:$0]  %s1, 896, %s41, [#allocation4], 128, 128, 8
    $region9: #{foodbank_gnn_forward.1} parent=1 // pred_fallthru
      _
    // Predicated region
    $region10: #{foodbank_gnn_forward.1} parent=1 // pred_check
      _
    $region11: #{foodbank_gnn_forward.1} parent=1 // pred_check_branch
      %48 = sbr.rel (0) target = $region13
    $region12: #{foodbank_gnn_forward.1} parent=1 // pred_region
      _
    $region13: #{foodbank_gnn_forward.1} parent=1 // pred_fallthru
      _
    // Predicated region
    $region14: #{foodbank_gnn_forward.1} parent=1 // pred_check
      _
    $region15: #{foodbank_gnn_forward.1} parent=1 // pred_check_branch
      %50 = sbr.rel (0) target = $region17
    $region16: #{foodbank_gnn_forward.1} parent=1 // pred_region
      %s52 = ssub.s32 3584, 3584
      %53 = vsyncadd [#allocation7], %s52
      %s54 = sshll.u32 [#allocation6], 4
      %s55 = int_to_ptr.vmem [resolvable:$true] %s54
      %60 = dma.hbm_to_vmem [thread:$0]  %s3, 3584, %s55, [#allocation7], 512, 512, 32
    $region17: #{foodbank_gnn_forward.1} parent=1 // pred_fallthru
      _
    // Predicated region
    $region18: #{foodbank_gnn_forward.1} parent=1 // pred_check
      _
    $region19: #{foodbank_gnn_forward.1} parent=1 // pred_check_branch
      %62 = sbr.rel (0) target = $region21
    $region20: #{foodbank_gnn_forward.1} parent=1 // pred_region
      %s64 = ssub.s32 128, 128
      %65 = vsyncadd [#allocation7], %s64
      %s67 = sshll.u32 [#allocation8], 4
      %s68 = int_to_ptr.vmem [resolvable:$true] %s67
      %70 = dma.hbm_to_vmem [thread:$0]  %s4, 128, %s68, [#allocation7]
    $region21: #{foodbank_gnn_forward.1} parent=1 // pred_fallthru
      _
    // Predicated region
    $region22: #{foodbank_gnn_forward.1} parent=1 // pred_check
      _
    $region23: #{foodbank_gnn_forward.1} parent=1 // pred_check_branch
      %72 = sbr.rel (0) target = $region25
    $region24: #{foodbank_gnn_forward.1} parent=1 // pred_region
      _
    $region25: #{foodbank_gnn_forward.1} parent=1 // pred_fallthru
      _
    // Predicated region
    $region26: #{foodbank_gnn_forward.1} parent=1 // pred_check
      _
    $region27: #{foodbank_gnn_forward.1} parent=1 // pred_check_branch
      %74 = sbr.rel (0) target = $region29
    $region28: #{foodbank_gnn_forward.1} parent=1 // pred_region
      %s76 = ssub.s32 16, 16
      %77 = vsyncadd [#allocation10], %s76
      %s79 = sshll.u32 [#allocation9], 4
      %s80 = int_to_ptr.vmem [resolvable:$true] %s79
      %82 = dma.hbm_to_vmem [thread:$0]  %s6, 16, %s80, [#allocation10]
    $region29: #{foodbank_gnn_forward.1} parent=1 // pred_fallthru
      _
    // Predicated region
    $region30: #{foodbank_gnn_forward.1} parent=1 // pred_check
      _
    $region31: #{foodbank_gnn_forward.1} parent=1 // pred_check_branch
      %84 = sbr.rel (0) target = $region33
    $region32: #{foodbank_gnn_forward.1} parent=1 // pred_region
      %s86 = ssub.s32 16, 16
      %87 = vsyncadd [#allocation10], %s86
      %s89 = sshll.u32 [#allocation11], 4
      %s90 = int_to_ptr.vmem [resolvable:$true] %s89
      %92 = dma.hbm_to_vmem [thread:$0]  %s7, 16, %s90, [#allocation10]
    $region33: #{foodbank_gnn_forward.1} parent=1 // pred_fallthru
      _
    // Predicated region
    $region34: #{foodbank_gnn_forward.1} parent=1 // pred_check
      _
    $region35: #{foodbank_gnn_forward.1} parent=1 // pred_check_branch
      %94 = sbr.rel (0) target = $region37
    $region36: #{foodbank_gnn_forward.1} parent=1 // pred_region
      _
    $region37: #{foodbank_gnn_forward.1} parent=1 // pred_fallthru
      _
    // Predicated region
    $region38: #{foodbank_gnn_forward.1} parent=1 // pred_check
      _
    $region39: #{foodbank_gnn_forward.1} parent=1 // pred_check_branch
      %96 = sbr.rel (0) target = $region41
    $region40: #{foodbank_gnn_forward.1} parent=1 // pred_region
      _
    $region41: #{foodbank_gnn_forward.1} parent=1 // pred_fallthru
      _
    // Predicated region
    $region42: #{foodbank_gnn_forward.1} parent=1 // pred_check
      _
    $region43: #{foodbank_gnn_forward.1} parent=1 // pred_check_branch
      %98 = sbr.rel (0) target = $region45
    $region44: #{foodbank_gnn_forward.1} parent=1 // pred_region
      _
    $region45: #{foodbank_gnn_forward.1} parent=1 // pred_fallthru
      _
    // Predicated region
    $region46: #{foodbank_gnn_forward.1} parent=1 // pred_check
      _
    $region47: #{foodbank_gnn_forward.1} parent=1 // pred_check_branch
      %100 = sbr.rel (0) target = $region49
    $region48: #{foodbank_gnn_forward.1} parent=1 // pred_region
      %s102 = ssub.s32 16, 16
      %103 = vsyncadd [#allocation13], %s102
      %s105 = sshll.u32 [#allocation12], 4
      %s106 = int_to_ptr.vmem [resolvable:$true] %s105
      %108 = dma.hbm_to_vmem [thread:$0]  %s11, 16, %s106, [#allocation13]
    $region49: #{foodbank_gnn_forward.1} parent=1 // pred_fallthru
      _
    // Predicated region
    $region50: #{foodbank_gnn_forward.1} parent=1 // pred_check
      _
    $region51: #{foodbank_gnn_forward.1} parent=1 // pred_check_branch
      %110 = sbr.rel (0) target = $region53
    $region52: #{foodbank_gnn_forward.1} parent=1 // pred_region
      _
    $region53: #{foodbank_gnn_forward.1} parent=1 // pred_fallthru
      _
    // Predicated region
    $region54: #{foodbank_gnn_forward.1} parent=1 // pred_check
      _
    $region55: #{foodbank_gnn_forward.1} parent=1 // pred_check_branch
      %112 = sbr.rel (0) target = $region57
    $region56: #{foodbank_gnn_forward.1} parent=1 // pred_region
      _
    $region57: #{foodbank_gnn_forward.1} parent=1 // pred_fallthru
      _
    // Predicated region
    $region58: #{foodbank_gnn_forward.1} parent=1 // pred_check
      _
    $region59: #{foodbank_gnn_forward.1} parent=1 // pred_check_branch
      %114 = sbr.rel (0) target = $region61
    $region60: #{foodbank_gnn_forward.1} parent=1 // pred_region
      _
    $region61: #{foodbank_gnn_forward.1} parent=1 // pred_fallthru
      _
    // Predicated region
    $region62: #{foodbank_gnn_forward.1} parent=1 // pred_check
      _
    $region63: #{foodbank_gnn_forward.1} parent=1 // pred_check_branch
      %116 = sbr.rel (0) target = $region65
    $region64: #{foodbank_gnn_forward.1} parent=1 // pred_region
      %s118 = ssub.s32 512, 512
      %119 = vsyncadd [#allocation13], %s118
      %s120 = sshll.u32 [#allocation14], 4
      %s121 = int_to_ptr.vmem [resolvable:$true] %s120
      %126 = dma.hbm_to_vmem [thread:$0]  %s15, 512, %s121, [#allocation13], 128, 128, 8
    $region65: #{foodbank_gnn_forward.1} parent=1 // pred_fallthru
      _
    // Predicated region
    $region66: #{foodbank_gnn_forward.1} parent=1 // pred_check
      _
    $region67: #{foodbank_gnn_forward.1} parent=1 // pred_check_branch
      %128 = sbr.rel (0) target = $region69
    $region68: #{foodbank_gnn_forward.1} parent=1 // pred_region
      _
    $region69: #{foodbank_gnn_forward.1} parent=1 // pred_fallthru
      _
    // Predicated region
    $region70: #{foodbank_gnn_forward.1} parent=1 // pred_check
      _
    $region71: #{foodbank_gnn_forward.1} parent=1 // pred_check_branch
      %130 = sbr.rel (0) target = $region73
    $region72: #{foodbank_gnn_forward.1} parent=1 // pred_region
      _
    $region73: #{foodbank_gnn_forward.1} parent=1 // pred_fallthru
      _
    // Predicated region
    $region74: #{foodbank_gnn_forward.1} parent=1 // pred_check
      _
    $region75: #{foodbank_gnn_forward.1} parent=1 // pred_check_branch
      %132 = sbr.rel (0) target = $region77
    $region76: #{foodbank_gnn_forward.1} parent=1 // pred_region
      _
    $region77: #{foodbank_gnn_forward.1} parent=1 // pred_fallthru
      _
    // Predicated region
    $region78: #{foodbank_gnn_forward.1} parent=1 // pred_check
      _
    $region79: #{foodbank_gnn_forward.1} parent=1 // pred_check_branch
      %134 = sbr.rel (0) target = $region81
    $region80: #{foodbank_gnn_forward.1} parent=1 // pred_region
      _
    $region81: #{foodbank_gnn_forward.1} parent=1 // pred_fallthru
      _
    // Predicated region
    $region82: #{foodbank_gnn_forward.1} parent=1 // pred_check
      _
    $region83: #{foodbank_gnn_forward.1} parent=1 // pred_check_branch
      %136 = sbr.rel (0) target = $region85
    $region84: #{foodbank_gnn_forward.1} parent=1 // pred_region
      _
    $region85: #{foodbank_gnn_forward.1} parent=1 // pred_fallthru
      _
    // Predicated region
    $region86: #{foodbank_gnn_forward.1} parent=1 // pred_check
      _
    $region87: #{foodbank_gnn_forward.1} parent=1 // pred_check_branch
      %138 = sbr.rel (0) target = $region89
    $region88: #{foodbank_gnn_forward.1} parent=1 // pred_region
      %139 = dma.done [#allocation4], 896
    $region89: #{foodbank_gnn_forward.1} parent=1 // pred_fallthru
      _
    // Predicated region
    $region90: #{foodbank_gnn_forward.1} parent=1 // pred_check
      _
    $region91: #{foodbank_gnn_forward.1} parent=1 // pred_check_branch
      %141 = sbr.rel (0) target = $region93
    $region92: #{foodbank_gnn_forward.1} parent=1 // pred_region
      %142 = dma.done [#allocation7], 3584
    $region93: #{foodbank_gnn_forward.1} parent=1 // pred_fallthru
      _
    // Predicated region
    $region94: #{foodbank_gnn_forward.1} parent=1 // pred_check
      _
    $region95: #{foodbank_gnn_forward.1} parent=1 // pred_check_branch
      %144 = sbr.rel (0) target = $region97
    $region96: #{foodbank_gnn_forward.1} parent=1 // pred_region
      %145 = dma.done [#allocation7], 128
    $region97: #{foodbank_gnn_forward.1} parent=1 // pred_fallthru
      _
    // Predicated region
    $region98: #{foodbank_gnn_forward.1} parent=1 // pred_check
      _
    $region99: #{foodbank_gnn_forward.1} parent=1 // pred_check_branch
      %147 = sbr.rel (0) target = $region101
    $region100: #{foodbank_gnn_forward.1} parent=1 // pred_region
      %148 = dma.done [#allocation10], 16
    $region101: #{foodbank_gnn_forward.1} parent=1 // pred_fallthru
      _
    // Predicated region
    $region102: #{foodbank_gnn_forward.1} parent=1 // pred_check
      _
    $region103: #{foodbank_gnn_forward.1} parent=1 // pred_check_branch
      %150 = sbr.rel (0) target = $region105
    $region104: #{foodbank_gnn_forward.1} parent=1 // pred_region
      %151 = dma.done [#allocation10], 16
    $region105: #{foodbank_gnn_forward.1} parent=1 // pred_fallthru
      _
    // Predicated region
    $region106: #{foodbank_gnn_forward.1} parent=1 // pred_check
      _
    $region107: #{foodbank_gnn_forward.1} parent=1 // pred_check_branch
      %153 = sbr.rel (0) target = $region109
    $region108: #{foodbank_gnn_forward.1} parent=1 // pred_region
      %154 = dma.done [#allocation13], 16
    $region109: #{foodbank_gnn_forward.1} parent=1 // pred_fallthru
      _
    // Predicated region
    $region110: #{foodbank_gnn_forward.1} parent=1 // pred_check
      _
    $region111: #{foodbank_gnn_forward.1} parent=1 // pred_check_branch
      %156 = sbr.rel (0) target = $region113
    $region112: #{foodbank_gnn_forward.1} parent=1 // pred_region
      %157 = dma.done [#allocation13], 512
    $region113: #{foodbank_gnn_forward.1} parent=1 // pred_fallthru
      _
    %v158 = vld [vmem:[%s0] sm:$0xff]
    %v159 = vld [vmem:[%s0 + $0x8] sm:$0xff]
    %v160 = vld [vmem:[%s0 + $0x10] sm:$0xff]
    %v161 = vld [vmem:[%s0 + $0x18] sm:$0xff]
    %v162 = vld [vmem:[%s0 + $0x20] sm:$0xff]
    %v163 = vld [vmem:[%s0 + $0x28] sm:$0xff]
    %v164 = vld [vmem:[%s0 + $0x30] sm:$0x3]
    %v165 = vld [vmem:[#allocation3] sm:$0xff]
    %v166 = vld [vmem:[#allocation3 + $0x8] sm:$0xff]
    %v167 = vld [vmem:[#allocation3 + $0x10] sm:$0xff]
    %v168 = vld [vmem:[#allocation3 + $0x18] sm:$0xff]
    %v169 = vld [vmem:[#allocation3 + $0x20] sm:$0xff]
    %v170 = vld [vmem:[#allocation3 + $0x28] sm:$0xff]
    %v171 = vld [vmem:[#allocation3 + $0x30] sm:$0x3]
    %v172 = vld [vmem:[#allocation8] sm:$0x1f]
    %vm173 = vcmask 39936
    %v175 = vsel %vm173, %v158, 0
    %v178 = vsel %vm173, %v159, 0
    %v181 = vsel %vm173, %v160, 0
    %v184 = vsel %vm173, %v161, 0
    %v187 = vsel %vm173, %v162, 0
    %v190 = vsel %vm173, %v163, 0
    %v193 = vsel %vm173, %v164, 0
    %vm195 = vcmask 1044480
    %v197 = vsel %vm195, %v172, 0
    %199 = vmatprep.subr.mxu0 0.0
    %200 = vmatpush1.msra.mxu0 %v197
    %201 = vmatprep.subr.mxu0 0.0
    %202 = vmatpush1.msra.mxu0 0.0
    %203 = vmatprep.subr.mxu0 0.0
    %204 = vmatpush1.msra.mxu0 0.0
    %205 = vmatprep.subr.mxu0 0.0
    %206 = vmatpush1.msra.mxu0 0.0
    %207 = vmatprep.subr.mxu0 0.0
    %208 = vmatpush1.msra.mxu0 0.0
    %209 = vmatprep.subr.mxu0 0.0
    %210 = vmatpush1.msra.mxu0 0.0
    %211 = vmatprep.subr.mxu0 0.0
    %212 = vmatpush1.msra.mxu0 0.0
    %213 = vmatprep.subr.mxu0 0.0
    %214 = vmatpush1.msra.mxu0 0.0
    %215 = vmatprep.subr.mxu0 0.0
    %216 = vmatpush1.msra.mxu0 0.0
    %217 = vmatprep.subr.mxu0 0.0
    %218 = vmatpush1.msra.mxu0 0.0
    %219 = vmatprep.subr.mxu0 0.0
    %220 = vmatpush1.msra.mxu0 0.0
    %221 = vmatprep.subr.mxu0 0.0
    %222 = vmatpush1.msra.mxu0 0.0
    %223 = vmatprep.subr.mxu0 0.0
    %224 = vmatpush1.msra.mxu0 0.0
    %225 = vmatprep.subr.mxu0 0.0
    %226 = vmatpush1.msra.mxu0 0.0
    %227 = vmatprep.subr.mxu0 0.0
    %228 = vmatpush1.msra.mxu0 0.0
    %229 = vmatprep.subr.mxu0 0.0
    %230 = vmatpush1.msra.mxu0 0.0
    %231 = vmatprep.subr.mxu0 0.0
    %232 = vmatpush1.msra.mxu0 0.0
    %233 = vmatprep.subr.mxu0 0.0
    %234 = vmatpush1.msra.mxu0 0.0
    %235 = vmatprep.subr.mxu0 0.0
    %236 = vmatpush1.msra.mxu0 0.0
    %237 = vmatprep.subr.mxu0 0.0
    %238 = vmatpush1.msra.mxu0 0.0
    %239 = vmatprep.subr.mxu0 0.0
    %240 = vmatpush1.msra.mxu0 0.0
    %241 = vmatprep.subr.mxu0 0.0
    %242 = vmatpush1.msra.mxu0 0.0
    %243 = vmatprep.subr.mxu0 0.0
    %244 = vmatpush1.msra.mxu0 0.0
    %245 = vmatprep.subr.mxu0 0.0
    %246 = vmatpush1.msra.mxu0 0.0
    %247 = vmatprep.subr.mxu0 0.0
    %248 = vmatpush1.msra.mxu0 0.0
    %249 = vmatprep.subr.mxu0 0.0
    %250 = vmatpush1.msra.mxu0 0.0
    %251 = vmatprep.subr.mxu0 0.0
    %252 = vmatpush1.msra.mxu0 0.0
    %253 = vmatprep.subr.mxu0 0.0
    %254 = vmatpush1.msra.mxu0 0.0
    %255 = vmatprep.subr.mxu0 0.0
    %256 = vmatpush1.msra.mxu0 0.0
    %257 = vmatprep.subr.mxu0 0.0
    %258 = vmatpush1.msra.mxu0 0.0
    %259 = vmatprep.subr.mxu0 0.0
    %260 = vmatpush1.msra.mxu0 0.0
    %261 = vmatprep.subr.mxu0 0.0
    %262 = vmatpush1.msra.mxu0 0.0
    %263 = vmatprep.mubr.f32.mxu0 0.0
    %264 = vmatmul.mubr.f32.gmra.mrb[0].mxu0 %v175
    %v265 = vpop.f32.mrb[0].mxu0
    %v266 = vadd.f32 0.0, %v265
    %v267 = vpop.f32.mrb[0].mxu0
    %268 = vmatprep.mubr.f32.mxu0 0.0
    %269 = vmatmul.mubr.f32.gmra.mrb[0].mxu0 %v178
    %v270 = vpop.f32.mrb[0].mxu0
    %v271 = vadd.f32 0.0, %v270
    %v272 = vpop.f32.mrb[0].mxu0
    %273 = vmatprep.mubr.f32.mxu0 0.0
    %274 = vmatmul.mubr.f32.gmra.mrb[0].mxu0 %v181
    %v275 = vpop.f32.mrb[0].mxu0
    %v276 = vadd.f32 0.0, %v275
    %v277 = vpop.f32.mrb[0].mxu0
    %278 = vmatprep.mubr.f32.mxu0 0.0
    %279 = vmatmul.mubr.f32.gmra.mrb[0].mxu0 %v184
    %v280 = vpop.f32.mrb[0].mxu0
    %v281 = vadd.f32 0.0, %v280
    %v282 = vpop.f32.mrb[0].mxu0
    %283 = vmatprep.mubr.f32.mxu0 0.0
    %284 = vmatmul.mubr.f32.gmra.mrb[0].mxu0 %v187
    %v285 = vpop.f32.mrb[0].mxu0
    %v286 = vadd.f32 0.0, %v285
    %v287 = vpop.f32.mrb[0].mxu0
    %288 = vmatprep.mubr.f32.mxu0 0.0
    %289 = vmatmul.mubr.f32.gmra.mrb[0].mxu0 %v190
    %v290 = vpop.f32.mrb[0].mxu0
    %v291 = vadd.f32 0.0, %v290
    %v292 = vpop.f32.mrb[0].mxu0
    %293 = vmatprep.mubr.f32.mxu0 0.0
    %294 = vmatmul.mubr.f32.gmra.mrb[0].mxu0 %v193
    %v295 = vpop.f32.mrb[0].mxu0
    %v296 = vadd.f32 0.0, %v295
    %v297 = vpop.f32.mrb[0].mxu0
    %298 = vdwg.mxu0
    %v299 = vld [vmem:[%s5] sm:$0x1]
    %v301 = vlaneseq
    %v302 = vshrl.u32 %v301, 7
    %v303 = vsub.s32 0, %v302
    %v304 = vrot.slane %v299, %v303
    %v306 = vmul.f32 %v266, %v304
    %v307 = vmul.f32 %v271, %v304
    %v308 = vmul.f32 %v276, %v304
    %v309 = vmul.f32 %v281, %v304
    %v310 = vmul.f32 %v286, %v304
    %v311 = vmul.f32 %v291, %v304
    %v312 = vmul.f32 %v296, %v304
    %vm313 = vcmask 261120
    %v314 = vsel %vm313, %v306, 0.0
    %315 = vadd.xlane.f32.xlu0 %v314
    %v316 = vpop.xlane.xlu0 %315
    %v317 = vsel %vm313, %v307, 0.0
    %318 = vadd.xlane.f32.xlu0 %v317
    %v319 = vpop.xlane.xlu0 %318
    %v320 = vsel %vm313, %v308, 0.0
    %321 = vadd.xlane.f32.xlu0 %v320
    %v322 = vpop.xlane.xlu0 %321
    %v323 = vsel %vm313, %v309, 0.0
    %324 = vadd.xlane.f32.xlu0 %v323
    %v325 = vpop.xlane.xlu0 %324
    %v326 = vsel %vm313, %v310, 0.0
    %327 = vadd.xlane.f32.xlu0 %v326
    %v328 = vpop.xlane.xlu0 %327
    %v329 = vsel %vm313, %v311, 0.0
    %330 = vadd.xlane.f32.xlu0 %v329
    %v331 = vpop.xlane.xlu0 %330
    %vm332 = vcmask 254976
    %v333 = vsel %vm332, %v312, 0.0
    %334 = vadd.xlane.f32.xlu0 %v333
    %v335 = vpop.xlane.xlu0 %334
    %v336 = vld [vmem:[#allocation9] sm:$0x1]
    %v338 = vlaneseq
    %v339 = vshrl.u32 %v338, 7
    %v340 = vsub.s32 0, %v339
    %v341 = vrot.slane %v336, %v340
    %v343 = vmul.f32 %v266, %v341
    %v344 = vmul.f32 %v271, %v341
    %v345 = vmul.f32 %v276, %v341
    %v346 = vmul.f32 %v281, %v341
    %v347 = vmul.f32 %v286, %v341
    %v348 = vmul.f32 %v291, %v341
    %v349 = vmul.f32 %v296, %v341
    %v350 = vsel %vm313, %v343, 0.0
    %351 = vadd.xlane.f32.xlu0 %v350
    %v352 = vpop.xlane.xlu0 %351
    %v353 = vsel %vm313, %v344, 0.0
    %354 = vadd.xlane.f32.xlu0 %v353
    %v355 = vpop.xlane.xlu0 %354
    %v356 = vsel %vm313, %v345, 0.0
    %357 = vadd.xlane.f32.xlu0 %v356
    %v358 = vpop.xlane.xlu0 %357
    %v359 = vsel %vm313, %v346, 0.0
    %360 = vadd.xlane.f32.xlu0 %v359
    %v361 = vpop.xlane.xlu0 %360
    %v362 = vsel %vm313, %v347, 0.0
    %363 = vadd.xlane.f32.xlu0 %v362
    %v364 = vpop.xlane.xlu0 %363
    %v365 = vsel %vm313, %v348, 0.0
    %366 = vadd.xlane.f32.xlu0 %v365
    %v367 = vpop.xlane.xlu0 %366
    %v368 = vsel %vm332, %v349, 0.0
    %369 = vadd.xlane.f32.xlu0 %v368
    %v370 = vpop.xlane.xlu0 %369
    %371 = vxpose.xlu0.b32.start [1/16] %v316, 128
    %372 = vxpose.xlu0.b32.cont [2/16] %v319, 128
    %373 = vxpose.xlu0.b32.cont [3/16] %v322, 128
    %374 = vxpose.xlu0.b32.cont [4/16] %v325, 128
    %375 = vxpose.xlu0.b32.cont [5/16] %v328, 128
    %376 = vxpose.xlu0.b32.cont [6/16] %v331, 128
    %377 = vxpose.xlu0.b32.cont [7/16] %v335, 128
    %378 = vxpose.xlu0.b32.cont [8/16] 0.0, 128
    %379 = vxpose.xlu0.b32.cont [9/16] 0.0, 128
    %380 = vxpose.xlu0.b32.cont [10/16] 0.0, 128
    %381 = vxpose.xlu0.b32.cont [11/16] 0.0, 128
    %382 = vxpose.xlu0.b32.cont [12/16] 0.0, 128
    %383 = vxpose.xlu0.b32.cont [13/16] 0.0, 128
    %384 = vxpose.xlu0.b32.cont [14/16] 0.0, 128
    %385 = vxpose.xlu0.b32.cont [15/16] 0.0, 128
    %386 = vxpose.xlu0.b32.end [16/16] 0.0, 128
    %v387 = vpop.trf.xlu0
    %v388 = vpop.trf.xlu0
    %v389 = vpop.trf.xlu0
    %v390 = vpop.trf.xlu0
    %v391 = vpop.trf.xlu0
    %v392 = vpop.trf.xlu0
    %v393 = vpop.trf.xlu0
    %v394 = vpop.trf.xlu0
    %v395 = vpop.trf.xlu0
    %v396 = vpop.trf.xlu0
    %v397 = vpop.trf.xlu0
    %v398 = vpop.trf.xlu0
    %v399 = vpop.trf.xlu0
    %v400 = vpop.trf.xlu0
    %v401 = vpop.trf.xlu0
    %v402 = vpop.trf.xlu0
    %v403 = vlaneseq
    %v404 = vshrl.u32 %v403, 7
    %v405 = vsub.s32 0, %v404
    %v406 = vrot.slane %v387, %v405
    %v407 = vadd.f32 %v352, %v406
    %v408 = vadd.f32 %v355, %v406
    %v409 = vadd.f32 %v358, %v406
    %v410 = vadd.f32 %v361, %v406
    %v411 = vadd.f32 %v364, %v406
    %v412 = vadd.f32 %v367, %v406
    %v413 = vadd.f32 %v370, %v406
    %vm414 = vcmp.gt.f32.partialorder %v407, 0.0
    %vm415 = vcmp.gt.f32.partialorder %v408, 0.0
    %vm416 = vcmp.gt.f32.partialorder %v409, 0.0
    %vm417 = vcmp.gt.f32.partialorder %v410, 0.0
    %vm418 = vcmp.gt.f32.partialorder %v411, 0.0
    %vm419 = vcmp.gt.f32.partialorder %v412, 0.0
    %vm420 = vcmp.gt.f32.partialorder %v413, 0.0
    %v421 = vmul.f32 %v407, 0.2
    %v422 = vmul.f32 %v408, 0.2
    %v423 = vmul.f32 %v409, 0.2
    %v424 = vmul.f32 %v410, 0.2
    %v425 = vmul.f32 %v411, 0.2
    %v426 = vmul.f32 %v412, 0.2
    %v427 = vmul.f32 %v413, 0.2
    %v428 = vsel %vm414, %v407, %v421
    %v429 = vsel %vm415, %v408, %v422
    %v430 = vsel %vm416, %v409, %v423
    %v431 = vsel %vm417, %v410, %v424
    %v432 = vsel %vm418, %v411, %v425
    %v433 = vsel %vm419, %v412, %v426
    %v434 = vsel %vm420, %v413, %v427
    %v435 = vadd.f32 %v428, %v165
    %v436 = vadd.f32 %v429, %v166
    %v437 = vadd.f32 %v430, %v167
    %v438 = vadd.f32 %v431, %v168
    %v439 = vadd.f32 %v432, %v169
    %v440 = vadd.f32 %v433, %v170
    %v441 = vadd.f32 %v434, %v171
    %vm442 = vcmask 408576
    %v443 = vsel %vm442, %v435, -inf
    %444 = vmax.xlane.f32.xlu0 %v443
    %v445 = vpop.xlane.xlu0 %444
    %v446 = vsel %vm442, %v436, -inf
    %447 = vmax.xlane.f32.xlu0 %v446
    %v448 = vpop.xlane.xlu0 %447
    %v449 = vsel %vm442, %v437, -inf
    %450 = vmax.xlane.f32.xlu0 %v449
    %v451 = vpop.xlane.xlu0 %450
    %v452 = vsel %vm442, %v438, -inf
    %453 = vmax.xlane.f32.xlu0 %v452
    %v454 = vpop.xlane.xlu0 %453
    %v455 = vsel %vm442, %v439, -inf
    %456 = vmax.xlane.f32.xlu0 %v455
    %v457 = vpop.xlane.xlu0 %456
    %v458 = vsel %vm442, %v440, -inf
    %459 = vmax.xlane.f32.xlu0 %v458
    %v460 = vpop.xlane.xlu0 %459
    %vm461 = vcmask 402432
    %v462 = vsel %vm461, %v441, -inf
    %463 = vmax.xlane.f32.xlu0 %v462
    %v464 = vpop.xlane.xlu0 %463
    %v465 = vsub.f32 %v435, %v445
    %v466 = vsub.f32 %v436, %v448
    %v467 = vsub.f32 %v437, %v451
    %v468 = vsub.f32 %v438, %v454
    %v469 = vsub.f32 %v439, %v457
    %v470 = vsub.f32 %v440, %v460
    %v471 = vsub.f32 %v441, %v464
    %v472 = vmul.f32 %v465, 1.442695
    %v473 = vpow.pop %v472
    %v474 = vmul.f32 %v466, 1.442695
    %v475 = vpow.pop %v474
    %v476 = vmul.f32 %v467, 1.442695
    %v477 = vpow.pop %v476
    %v478 = vmul.f32 %v468, 1.442695
    %v479 = vpow.pop %v478
    %v480 = vmul.f32 %v469, 1.442695
    %v481 = vpow.pop %v480
    %v482 = vmul.f32 %v470, 1.442695
    %v483 = vpow.pop %v482
    %v484 = vmul.f32 %v471, 1.442695
    %v485 = vpow.pop %v484
    %v486 = vsel %vm442, %v473, 0.0
    %487 = vadd.xlane.f32.xlu0 %v486
    %v488 = vpop.xlane.xlu0 %487
    %v489 = vsel %vm442, %v475, 0.0
    %490 = vadd.xlane.f32.xlu0 %v489
    %v491 = vpop.xlane.xlu0 %490
    %v492 = vsel %vm442, %v477, 0.0
    %493 = vadd.xlane.f32.xlu0 %v492
    %v494 = vpop.xlane.xlu0 %493
    %v495 = vsel %vm442, %v479, 0.0
    %496 = vadd.xlane.f32.xlu0 %v495
    %v497 = vpop.xlane.xlu0 %496
    %v498 = vsel %vm442, %v481, 0.0
    %499 = vadd.xlane.f32.xlu0 %v498
    %v500 = vpop.xlane.xlu0 %499
    %v501 = vsel %vm442, %v483, 0.0
    %502 = vadd.xlane.f32.xlu0 %v501
    %v503 = vpop.xlane.xlu0 %502
    %v504 = vsel %vm461, %v485, 0.0
    %505 = vadd.xlane.f32.xlu0 %v504
    %v506 = vpop.xlane.xlu0 %505
    %v507 = vrcp.pop %v488
    %v508 = vrcp.pop %v491
    %v509 = vrcp.pop %v494
    %v510 = vrcp.pop %v497
    %v511 = vrcp.pop %v500
    %v512 = vrcp.pop %v503
    %v513 = vrcp.pop %v506
    %v515 = vsel %vm442, %v473, 0
    %v518 = vsel %vm442, %v475, 0
    %v521 = vsel %vm442, %v477, 0
    %v524 = vsel %vm442, %v479, 0
    %v527 = vsel %vm442, %v481, 0
    %v530 = vsel %vm442, %v483, 0
    %v533 = vsel %vm442, %v485, 0
    %vm535 = vcmask 1041408
    %v537 = vsel %vm535, %v296, 0
    %539 = vmatprep.subr.mxu0 0.0
    %540 = vmatpush1.msra.mxu0 %v266
    %541 = vmatprep.subr.mxu0 0.0
    %542 = vmatpush1.msra.mxu0 %v271
    %543 = vmatprep.subr.mxu0 0.0
    %544 = vmatpush1.msra.mxu0 %v276
    %545 = vmatprep.subr.mxu0 0.0
    %546 = vmatpush1.msra.mxu0 %v281
    %547 = vmatprep.subr.mxu0 0.0
    %548 = vmatpush1.msra.mxu0 %v286
    %549 = vmatprep.subr.mxu0 0.0
    %550 = vmatpush1.msra.mxu0 %v291
    %551 = vmatprep.subr.mxu0 0.0
    %552 = vmatpush1.msra.mxu0 %v537
    %553 = vmatprep.subr.mxu0 0.0
    %554 = vmatpush1.msra.mxu0 0.0
    %555 = vmatprep.subr.mxu0 0.0
    %556 = vmatpush1.msra.mxu0 0.0
    %557 = vmatprep.subr.mxu0 0.0
    %558 = vmatpush1.msra.mxu0 0.0
    %559 = vmatprep.subr.mxu0 0.0
    %560 = vmatpush1.msra.mxu0 0.0
    %561 = vmatprep.subr.mxu0 0.0
    %562 = vmatpush1.msra.mxu0 0.0
    %563 = vmatprep.subr.mxu0 0.0
    %564 = vmatpush1.msra.mxu0 0.0
    %565 = vmatprep.subr.mxu0 0.0
    %566 = vmatpush1.msra.mxu0 0.0
    %567 = vmatprep.subr.mxu0 0.0
    %568 = vmatpush1.msra.mxu0 0.0
    %569 = vmatprep.subr.mxu0 0.0
    %570 = vmatpush1.msra.mxu0 0.0
    %571 = vmatprep.subr.mxu0 0.0
    %572 = vmatpush1.msra.mxu0 0.0
    %573 = vmatprep.subr.mxu0 0.0
    %574 = vmatpush1.msra.mxu0 0.0
    %575 = vmatprep.subr.mxu0 0.0
    %576 = vmatpush1.msra.mxu0 0.0
    %577 = vmatprep.subr.mxu0 0.0
    %578 = vmatpush1.msra.mxu0 0.0
    %579 = vmatprep.subr.mxu0 0.0
    %580 = vmatpush1.msra.mxu0 0.0
    %581 = vmatprep.subr.mxu0 0.0
    %582 = vmatpush1.msra.mxu0 0.0
    %583 = vmatprep.subr.mxu0 0.0
    %584 = vmatpush1.msra.mxu0 0.0
    %585 = vmatprep.subr.mxu0 0.0
    %586 = vmatpush1.msra.mxu0 0.0
    %587 = vmatprep.subr.mxu0 0.0
    %588 = vmatpush1.msra.mxu0 0.0
    %589 = vmatprep.subr.mxu0 0.0
    %590 = vmatpush1.msra.mxu0 0.0
    %591 = vmatprep.subr.mxu0 0.0
    %592 = vmatpush1.msra.mxu0 0.0
    %593 = vmatprep.subr.mxu0 0.0
    %594 = vmatpush1.msra.mxu0 0.0
    %595 = vmatprep.subr.mxu0 0.0
    %596 = vmatpush1.msra.mxu0 0.0
    %597 = vmatprep.subr.mxu0 0.0
    %598 = vmatpush1.msra.mxu0 0.0
    %599 = vmatprep.subr.mxu0 0.0
    %600 = vmatpush1.msra.mxu0 0.0
    %601 = vmatprep.subr.mxu0 0.0
    %602 = vmatpush1.msra.mxu0 0.0
    %603 = vmatprep.mubr.f32.mxu0 0.0
    %604 = vmatmul.mubr.f32.gmra.mrb[0].mxu0 %v515
    %v605 = vpop.f32.mrb[0].mxu0
    %v606 = vadd.f32 0.0, %v605
    %v607 = vpop.f32.mrb[0].mxu0
    %608 = vmatprep.mubr.f32.mxu0 0.0
    %609 = vmatmul.mubr.f32.gmra.mrb[0].mxu0 %v518
    %v610 = vpop.f32.mrb[0].mxu0
    %v611 = vadd.f32 0.0, %v610
    %v612 = vpop.f32.mrb[0].mxu0
    %613 = vmatprep.mubr.f32.mxu0 0.0
    %614 = vmatmul.mubr.f32.gmra.mrb[0].mxu0 %v521
    %v615 = vpop.f32.mrb[0].mxu0
    %v616 = vadd.f32 0.0, %v615
    %v617 = vpop.f32.mrb[0].mxu0
    %618 = vmatprep.mubr.f32.mxu0 0.0
    %619 = vmatmul.mubr.f32.gmra.mrb[0].mxu0 %v524
    %v620 = vpop.f32.mrb[0].mxu0
    %v621 = vadd.f32 0.0, %v620
    %v622 = vpop.f32.mrb[0].mxu0
    %623 = vmatprep.mubr.f32.mxu0 0.0
    %624 = vmatmul.mubr.f32.gmra.mrb[0].mxu0 %v527
    %v625 = vpop.f32.mrb[0].mxu0
    %v626 = vadd.f32 0.0, %v625
    %v627 = vpop.f32.mrb[0].mxu0
    %628 = vmatprep.mubr.f32.mxu0 0.0
    %629 = vmatmul.mubr.f32.gmra.mrb[0].mxu0 %v530
    %v630 = vpop.f32.mrb[0].mxu0
    %v631 = vadd.f32 0.0, %v630
    %v632 = vpop.f32.mrb[0].mxu0
    %633 = vmatprep.mubr.f32.mxu0 0.0
    %634 = vmatmul.mubr.f32.gmra.mrb[0].mxu0 %v533
    %v635 = vpop.f32.mrb[0].mxu0
    %v636 = vadd.f32 0.0, %v635
    %v637 = vpop.f32.mrb[0].mxu0
    %638 = vdwg.mxu0
    %v639 = vmul.f32 %v606, %v507
    %v640 = vmul.f32 %v611, %v508
    %v641 = vmul.f32 %v616, %v509
    %v642 = vmul.f32 %v621, %v510
    %v643 = vmul.f32 %v626, %v511
    %v644 = vmul.f32 %v631, %v512
    %v645 = vmul.f32 %v636, %v513
    %v646 = vld [vmem:[#allocation11] sm:$0x1]
    %v648 = vlaneseq
    %v649 = vshrl.u32 %v648, 7
    %v650 = vsub.s32 0, %v649
    %v651 = vrot.slane %v646, %v650
    %v653 = vadd.f32 %v639, %v651
    %v654 = vadd.f32 %v640, %v651
    %v655 = vadd.f32 %v641, %v651
    %v656 = vadd.f32 %v642, %v651
    %v657 = vadd.f32 %v643, %v651
    %v658 = vadd.f32 %v644, %v651
    %v659 = vadd.f32 %v645, %v651
    %v660 = vmax.f32 %v653, 0.0
    %v661 = vmax.f32 %v654, 0.0
    %v662 = vmax.f32 %v655, 0.0
    %v663 = vmax.f32 %v656, 0.0
    %v664 = vmax.f32 %v657, 0.0
    %v665 = vmax.f32 %v658, 0.0
    %v666 = vmax.f32 %v659, 0.0
    %v667 = vld [vmem:[%s8] sm:$0xff]
    %v668 = vld [vmem:[%s8 + $0x8] sm:$0xff]
    %v669 = vld [vmem:[%s8 + $0x10] sm:$0xff]
    %v670 = vld [vmem:[%s8 + $0x18] sm:$0xff]
    %678 = vrot.lane.b32.xlu0 %v306, 96
    %v679 = vpop.permute.xlu0 %678
    %680 = vrot.lane.b32.xlu0 %v307, 96
    %v681 = vpop.permute.xlu0 %680
    %682 = vrot.lane.b32.xlu0 %v308, 96
    %v683 = vpop.permute.xlu0 %682
    %684 = vrot.lane.b32.xlu0 %v309, 96
    %v685 = vpop.permute.xlu0 %684
    %686 = vrot.lane.b32.xlu0 %v310, 96
    %v687 = vpop.permute.xlu0 %686
    %688 = vrot.lane.b32.xlu0 %v311, 96
    %v689 = vpop.permute.xlu0 %688
    %690 = vrot.lane.b32.xlu0 %v312, 96
    %v691 = vpop.permute.xlu0 %690
    %v699 = vsel %vm313, %v679, 0.0
    %700 = vadd.xlane.f32.xlu0 %v699
    %v701 = vpop.xlane.xlu0 %700
    %v702 = vsel %vm313, %v681, 0.0
    %703 = vadd.xlane.f32.xlu0 %v702
    %v704 = vpop.xlane.xlu0 %703
    %v705 = vsel %vm313, %v683, 0.0
    %706 = vadd.xlane.f32.xlu0 %v705
    %v707 = vpop.xlane.xlu0 %706
    %v708 = vsel %vm313, %v685, 0.0
    %709 = vadd.xlane.f32.xlu0 %v708
    %v710 = vpop.xlane.xlu0 %709
    %v711 = vsel %vm313, %v687, 0.0
    %712 = vadd.xlane.f32.xlu0 %v711
    %v713 = vpop.xlane.xlu0 %712
    %v714 = vsel %vm313, %v689, 0.0
    %715 = vadd.xlane.f32.xlu0 %v714
    %v716 = vpop.xlane.xlu0 %715
    %v717 = vsel %vm332, %v691, 0.0
    %718 = vadd.xlane.f32.xlu0 %v717
    %v719 = vpop.xlane.xlu0 %718
    %727 = vrot.lane.b32.xlu0 %v343, 96
    %v728 = vpop.permute.xlu0 %727
    %729 = vrot.lane.b32.xlu0 %v344, 96
    %v730 = vpop.permute.xlu0 %729
    %731 = vrot.lane.b32.xlu0 %v345, 96
    %v732 = vpop.permute.xlu0 %731
    %733 = vrot.lane.b32.xlu0 %v346, 96
    %v734 = vpop.permute.xlu0 %733
    %735 = vrot.lane.b32.xlu0 %v347, 96
    %v736 = vpop.permute.xlu0 %735
    %737 = vrot.lane.b32.xlu0 %v348, 96
    %v738 = vpop.permute.xlu0 %737
    %739 = vrot.lane.b32.xlu0 %v349, 96
    %v740 = vpop.permute.xlu0 %739
    %v748 = vsel %vm313, %v728, 0.0
    %749 = vadd.xlane.f32.xlu0 %v748
    %v750 = vpop.xlane.xlu0 %749
    %v751 = vsel %vm313, %v730, 0.0
    %752 = vadd.xlane.f32.xlu0 %v751
    %v753 = vpop.xlane.xlu0 %752
    %v754 = vsel %vm313, %v732, 0.0
    %755 = vadd.xlane.f32.xlu0 %v754
    %v756 = vpop.xlane.xlu0 %755
    %v757 = vsel %vm313, %v734, 0.0
    %758 = vadd.xlane.f32.xlu0 %v757
    %v759 = vpop.xlane.xlu0 %758
    %v760 = vsel %vm313, %v736, 0.0
    %761 = vadd.xlane.f32.xlu0 %v760
    %v762 = vpop.xlane.xlu0 %761
    %v763 = vsel %vm313, %v738, 0.0
    %764 = vadd.xlane.f32.xlu0 %v763
    %v765 = vpop.xlane.xlu0 %764
    %v766 = vsel %vm332, %v740, 0.0
    %767 = vadd.xlane.f32.xlu0 %v766
    %v768 = vpop.xlane.xlu0 %767
    %769 = vxpose.xlu0.b32.start [1/16] %v701, 128
    %770 = vxpose.xlu0.b32.cont [2/16] %v704, 128
    %771 = vxpose.xlu0.b32.cont [3/16] %v707, 128
    %772 = vxpose.xlu0.b32.cont [4/16] %v710, 128
    %773 = vxpose.xlu0.b32.cont [5/16] %v713, 128
    %774 = vxpose.xlu0.b32.cont [6/16] %v716, 128
    %775 = vxpose.xlu0.b32.cont [7/16] %v719, 128
    %776 = vxpose.xlu0.b32.cont [8/16] 0.0, 128
    %777 = vxpose.xlu0.b32.cont [9/16] 0.0, 128
    %778 = vxpose.xlu0.b32.cont [10/16] 0.0, 128
    %779 = vxpose.xlu0.b32.cont [11/16] 0.0, 128
    %780 = vxpose.xlu0.b32.cont [12/16] 0.0, 128
    %781 = vxpose.xlu0.b32.cont [13/16] 0.0, 128
    %782 = vxpose.xlu0.b32.cont [14/16] 0.0, 128
    %783 = vxpose.xlu0.b32.cont [15/16] 0.0, 128
    %784 = vxpose.xlu0.b32.end [16/16] 0.0, 128
    %v785 = vpop.trf.xlu0
    %v786 = vpop.trf.xlu0
    %v787 = vpop.trf.xlu0
    %v788 = vpop.trf.xlu0
    %v789 = vpop.trf.xlu0
    %v790 = vpop.trf.xlu0
    %v791 = vpop.trf.xlu0
    %v792 = vpop.trf.xlu0
    %v793 = vpop.trf.xlu0
    %v794 = vpop.trf.xlu0
    %v795 = vpop.trf.xlu0
    %v796 = vpop.trf.xlu0
    %v797 = vpop.trf.xlu0
    %v798 = vpop.trf.xlu0
    %v799 = vpop.trf.xlu0
    %v800 = vpop.trf.xlu0
    %v801 = vlaneseq
    %v802 = vshrl.u32 %v801, 7
    %v803 = vsub.s32 0, %v802
    %v804 = vrot.slane %v785, %v803
    %v805 = vadd.f32 %v750, %v804
    %v806 = vadd.f32 %v753, %v804
    %v807 = vadd.f32 %v756, %v804
    %v808 = vadd.f32 %v759, %v804
    %v809 = vadd.f32 %v762, %v804
    %v810 = vadd.f32 %v765, %v804
    %v811 = vadd.f32 %v768, %v804
    %vm812 = vcmp.gt.f32.partialorder %v805, 0.0
    %vm813 = vcmp.gt.f32.partialorder %v806, 0.0
    %vm814 = vcmp.gt.f32.partialorder %v807, 0.0
    %vm815 = vcmp.gt.f32.partialorder %v808, 0.0
    %vm816 = vcmp.gt.f32.partialorder %v809, 0.0
    %vm817 = vcmp.gt.f32.partialorder %v810, 0.0
    %vm818 = vcmp.gt.f32.partialorder %v811, 0.0
    %v819 = vmul.f32 %v805, 0.2
    %v820 = vmul.f32 %v806, 0.2
    %v821 = vmul.f32 %v807, 0.2
    %v822 = vmul.f32 %v808, 0.2
    %v823 = vmul.f32 %v809, 0.2
    %v824 = vmul.f32 %v810, 0.2
    %v825 = vmul.f32 %v811, 0.2
    %v826 = vsel %vm812, %v805, %v819
    %v827 = vsel %vm813, %v806, %v820
    %v828 = vsel %vm814, %v807, %v821
    %v829 = vsel %vm815, %v808, %v822
    %v830 = vsel %vm816, %v809, %v823
    %v831 = vsel %vm817, %v810, %v824
    %v832 = vsel %vm818, %v811, %v825
    %v833 = vadd.f32 %v826, %v165
    %v834 = vadd.f32 %v827, %v166
    %v835 = vadd.f32 %v828, %v167
    %v836 = vadd.f32 %v829, %v168
    %v837 = vadd.f32 %v830, %v169
    %v838 = vadd.f32 %v831, %v170
    %v839 = vadd.f32 %v832, %v171
    %v840 = vsel %vm442, %v833, -inf
    %841 = vmax.xlane.f32.xlu0 %v840
    %v842 = vpop.xlane.xlu0 %841
    %v843 = vsel %vm442, %v834, -inf
    %844 = vmax.xlane.f32.xlu0 %v843
    %v845 = vpop.xlane.xlu0 %844
    %v846 = vsel %vm442, %v835, -inf
    %847 = vmax.xlane.f32.xlu0 %v846
    %v848 = vpop.xlane.xlu0 %847
    %v849 = vsel %vm442, %v836, -inf
    %850 = vmax.xlane.f32.xlu0 %v849
    %v851 = vpop.xlane.xlu0 %850
    %v852 = vsel %vm442, %v837, -inf
    %853 = vmax.xlane.f32.xlu0 %v852
    %v854 = vpop.xlane.xlu0 %853
    %v855 = vsel %vm442, %v838, -inf
    %856 = vmax.xlane.f32.xlu0 %v855
    %v857 = vpop.xlane.xlu0 %856
    %v858 = vsel %vm461, %v839, -inf
    %859 = vmax.xlane.f32.xlu0 %v858
    %v860 = vpop.xlane.xlu0 %859
    %v861 = vsub.f32 %v833, %v842
    %v862 = vsub.f32 %v834, %v845
    %v863 = vsub.f32 %v835, %v848
    %v864 = vsub.f32 %v836, %v851
    %v865 = vsub.f32 %v837, %v854
    %v866 = vsub.f32 %v838, %v857
    %v867 = vsub.f32 %v839, %v860
    %v868 = vmul.f32 %v861, 1.442695
    %v869 = vpow.pop %v868
    %v870 = vmul.f32 %v862, 1.442695
    %v871 = vpow.pop %v870
    %v872 = vmul.f32 %v863, 1.442695
    %v873 = vpow.pop %v872
    %v874 = vmul.f32 %v864, 1.442695
    %v875 = vpow.pop %v874
    %v876 = vmul.f32 %v865, 1.442695
    %v877 = vpow.pop %v876
    %v878 = vmul.f32 %v866, 1.442695
    %v879 = vpow.pop %v878
    %v880 = vmul.f32 %v867, 1.442695
    %v881 = vpow.pop %v880
    %v882 = vsel %vm442, %v869, 0.0
    %883 = vadd.xlane.f32.xlu0 %v882
    %v884 = vpop.xlane.xlu0 %883
    %v885 = vsel %vm442, %v871, 0.0
    %886 = vadd.xlane.f32.xlu0 %v885
    %v887 = vpop.xlane.xlu0 %886
    %v888 = vsel %vm442, %v873, 0.0
    %889 = vadd.xlane.f32.xlu0 %v888
    %v890 = vpop.xlane.xlu0 %889
    %v891 = vsel %vm442, %v875, 0.0
    %892 = vadd.xlane.f32.xlu0 %v891
    %v893 = vpop.xlane.xlu0 %892
    %v894 = vsel %vm442, %v877, 0.0
    %895 = vadd.xlane.f32.xlu0 %v894
    %v896 = vpop.xlane.xlu0 %895
    %v897 = vsel %vm442, %v879, 0.0
    %898 = vadd.xlane.f32.xlu0 %v897
    %v899 = vpop.xlane.xlu0 %898
    %v900 = vsel %vm461, %v881, 0.0
    %901 = vadd.xlane.f32.xlu0 %v900
    %v902 = vpop.xlane.xlu0 %901
    %v903 = vrcp.pop %v884
    %v904 = vrcp.pop %v887
    %v905 = vrcp.pop %v890
    %v906 = vrcp.pop %v893
    %v907 = vrcp.pop %v896
    %v908 = vrcp.pop %v899
    %v909 = vrcp.pop %v902
    %916 = vrot.lane.b32.xlu0 %v266, 96
    %v917 = vpop.permute.xlu0 %916
    %918 = vrot.lane.b32.xlu0 %v271, 96
    %v919 = vpop.permute.xlu0 %918
    %920 = vrot.lane.b32.xlu0 %v276, 96
    %v921 = vpop.permute.xlu0 %920
    %922 = vrot.lane.b32.xlu0 %v281, 96
    %v923 = vpop.permute.xlu0 %922
    %924 = vrot.lane.b32.xlu0 %v286, 96
    %v925 = vpop.permute.xlu0 %924
    %926 = vrot.lane.b32.xlu0 %v291, 96
    %v927 = vpop.permute.xlu0 %926
    %928 = vrot.lane.b32.xlu0 %v296, 96
    %v929 = vpop.permute.xlu0 %928
    %v937 = vsel %vm442, %v869, 0
    %v940 = vsel %vm442, %v871, 0
    %v943 = vsel %vm442, %v873, 0
    %v946 = vsel %vm442, %v875, 0
    %v949 = vsel %vm442, %v877, 0
    %v952 = vsel %vm442, %v879, 0
    %v955 = vsel %vm442, %v881, 0
    %v957 = vsel %vm535, %v929, 0
    %959 = vmatprep.subr.mxu0 0.0
    %960 = vmatpush1.msra.mxu0 %v917
    %961 = vmatprep.subr.mxu0 0.0
    %962 = vmatpush1.msra.mxu0 %v919
    %963 = vmatprep.subr.mxu0 0.0
    %964 = vmatpush1.msra.mxu0 %v921
    %965 = vmatprep.subr.mxu0 0.0
    %966 = vmatpush1.msra.mxu0 %v923
    %967 = vmatprep.subr.mxu0 0.0
    %968 = vmatpush1.msra.mxu0 %v925
    %969 = vmatprep.subr.mxu0 0.0
    %970 = vmatpush1.msra.mxu0 %v927
    %971 = vmatprep.subr.mxu0 0.0
    %972 = vmatpush1.msra.mxu0 %v957
    %973 = vmatprep.subr.mxu0 0.0
    %974 = vmatpush1.msra.mxu0 0.0
    %975 = vmatprep.subr.mxu0 0.0
    %976 = vmatpush1.msra.mxu0 0.0
    %977 = vmatprep.subr.mxu0 0.0
    %978 = vmatpush1.msra.mxu0 0.0
    %979 = vmatprep.subr.mxu0 0.0
    %980 = vmatpush1.msra.mxu0 0.0
    %981 = vmatprep.subr.mxu0 0.0
    %982 = vmatpush1.msra.mxu0 0.0
    %983 = vmatprep.subr.mxu0 0.0
    %984 = vmatpush1.msra.mxu0 0.0
    %985 = vmatprep.subr.mxu0 0.0
    %986 = vmatpush1.msra.mxu0 0.0
    %987 = vmatprep.subr.mxu0 0.0
    %988 = vmatpush1.msra.mxu0 0.0
    %989 = vmatprep.subr.mxu0 0.0
    %990 = vmatpush1.msra.mxu0 0.0
    %991 = vmatprep.subr.mxu0 0.0
    %992 = vmatpush1.msra.mxu0 0.0
    %993 = vmatprep.subr.mxu0 0.0
    %994 = vmatpush1.msra.mxu0 0.0
    %995 = vmatprep.subr.mxu0 0.0
    %996 = vmatpush1.msra.mxu0 0.0
    %997 = vmatprep.subr.mxu0 0.0
    %998 = vmatpush1.msra.mxu0 0.0
    %999 = vmatprep.subr.mxu0 0.0
    %1000 = vmatpush1.msra.mxu0 0.0
    %1001 = vmatprep.subr.mxu0 0.0
    %1002 = vmatpush1.msra.mxu0 0.0
    %1003 = vmatprep.subr.mxu0 0.0
    %1004 = vmatpush1.msra.mxu0 0.0
    %1005 = vmatprep.subr.mxu0 0.0
    %1006 = vmatpush1.msra.mxu0 0.0
    %1007 = vmatprep.subr.mxu0 0.0
    %1008 = vmatpush1.msra.mxu0 0.0
    %1009 = vmatprep.subr.mxu0 0.0
    %1010 = vmatpush1.msra.mxu0 0.0
    %1011 = vmatprep.subr.mxu0 0.0
    %1012 = vmatpush1.msra.mxu0 0.0
    %1013 = vmatprep.subr.mxu0 0.0
    %1014 = vmatpush1.msra.mxu0 0.0
    %1015 = vmatprep.subr.mxu0 0.0
    %1016 = vmatpush1.msra.mxu0 0.0
    %1017 = vmatprep.subr.mxu0 0.0
    %1018 = vmatpush1.msra.mxu0 0.0
    %1019 = vmatprep.subr.mxu0 0.0
    %1020 = vmatpush1.msra.mxu0 0.0
    %1021 = vmatprep.subr.mxu0 0.0
    %1022 = vmatpush1.msra.mxu0 0.0
    %1023 = vmatprep.mubr.f32.mxu0 0.0
    %1024 = vmatmul.mubr.f32.gmra.mrb[0].mxu0 %v937
    %v1025 = vpop.f32.mrb[0].mxu0
    %v1026 = vadd.f32 0.0, %v1025
    %v1027 = vpop.f32.mrb[0].mxu0
    %1028 = vmatprep.mubr.f32.mxu0 0.0
    %1029 = vmatmul.mubr.f32.gmra.mrb[0].mxu0 %v940
    %v1030 = vpop.f32.mrb[0].mxu0
    %v1031 = vadd.f32 0.0, %v1030
    %v1032 = vpop.f32.mrb[0].mxu0
    %1033 = vmatprep.mubr.f32.mxu0 0.0
    %1034 = vmatmul.mubr.f32.gmra.mrb[0].mxu0 %v943
    %v1035 = vpop.f32.mrb[0].mxu0
    %v1036 = vadd.f32 0.0, %v1035
    %v1037 = vpop.f32.mrb[0].mxu0
    %1038 = vmatprep.mubr.f32.mxu0 0.0
    %1039 = vmatmul.mubr.f32.gmra.mrb[0].mxu0 %v946
    %v1040 = vpop.f32.mrb[0].mxu0
    %v1041 = vadd.f32 0.0, %v1040
    %v1042 = vpop.f32.mrb[0].mxu0
    %1043 = vmatprep.mubr.f32.mxu0 0.0
    %1044 = vmatmul.mubr.f32.gmra.mrb[0].mxu0 %v949
    %v1045 = vpop.f32.mrb[0].mxu0
    %v1046 = vadd.f32 0.0, %v1045
    %v1047 = vpop.f32.mrb[0].mxu0
    %1048 = vmatprep.mubr.f32.mxu0 0.0
    %1049 = vmatmul.mubr.f32.gmra.mrb[0].mxu0 %v952
    %v1050 = vpop.f32.mrb[0].mxu0
    %v1051 = vadd.f32 0.0, %v1050
    %v1052 = vpop.f32.mrb[0].mxu0
    %1053 = vmatprep.mubr.f32.mxu0 0.0
    %1054 = vmatmul.mubr.f32.gmra.mrb[0].mxu0 %v955
    %v1055 = vpop.f32.mrb[0].mxu0
    %v1056 = vadd.f32 0.0, %v1055
    %v1057 = vpop.f32.mrb[0].mxu0
    %1058 = vdwg.mxu0
    %v1059 = vmul.f32 %v1026, %v903
    %v1060 = vmul.f32 %v1031, %v904
    %v1061 = vmul.f32 %v1036, %v905
    %v1062 = vmul.f32 %v1041, %v906
    %v1063 = vmul.f32 %v1046, %v907
    %v1064 = vmul.f32 %v1051, %v908
    %v1065 = vmul.f32 %v1056, %v909
    %1066 = vrot.lane.b32.xlu0 %v651, 96
    %v1067 = vpop.permute.xlu0 %1066
    %v1069 = vadd.f32 %v1059, %v1067
    %v1070 = vadd.f32 %v1060, %v1067
    %v1071 = vadd.f32 %v1061, %v1067
    %v1072 = vadd.f32 %v1062, %v1067
    %v1073 = vadd.f32 %v1063, %v1067
    %v1074 = vadd.f32 %v1064, %v1067
    %v1075 = vadd.f32 %v1065, %v1067
    %v1076 = vmax.f32 %v1069, 0.0
    %v1077 = vmax.f32 %v1070, 0.0
    %v1078 = vmax.f32 %v1071, 0.0
    %v1079 = vmax.f32 %v1072, 0.0
    %v1080 = vmax.f32 %v1073, 0.0
    %v1081 = vmax.f32 %v1074, 0.0
    %v1082 = vmax.f32 %v1075, 0.0
    %v1083 = vld [vmem:[%s8 + $0x20] sm:$0xff]
    %v1084 = vld [vmem:[%s8 + $0x28] sm:$0xff]
    %v1085 = vld [vmem:[%s8 + $0x30] sm:$0xff]
    %v1086 = vld [vmem:[%s8 + $0x38] sm:$0xff]
    %v1088 = vsel %vm313, %v1076, 0
    %v1091 = vsel %vm313, %v1077, 0
    %v1094 = vsel %vm313, %v1078, 0
    %v1097 = vsel %vm313, %v1079, 0
    %v1100 = vsel %vm313, %v1080, 0
    %v1103 = vsel %vm313, %v1081, 0
    %v1106 = vsel %vm313, %v1082, 0
    %1108 = vmatprep.subr.mxu0 0.0
    %1109 = vmatpush1.msra.mxu0 %v1083
    %1110 = vmatprep.subr.mxu0 0.0
    %1111 = vmatpush1.msra.mxu0 %v1084
    %1112 = vmatprep.subr.mxu0 0.0
    %1113 = vmatpush1.msra.mxu0 %v1085
    %1114 = vmatprep.subr.mxu0 0.0
    %1115 = vmatpush1.msra.mxu0 %v1086
    %1116 = vmatprep.subr.mxu0 0.0
    %1117 = vmatpush1.msra.mxu0 0.0
    %1118 = vmatprep.subr.mxu0 0.0
    %1119 = vmatpush1.msra.mxu0 0.0
    %1120 = vmatprep.subr.mxu0 0.0
    %1121 = vmatpush1.msra.mxu0 0.0
    %1122 = vmatprep.subr.mxu0 0.0
    %1123 = vmatpush1.msra.mxu0 0.0
    %1124 = vmatprep.subr.mxu0 0.0
    %1125 = vmatpush1.msra.mxu0 0.0
    %1126 = vmatprep.subr.mxu0 0.0
    %1127 = vmatpush1.msra.mxu0 0.0
    %1128 = vmatprep.subr.mxu0 0.0
    %1129 = vmatpush1.msra.mxu0 0.0
    %1130 = vmatprep.subr.mxu0 0.0
    %1131 = vmatpush1.msra.mxu0 0.0
    %1132 = vmatprep.subr.mxu0 0.0
    %1133 = vmatpush1.msra.mxu0 0.0
    %1134 = vmatprep.subr.mxu0 0.0
    %1135 = vmatpush1.msra.mxu0 0.0
    %1136 = vmatprep.subr.mxu0 0.0
    %1137 = vmatpush1.msra.mxu0 0.0
    %1138 = vmatprep.subr.mxu0 0.0
    %1139 = vmatpush1.msra.mxu0 0.0
    %1140 = vmatprep.subr.mxu0 0.0
    %1141 = vmatpush1.msra.mxu0 0.0
    %1142 = vmatprep.subr.mxu0 0.0
    %1143 = vmatpush1.msra.mxu0 0.0
    %1144 = vmatprep.subr.mxu0 0.0
    %1145 = vmatpush1.msra.mxu0 0.0
    %1146 = vmatprep.subr.mxu0 0.0
    %1147 = vmatpush1.msra.mxu0 0.0
    %1148 = vmatprep.subr.mxu0 0.0
    %1149 = vmatpush1.msra.mxu0 0.0
    %1150 = vmatprep.subr.mxu0 0.0
    %1151 = vmatpush1.msra.mxu0 0.0
    %1152 = vmatprep.subr.mxu0 0.0
    %1153 = vmatpush1.msra.mxu0 0.0
    %1154 = vmatprep.subr.mxu0 0.0
    %1155 = vmatpush1.msra.mxu0 0.0
    %1156 = vmatprep.subr.mxu0 0.0
    %1157 = vmatpush1.msra.mxu0 0.0
    %1158 = vmatprep.subr.mxu0 0.0
    %1159 = vmatpush1.msra.mxu0 0.0
    %1160 = vmatprep.subr.mxu0 0.0
    %1161 = vmatpush1.msra.mxu0 0.0
    %1162 = vmatprep.subr.mxu0 0.0
    %1163 = vmatpush1.msra.mxu0 0.0
    %1164 = vmatprep.subr.mxu0 0.0
    %1165 = vmatpush1.msra.mxu0 0.0
    %1166 = vmatprep.subr.mxu0 0.0
    %1167 = vmatpush1.msra.mxu0 0.0
    %1168 = vmatprep.subr.mxu0 0.0
    %1169 = vmatpush1.msra.mxu0 0.0
    %1170 = vmatprep.subr.mxu0 0.0
    %1171 = vmatpush1.msra.mxu0 0.0
    %1172 = vmatprep.mubr.f32.mxu0 0.0
    %1173 = vmatmul.mubr.f32.gmra.mrb[0].mxu0 %v1088
    %v1174 = vpop.f32.mrb[0].mxu0
    %v1175 = vadd.f32 0.0, %v1174
    %v1176 = vpop.f32.mrb[0].mxu0
    %1177 = vmatprep.mubr.f32.mxu0 0.0
    %1178 = vmatmul.mubr.f32.gmra.mrb[0].mxu0 %v1091
    %v1179 = vpop.f32.mrb[0].mxu0
    %v1180 = vadd.f32 0.0, %v1179
    %v1181 = vpop.f32.mrb[0].mxu0
    %1182 = vmatprep.mubr.f32.mxu0 0.0
    %1183 = vmatmul.mubr.f32.gmra.mrb[0].mxu0 %v1094
    %v1184 = vpop.f32.mrb[0].mxu0
    %v1185 = vadd.f32 0.0, %v1184
    %v1186 = vpop.f32.mrb[0].mxu0
    %1187 = vmatprep.mubr.f32.mxu0 0.0
    %1188 = vmatmul.mubr.f32.gmra.mrb[0].mxu0 %v1097
    %v1189 = vpop.f32.mrb[0].mxu0
    %v1190 = vadd.f32 0.0, %v1189
    %v1191 = vpop.f32.mrb[0].mxu0
    %1192 = vmatprep.mubr.f32.mxu0 0.0
    %1193 = vmatmul.mubr.f32.gmra.mrb[0].mxu0 %v1100
    %v1194 = vpop.f32.mrb[0].mxu0
    %v1195 = vadd.f32 0.0, %v1194
    %v1196 = vpop.f32.mrb[0].mxu0
    %1197 = vmatprep.mubr.f32.mxu0 0.0
    %1198 = vmatmul.mubr.f32.gmra.mrb[0].mxu0 %v1103
    %v1199 = vpop.f32.mrb[0].mxu0
    %v1200 = vadd.f32 0.0, %v1199
    %v1201 = vpop.f32.mrb[0].mxu0
    %1202 = vmatprep.mubr.f32.mxu0 0.0
    %1203 = vmatmul.mubr.f32.gmra.mrb[0].mxu0 %v1106
    %v1204 = vpop.f32.mrb[0].mxu0
    %v1205 = vadd.f32 0.0, %v1204
    %v1206 = vpop.f32.mrb[0].mxu0
    %1207 = vdwg.mxu0
    %v1209 = vsel %vm313, %v660, 0
    %v1212 = vsel %vm313, %v661, 0
    %v1215 = vsel %vm313, %v662, 0
    %v1218 = vsel %vm313, %v663, 0
    %v1221 = vsel %vm313, %v664, 0
    %v1224 = vsel %vm313, %v665, 0
    %v1227 = vsel %vm313, %v666, 0
    %1229 = vmatprep.subr.mxu0 0.0
    %1230 = vmatpush1.msra.mxu0 %v667
    %1231 = vmatprep.subr.mxu0 0.0
    %1232 = vmatpush1.msra.mxu0 %v668
    %1233 = vmatprep.subr.mxu0 0.0
    %1234 = vmatpush1.msra.mxu0 %v669
    %1235 = vmatprep.subr.mxu0 0.0
    %1236 = vmatpush1.msra.mxu0 %v670
    %1237 = vmatprep.subr.mxu0 0.0
    %1238 = vmatpush1.msra.mxu0 0.0
    %1239 = vmatprep.subr.mxu0 0.0
    %1240 = vmatpush1.msra.mxu0 0.0
    %1241 = vmatprep.subr.mxu0 0.0
    %1242 = vmatpush1.msra.mxu0 0.0
    %1243 = vmatprep.subr.mxu0 0.0
    %1244 = vmatpush1.msra.mxu0 0.0
    %1245 = vmatprep.subr.mxu0 0.0
    %1246 = vmatpush1.msra.mxu0 0.0
    %1247 = vmatprep.subr.mxu0 0.0
    %1248 = vmatpush1.msra.mxu0 0.0
    %1249 = vmatprep.subr.mxu0 0.0
    %1250 = vmatpush1.msra.mxu0 0.0
    %1251 = vmatprep.subr.mxu0 0.0
    %1252 = vmatpush1.msra.mxu0 0.0
    %1253 = vmatprep.subr.mxu0 0.0
    %1254 = vmatpush1.msra.mxu0 0.0
    %1255 = vmatprep.subr.mxu0 0.0
    %1256 = vmatpush1.msra.mxu0 0.0
    %1257 = vmatprep.subr.mxu0 0.0
    %1258 = vmatpush1.msra.mxu0 0.0
    %1259 = vmatprep.subr.mxu0 0.0
    %1260 = vmatpush1.msra.mxu0 0.0
    %1261 = vmatprep.subr.mxu0 0.0
    %1262 = vmatpush1.msra.mxu0 0.0
    %1263 = vmatprep.subr.mxu0 0.0
    %1264 = vmatpush1.msra.mxu0 0.0
    %1265 = vmatprep.subr.mxu0 0.0
    %1266 = vmatpush1.msra.mxu0 0.0
    %1267 = vmatprep.subr.mxu0 0.0
    %1268 = vmatpush1.msra.mxu0 0.0
    %1269 = vmatprep.subr.mxu0 0.0
    %1270 = vmatpush1.msra.mxu0 0.0
    %1271 = vmatprep.subr.mxu0 0.0
    %1272 = vmatpush1.msra.mxu0 0.0
    %1273 = vmatprep.subr.mxu0 0.0
    %1274 = vmatpush1.msra.mxu0 0.0
    %1275 = vmatprep.subr.mxu0 0.0
    %1276 = vmatpush1.msra.mxu0 0.0
    %1277 = vmatprep.subr.mxu0 0.0
    %1278 = vmatpush1.msra.mxu0 0.0
    %1279 = vmatprep.subr.mxu0 0.0
    %1280 = vmatpush1.msra.mxu0 0.0
    %1281 = vmatprep.subr.mxu0 0.0
    %1282 = vmatpush1.msra.mxu0 0.0
    %1283 = vmatprep.subr.mxu0 0.0
    %1284 = vmatpush1.msra.mxu0 0.0
    %1285 = vmatprep.subr.mxu0 0.0
    %1286 = vmatpush1.msra.mxu0 0.0
    %1287 = vmatprep.subr.mxu0 0.0
    %1288 = vmatpush1.msra.mxu0 0.0
    %1289 = vmatprep.subr.mxu0 0.0
    %1290 = vmatpush1.msra.mxu0 0.0
    %1291 = vmatprep.subr.mxu0 0.0
    %1292 = vmatpush1.msra.mxu0 0.0
    %1293 = vmatprep.mubr.f32.mxu0 0.0
    %1294 = vmatmul.mubr.f32.gmra.mrb[0].mxu0 %v1209
    %v1295 = vpop.f32.mrb[0].mxu0
    %v1296 = vadd.f32 %v1175, %v1295
    %v1297 = vpop.f32.mrb[0].mxu0
    %1298 = vmatprep.mubr.f32.mxu0 0.0
    %1299 = vmatmul.mubr.f32.gmra.mrb[0].mxu0 %v1212
    %v1300 = vpop.f32.mrb[0].mxu0
    %v1301 = vadd.f32 %v1180, %v1300
    %v1302 = vpop.f32.mrb[0].mxu0
    %1303 = vmatprep.mubr.f32.mxu0 0.0
    %1304 = vmatmul.mubr.f32.gmra.mrb[0].mxu0 %v1215
    %v1305 = vpop.f32.mrb[0].mxu0
    %v1306 = vadd.f32 %v1185, %v1305
    %v1307 = vpop.f32.mrb[0].mxu0
    %1308 = vmatprep.mubr.f32.mxu0 0.0
    %1309 = vmatmul.mubr.f32.gmra.mrb[0].mxu0 %v1218
    %v1310 = vpop.f32.mrb[0].mxu0
    %v1311 = vadd.f32 %v1190, %v1310
    %v1312 = vpop.f32.mrb[0].mxu0
    %1313 = vmatprep.mubr.f32.mxu0 0.0
    %1314 = vmatmul.mubr.f32.gmra.mrb[0].mxu0 %v1221
    %v1315 = vpop.f32.mrb[0].mxu0
    %v1316 = vadd.f32 %v1195, %v1315
    %v1317 = vpop.f32.mrb[0].mxu0
    %1318 = vmatprep.mubr.f32.mxu0 0.0
    %1319 = vmatmul.mubr.f32.gmra.mrb[0].mxu0 %v1224
    %v1320 = vpop.f32.mrb[0].mxu0
    %v1321 = vadd.f32 %v1200, %v1320
    %v1322 = vpop.f32.mrb[0].mxu0
    %1323 = vmatprep.mubr.f32.mxu0 0.0
    %1324 = vmatmul.mubr.f32.gmra.mrb[0].mxu0 %v1227
    %v1325 = vpop.f32.mrb[0].mxu0
    %v1326 = vadd.f32 %v1205, %v1325
    %v1327 = vpop.f32.mrb[0].mxu0
    %1328 = vdwg.mxu0
    %v1329 = vld [vmem:[%s9] sm:$0x1]
    %v1331 = vlaneseq
    %v1332 = vshrl.u32 %v1331, 7
    %v1333 = vsub.s32 0, %v1332
    %v1334 = vrot.slane %v1329, %v1333
    %v1336 = vmul.f32 %v1296, %v1334
    %v1337 = vmul.f32 %v1301, %v1334
    %v1338 = vmul.f32 %v1306, %v1334
    %v1339 = vmul.f32 %v1311, %v1334
    %v1340 = vmul.f32 %v1316, %v1334
    %v1341 = vmul.f32 %v1321, %v1334
    %v1342 = vmul.f32 %v1326, %v1334
    %v1343 = vsel %vm313, %v1336, 0.0
    %1344 = vadd.xlane.f32.xlu0 %v1343
    %v1345 = vpop.xlane.xlu0 %1344
    %v1346 = vsel %vm313, %v1337, 0.0
    %1347 = vadd.xlane.f32.xlu0 %v1346
    %v1348 = vpop.xlane.xlu0 %1347
    %v1349 = vsel %vm313, %v1338, 0.0
    %1350 = vadd.xlane.f32.xlu0 %v1349
    %v1351 = vpop.xlane.xlu0 %1350
    %v1352 = vsel %vm313, %v1339, 0.0
    %1353 = vadd.xlane.f32.xlu0 %v1352
    %v1354 = vpop.xlane.xlu0 %1353
    %v1355 = vsel %vm313, %v1340, 0.0
    %1356 = vadd.xlane.f32.xlu0 %v1355
    %v1357 = vpop.xlane.xlu0 %1356
    %v1358 = vsel %vm313, %v1341, 0.0
    %1359 = vadd.xlane.f32.xlu0 %v1358
    %v1360 = vpop.xlane.xlu0 %1359
    %v1361 = vsel %vm332, %v1342, 0.0
    %1362 = vadd.xlane.f32.xlu0 %v1361
    %v1363 = vpop.xlane.xlu0 %1362
    %v1364 = vld [vmem:[%s10] sm:$0x1]
    %v1366 = vlaneseq
    %v1367 = vshrl.u32 %v1366, 7
    %v1368 = vsub.s32 0, %v1367
    %v1369 = vrot.slane %v1364, %v1368
    %v1371 = vmul.f32 %v1296, %v1369
    %v1372 = vmul.f32 %v1301, %v1369
    %v1373 = vmul.f32 %v1306, %v1369
    %v1374 = vmul.f32 %v1311, %v1369
    %v1375 = vmul.f32 %v1316, %v1369
    %v1376 = vmul.f32 %v1321, %v1369
    %v1377 = vmul.f32 %v1326, %v1369
    %v1378 = vsel %vm313, %v1371, 0.0
    %1379 = vadd.xlane.f32.xlu0 %v1378
    %v1380 = vpop.xlane.xlu0 %1379
    %v1381 = vsel %vm313, %v1372, 0.0
    %1382 = vadd.xlane.f32.xlu0 %v1381
    %v1383 = vpop.xlane.xlu0 %1382
    %v1384 = vsel %vm313, %v1373, 0.0
    %1385 = vadd.xlane.f32.xlu0 %v1384
    %v1386 = vpop.xlane.xlu0 %1385
    %v1387 = vsel %vm313, %v1374, 0.0
    %1388 = vadd.xlane.f32.xlu0 %v1387
    %v1389 = vpop.xlane.xlu0 %1388
    %v1390 = vsel %vm313, %v1375, 0.0
    %1391 = vadd.xlane.f32.xlu0 %v1390
    %v1392 = vpop.xlane.xlu0 %1391
    %v1393 = vsel %vm313, %v1376, 0.0
    %1394 = vadd.xlane.f32.xlu0 %v1393
    %v1395 = vpop.xlane.xlu0 %1394
    %v1396 = vsel %vm332, %v1377, 0.0
    %1397 = vadd.xlane.f32.xlu0 %v1396
    %v1398 = vpop.xlane.xlu0 %1397
    %1399 = vxpose.xlu0.b32.start [1/16] %v1345, 128
    %1400 = vxpose.xlu0.b32.cont [2/16] %v1348, 128
    %1401 = vxpose.xlu0.b32.cont [3/16] %v1351, 128
    %1402 = vxpose.xlu0.b32.cont [4/16] %v1354, 128
    %1403 = vxpose.xlu0.b32.cont [5/16] %v1357, 128
    %1404 = vxpose.xlu0.b32.cont [6/16] %v1360, 128
    %1405 = vxpose.xlu0.b32.cont [7/16] %v1363, 128
    %1406 = vxpose.xlu0.b32.cont [8/16] 0.0, 128
    %1407 = vxpose.xlu0.b32.cont [9/16] 0.0, 128
    %1408 = vxpose.xlu0.b32.cont [10/16] 0.0, 128
    %1409 = vxpose.xlu0.b32.cont [11/16] 0.0, 128
    %1410 = vxpose.xlu0.b32.cont [12/16] 0.0, 128
    %1411 = vxpose.xlu0.b32.cont [13/16] 0.0, 128
    %1412 = vxpose.xlu0.b32.cont [14/16] 0.0, 128
    %1413 = vxpose.xlu0.b32.cont [15/16] 0.0, 128
    %1414 = vxpose.xlu0.b32.end [16/16] 0.0, 128
    %v1415 = vpop.trf.xlu0
    %v1416 = vpop.trf.xlu0
    %v1417 = vpop.trf.xlu0
    %v1418 = vpop.trf.xlu0
    %v1419 = vpop.trf.xlu0
    %v1420 = vpop.trf.xlu0
    %v1421 = vpop.trf.xlu0
    %v1422 = vpop.trf.xlu0
    %v1423 = vpop.trf.xlu0
    %v1424 = vpop.trf.xlu0
    %v1425 = vpop.trf.xlu0
    %v1426 = vpop.trf.xlu0
    %v1427 = vpop.trf.xlu0
    %v1428 = vpop.trf.xlu0
    %v1429 = vpop.trf.xlu0
    %v1430 = vpop.trf.xlu0
    %v1431 = vlaneseq
    %v1432 = vshrl.u32 %v1431, 7
    %v1433 = vsub.s32 0, %v1432
    %v1434 = vrot.slane %v1415, %v1433
    %v1435 = vadd.f32 %v1380, %v1434
    %v1436 = vadd.f32 %v1383, %v1434
    %v1437 = vadd.f32 %v1386, %v1434
    %v1438 = vadd.f32 %v1389, %v1434
    %v1439 = vadd.f32 %v1392, %v1434
    %v1440 = vadd.f32 %v1395, %v1434
    %v1441 = vadd.f32 %v1398, %v1434
    %vm1442 = vcmp.gt.f32.partialorder %v1435, 0.0
    %vm1443 = vcmp.gt.f32.partialorder %v1436, 0.0
    %vm1444 = vcmp.gt.f32.partialorder %v1437, 0.0
    %vm1445 = vcmp.gt.f32.partialorder %v1438, 0.0
    %vm1446 = vcmp.gt.f32.partialorder %v1439, 0.0
    %vm1447 = vcmp.gt.f32.partialorder %v1440, 0.0
    %vm1448 = vcmp.gt.f32.partialorder %v1441, 0.0
    %v1449 = vmul.f32 %v1435, 0.2
    %v1450 = vmul.f32 %v1436, 0.2
    %v1451 = vmul.f32 %v1437, 0.2
    %v1452 = vmul.f32 %v1438, 0.2
    %v1453 = vmul.f32 %v1439, 0.2
    %v1454 = vmul.f32 %v1440, 0.2
    %v1455 = vmul.f32 %v1441, 0.2
    %v1456 = vsel %vm1442, %v1435, %v1449
    %v1457 = vsel %vm1443, %v1436, %v1450
    %v1458 = vsel %vm1444, %v1437, %v1451
    %v1459 = vsel %vm1445, %v1438, %v1452
    %v1460 = vsel %vm1446, %v1439, %v1453
    %v1461 = vsel %vm1447, %v1440, %v1454
    %v1462 = vsel %vm1448, %v1441, %v1455
    %v1463 = vadd.f32 %v1456, %v165
    %v1464 = vadd.f32 %v1457, %v166
    %v1465 = vadd.f32 %v1458, %v167
    %v1466 = vadd.f32 %v1459, %v168
    %v1467 = vadd.f32 %v1460, %v169
    %v1468 = vadd.f32 %v1461, %v170
    %v1469 = vadd.f32 %v1462, %v171
    %v1470 = vsel %vm442, %v1463, -inf
    %1471 = vmax.xlane.f32.xlu0 %v1470
    %v1472 = vpop.xlane.xlu0 %1471
    %v1473 = vsel %vm442, %v1464, -inf
    %1474 = vmax.xlane.f32.xlu0 %v1473
    %v1475 = vpop.xlane.xlu0 %1474
    %v1476 = vsel %vm442, %v1465, -inf
    %1477 = vmax.xlane.f32.xlu0 %v1476
    %v1478 = vpop.xlane.xlu0 %1477
    %v1479 = vsel %vm442, %v1466, -inf
    %1480 = vmax.xlane.f32.xlu0 %v1479
    %v1481 = vpop.xlane.xlu0 %1480
    %v1482 = vsel %vm442, %v1467, -inf
    %1483 = vmax.xlane.f32.xlu0 %v1482
    %v1484 = vpop.xlane.xlu0 %1483
    %v1485 = vsel %vm442, %v1468, -inf
    %1486 = vmax.xlane.f32.xlu0 %v1485
    %v1487 = vpop.xlane.xlu0 %1486
    %v1488 = vsel %vm461, %v1469, -inf
    %1489 = vmax.xlane.f32.xlu0 %v1488
    %v1490 = vpop.xlane.xlu0 %1489
    %v1491 = vsub.f32 %v1463, %v1472
    %v1492 = vsub.f32 %v1464, %v1475
    %v1493 = vsub.f32 %v1465, %v1478
    %v1494 = vsub.f32 %v1466, %v1481
    %v1495 = vsub.f32 %v1467, %v1484
    %v1496 = vsub.f32 %v1468, %v1487
    %v1497 = vsub.f32 %v1469, %v1490
    %v1498 = vmul.f32 %v1491, 1.442695
    %v1499 = vpow.pop %v1498
    %v1500 = vmul.f32 %v1492, 1.442695
    %v1501 = vpow.pop %v1500
    %v1502 = vmul.f32 %v1493, 1.442695
    %v1503 = vpow.pop %v1502
    %v1504 = vmul.f32 %v1494, 1.442695
    %v1505 = vpow.pop %v1504
    %v1506 = vmul.f32 %v1495, 1.442695
    %v1507 = vpow.pop %v1506
    %v1508 = vmul.f32 %v1496, 1.442695
    %v1509 = vpow.pop %v1508
    %v1510 = vmul.f32 %v1497, 1.442695
    %v1511 = vpow.pop %v1510
    %v1512 = vsel %vm442, %v1499, 0.0
    %1513 = vadd.xlane.f32.xlu0 %v1512
    %v1514 = vpop.xlane.xlu0 %1513
    %v1515 = vsel %vm442, %v1501, 0.0
    %1516 = vadd.xlane.f32.xlu0 %v1515
    %v1517 = vpop.xlane.xlu0 %1516
    %v1518 = vsel %vm442, %v1503, 0.0
    %1519 = vadd.xlane.f32.xlu0 %v1518
    %v1520 = vpop.xlane.xlu0 %1519
    %v1521 = vsel %vm442, %v1505, 0.0
    %1522 = vadd.xlane.f32.xlu0 %v1521
    %v1523 = vpop.xlane.xlu0 %1522
    %v1524 = vsel %vm442, %v1507, 0.0
    %1525 = vadd.xlane.f32.xlu0 %v1524
    %v1526 = vpop.xlane.xlu0 %1525
    %v1527 = vsel %vm442, %v1509, 0.0
    %1528 = vadd.xlane.f32.xlu0 %v1527
    %v1529 = vpop.xlane.xlu0 %1528
    %v1530 = vsel %vm461, %v1511, 0.0
    %1531 = vadd.xlane.f32.xlu0 %v1530
    %v1532 = vpop.xlane.xlu0 %1531
    %v1533 = vrcp.pop %v1514
    %v1534 = vrcp.pop %v1517
    %v1535 = vrcp.pop %v1520
    %v1536 = vrcp.pop %v1523
    %v1537 = vrcp.pop %v1526
    %v1538 = vrcp.pop %v1529
    %v1539 = vrcp.pop %v1532
    %v1541 = vsel %vm442, %v1499, 0
    %v1544 = vsel %vm442, %v1501, 0
    %v1547 = vsel %vm442, %v1503, 0
    %v1550 = vsel %vm442, %v1505, 0
    %v1553 = vsel %vm442, %v1507, 0
    %v1556 = vsel %vm442, %v1509, 0
    %v1559 = vsel %vm442, %v1511, 0
    %v1562 = vsel %vm535, %v1326, 0
    %1564 = vmatprep.subr.mxu0 0.0
    %1565 = vmatpush1.msra.mxu0 %v1296
    %1566 = vmatprep.subr.mxu0 0.0
    %1567 = vmatpush1.msra.mxu0 %v1301
    %1568 = vmatprep.subr.mxu0 0.0
    %1569 = vmatpush1.msra.mxu0 %v1306
    %1570 = vmatprep.subr.mxu0 0.0
    %1571 = vmatpush1.msra.mxu0 %v1311
    %1572 = vmatprep.subr.mxu0 0.0
    %1573 = vmatpush1.msra.mxu0 %v1316
    %1574 = vmatprep.subr.mxu0 0.0
    %1575 = vmatpush1.msra.mxu0 %v1321
    %1576 = vmatprep.subr.mxu0 0.0
    %1577 = vmatpush1.msra.mxu0 %v1562
    %1578 = vmatprep.subr.mxu0 0.0
    %1579 = vmatpush1.msra.mxu0 0.0
    %1580 = vmatprep.subr.mxu0 0.0
    %1581 = vmatpush1.msra.mxu0 0.0
    %1582 = vmatprep.subr.mxu0 0.0
    %1583 = vmatpush1.msra.mxu0 0.0
    %1584 = vmatprep.subr.mxu0 0.0
    %1585 = vmatpush1.msra.mxu0 0.0
    %1586 = vmatprep.subr.mxu0 0.0
    %1587 = vmatpush1.msra.mxu0 0.0
    %1588 = vmatprep.subr.mxu0 0.0
    %1589 = vmatpush1.msra.mxu0 0.0
    %1590 = vmatprep.subr.mxu0 0.0
    %1591 = vmatpush1.msra.mxu0 0.0
    %1592 = vmatprep.subr.mxu0 0.0
    %1593 = vmatpush1.msra.mxu0 0.0
    %1594 = vmatprep.subr.mxu0 0.0
    %1595 = vmatpush1.msra.mxu0 0.0
    %1596 = vmatprep.subr.mxu0 0.0
    %1597 = vmatpush1.msra.mxu0 0.0
    %1598 = vmatprep.subr.mxu0 0.0
    %1599 = vmatpush1.msra.mxu0 0.0
    %1600 = vmatprep.subr.mxu0 0.0
    %1601 = vmatpush1.msra.mxu0 0.0
    %1602 = vmatprep.subr.mxu0 0.0
    %1603 = vmatpush1.msra.mxu0 0.0
    %1604 = vmatprep.subr.mxu0 0.0
    %1605 = vmatpush1.msra.mxu0 0.0
    %1606 = vmatprep.subr.mxu0 0.0
    %1607 = vmatpush1.msra.mxu0 0.0
    %1608 = vmatprep.subr.mxu0 0.0
    %1609 = vmatpush1.msra.mxu0 0.0
    %1610 = vmatprep.subr.mxu0 0.0
    %1611 = vmatpush1.msra.mxu0 0.0
    %1612 = vmatprep.subr.mxu0 0.0
    %1613 = vmatpush1.msra.mxu0 0.0
    %1614 = vmatprep.subr.mxu0 0.0
    %1615 = vmatpush1.msra.mxu0 0.0
    %1616 = vmatprep.subr.mxu0 0.0
    %1617 = vmatpush1.msra.mxu0 0.0
    %1618 = vmatprep.subr.mxu0 0.0
    %1619 = vmatpush1.msra.mxu0 0.0
    %1620 = vmatprep.subr.mxu0 0.0
    %1621 = vmatpush1.msra.mxu0 0.0
    %1622 = vmatprep.subr.mxu0 0.0
    %1623 = vmatpush1.msra.mxu0 0.0
    %1624 = vmatprep.subr.mxu0 0.0
    %1625 = vmatpush1.msra.mxu0 0.0
    %1626 = vmatprep.subr.mxu0 0.0
    %1627 = vmatpush1.msra.mxu0 0.0
    %1628 = vmatprep.mubr.f32.mxu0 0.0
    %1629 = vmatmul.mubr.f32.gmra.mrb[0].mxu0 %v1541
    %v1630 = vpop.f32.mrb[0].mxu0
    %v1631 = vadd.f32 0.0, %v1630
    %v1632 = vpop.f32.mrb[0].mxu0
    %1633 = vmatprep.mubr.f32.mxu0 0.0
    %1634 = vmatmul.mubr.f32.gmra.mrb[0].mxu0 %v1544
    %v1635 = vpop.f32.mrb[0].mxu0
    %v1636 = vadd.f32 0.0, %v1635
    %v1637 = vpop.f32.mrb[0].mxu0
    %1638 = vmatprep.mubr.f32.mxu0 0.0
    %1639 = vmatmul.mubr.f32.gmra.mrb[0].mxu0 %v1547
    %v1640 = vpop.f32.mrb[0].mxu0
    %v1641 = vadd.f32 0.0, %v1640
    %v1642 = vpop.f32.mrb[0].mxu0
    %1643 = vmatprep.mubr.f32.mxu0 0.0
    %1644 = vmatmul.mubr.f32.gmra.mrb[0].mxu0 %v1550
    %v1645 = vpop.f32.mrb[0].mxu0
    %v1646 = vadd.f32 0.0, %v1645
    %v1647 = vpop.f32.mrb[0].mxu0
    %1648 = vmatprep.mubr.f32.mxu0 0.0
    %1649 = vmatmul.mubr.f32.gmra.mrb[0].mxu0 %v1553
    %v1650 = vpop.f32.mrb[0].mxu0
    %v1651 = vadd.f32 0.0, %v1650
    %v1652 = vpop.f32.mrb[0].mxu0
    %1653 = vmatprep.mubr.f32.mxu0 0.0
    %1654 = vmatmul.mubr.f32.gmra.mrb[0].mxu0 %v1556
    %v1655 = vpop.f32.mrb[0].mxu0
    %v1656 = vadd.f32 0.0, %v1655
    %v1657 = vpop.f32.mrb[0].mxu0
    %1658 = vmatprep.mubr.f32.mxu0 0.0
    %1659 = vmatmul.mubr.f32.gmra.mrb[0].mxu0 %v1559
    %v1660 = vpop.f32.mrb[0].mxu0
    %v1661 = vadd.f32 0.0, %v1660
    %v1662 = vpop.f32.mrb[0].mxu0
    %1663 = vdwg.mxu0
    %v1664 = vmul.f32 %v1631, %v1533
    %v1665 = vmul.f32 %v1636, %v1534
    %v1666 = vmul.f32 %v1641, %v1535
    %v1667 = vmul.f32 %v1646, %v1536
    %v1668 = vmul.f32 %v1651, %v1537
    %v1669 = vmul.f32 %v1656, %v1538
    %v1670 = vmul.f32 %v1661, %v1539
    %v1671 = vld [vmem:[#allocation12] sm:$0x1]
    %v1673 = vlaneseq
    %v1674 = vshrl.u32 %v1673, 7
    %v1675 = vsub.s32 0, %v1674
    %v1676 = vrot.slane %v1671, %v1675
    %v1678 = vadd.f32 %v1664, %v1676
    %v1679 = vadd.f32 %v1665, %v1676
    %v1680 = vadd.f32 %v1666, %v1676
    %v1681 = vadd.f32 %v1667, %v1676
    %v1682 = vadd.f32 %v1668, %v1676
    %v1683 = vadd.f32 %v1669, %v1676
    %v1684 = vadd.f32 %v1670, %v1676
    %v1685 = vmax.f32 %v1678, 0.0
    %v1686 = vmax.f32 %v1679, 0.0
    %v1687 = vmax.f32 %v1680, 0.0
    %v1688 = vmax.f32 %v1681, 0.0
    %v1689 = vmax.f32 %v1682, 0.0
    %v1690 = vmax.f32 %v1683, 0.0
    %v1691 = vmax.f32 %v1684, 0.0
    %v1692 = vld [vmem:[%s12] sm:$0xff]
    %v1693 = vld [vmem:[%s12 + $0x8] sm:$0xff]
    %v1694 = vld [vmem:[%s12 + $0x10] sm:$0xff]
    %v1695 = vld [vmem:[%s12 + $0x18] sm:$0xff]
    %v1697 = vsel %vm313, %v1692, 0
    %v1700 = vsel %vm313, %v1693, 0
    %v1703 = vsel %vm313, %v1694, 0
    %v1706 = vsel %vm313, %v1695, 0
    %v1709 = vsel %vm313, %v1685, 0
    %v1712 = vsel %vm313, %v1686, 0
    %v1715 = vsel %vm313, %v1687, 0
    %v1718 = vsel %vm313, %v1688, 0
    %v1721 = vsel %vm313, %v1689, 0
    %v1724 = vsel %vm313, %v1690, 0
    %v1727 = vsel %vm313, %v1691, 0
    %1729 = vmatprep.subr.mxu0 0.0
    %1730 = vmatpush1.xpose.msra.mxu0 %v1709
    %1731 = vmatprep.subr.mxu0 0.0
    %1732 = vmatpush1.xpose.msra.mxu0 %v1712
    %1733 = vmatprep.subr.mxu0 0.0
    %1734 = vmatpush1.xpose.msra.mxu0 %v1715
    %1735 = vmatprep.subr.mxu0 0.0
    %1736 = vmatpush1.xpose.msra.mxu0 %v1718
    %1737 = vmatprep.subr.mxu0 0.0
    %1738 = vmatpush1.xpose.msra.mxu0 %v1721
    %1739 = vmatprep.subr.mxu0 0.0
    %1740 = vmatpush1.xpose.msra.mxu0 %v1724
    %1741 = vmatprep.subr.mxu0 0.0
    %1742 = vmatpush1.xpose.msra.mxu0 %v1727
    %1743 = vmatprep.subr.mxu0 0.0
    %1744 = vmatpush1.xpose.msra.mxu0 0.0
    %1745 = vmatprep.subr.mxu0 0.0
    %1746 = vmatpush1.xpose.msra.mxu0 0.0
    %1747 = vmatprep.subr.mxu0 0.0
    %1748 = vmatpush1.xpose.msra.mxu0 0.0
    %1749 = vmatprep.subr.mxu0 0.0
    %1750 = vmatpush1.xpose.msra.mxu0 0.0
    %1751 = vmatprep.subr.mxu0 0.0
    %1752 = vmatpush1.xpose.msra.mxu0 0.0
    %1753 = vmatprep.subr.mxu0 0.0
    %1754 = vmatpush1.xpose.msra.mxu0 0.0
    %1755 = vmatprep.subr.mxu0 0.0
    %1756 = vmatpush1.xpose.msra.mxu0 0.0
    %1757 = vmatprep.subr.mxu0 0.0
    %1758 = vmatpush1.xpose.msra.mxu0 0.0
    %1759 = vmatprep.subr.mxu0 0.0
    %1760 = vmatpush1.xpose.msra.mxu0 0.0
    %1761 = vmatprep.subr.mxu0 0.0
    %1762 = vmatpush1.xpose.msra.mxu0 0.0
    %1763 = vmatprep.subr.mxu0 0.0
    %1764 = vmatpush1.xpose.msra.mxu0 0.0
    %1765 = vmatprep.subr.mxu0 0.0
    %1766 = vmatpush1.xpose.msra.mxu0 0.0
    %1767 = vmatprep.subr.mxu0 0.0
    %1768 = vmatpush1.xpose.msra.mxu0 0.0
    %1769 = vmatprep.subr.mxu0 0.0
    %1770 = vmatpush1.xpose.msra.mxu0 0.0
    %1771 = vmatprep.subr.mxu0 0.0
    %1772 = vmatpush1.xpose.msra.mxu0 0.0
    %1773 = vmatprep.subr.mxu0 0.0
    %1774 = vmatpush1.xpose.msra.mxu0 0.0
    %1775 = vmatprep.subr.mxu0 0.0
    %1776 = vmatpush1.xpose.msra.mxu0 0.0
    %1777 = vmatprep.subr.mxu0 0.0
    %1778 = vmatpush1.xpose.msra.mxu0 0.0
    %1779 = vmatprep.subr.mxu0 0.0
    %1780 = vmatpush1.xpose.msra.mxu0 0.0
    %1781 = vmatprep.subr.mxu0 0.0
    %1782 = vmatpush1.xpose.msra.mxu0 0.0
    %1783 = vmatprep.subr.mxu0 0.0
    %1784 = vmatpush1.xpose.msra.mxu0 0.0
    %1785 = vmatprep.subr.mxu0 0.0
    %1786 = vmatpush1.xpose.msra.mxu0 0.0
    %1787 = vmatprep.subr.mxu0 0.0
    %1788 = vmatpush1.xpose.msra.mxu0 0.0
    %1789 = vmatprep.subr.mxu0 0.0
    %1790 = vmatpush1.xpose.msra.mxu0 0.0
    %1791 = vmatprep.subr.mxu0 0.0
    %1792 = vmatpush1.xpose.msra.mxu0 0.0
    %1793 = vmatprep.mubr.f32.mxu0 0.0
    %1794 = vmatmul.mubr.f32.gmra.mrb[0].mxu0 %v1697
    %v1795 = vpop.f32.mrb[0].mxu0
    %v1796 = vadd.f32 0.0, %v1795
    %v1797 = vpop.f32.mrb[0].mxu0
    %1798 = vmatprep.mubr.f32.mxu0 0.0
    %1799 = vmatmul.mubr.f32.gmra.mrb[0].mxu0 %v1700
    %v1800 = vpop.f32.mrb[0].mxu0
    %v1801 = vadd.f32 0.0, %v1800
    %v1802 = vpop.f32.mrb[0].mxu0
    %1803 = vmatprep.mubr.f32.mxu0 0.0
    %1804 = vmatmul.mubr.f32.gmra.mrb[0].mxu0 %v1703
    %v1805 = vpop.f32.mrb[0].mxu0
    %v1806 = vadd.f32 0.0, %v1805
    %v1807 = vpop.f32.mrb[0].mxu0
    %1808 = vmatprep.mubr.f32.mxu0 0.0
    %1809 = vmatmul.mubr.f32.gmra.mrb[0].mxu0 %v1706
    %v1810 = vpop.f32.mrb[0].mxu0
    %v1811 = vadd.f32 0.0, %v1810
    %v1812 = vpop.f32.mrb[0].mxu0
    %1813 = vdwg.mxu0
    %v1814 = vld [vmem:[%s13] sm:$0xff]
    %v1815 = vld [vmem:[%s13 + $0x8] sm:$0xff]
    %v1816 = vld [vmem:[%s13 + $0x10] sm:$0xff]
    %v1817 = vld [vmem:[%s13 + $0x18] sm:$0xff]
    %v1819 = vsel %vm313, %v1814, 0
    %v1822 = vsel %vm313, %v1815, 0
    %v1825 = vsel %vm313, %v1816, 0
    %v1828 = vsel %vm313, %v1817, 0
    %1830 = vmatprep.subr.mxu0 0.0
    %1831 = vmatpush1.xpose.msra.mxu0 %v1709
    %1832 = vmatprep.subr.mxu0 0.0
    %1833 = vmatpush1.xpose.msra.mxu0 %v1712
    %1834 = vmatprep.subr.mxu0 0.0
    %1835 = vmatpush1.xpose.msra.mxu0 %v1715
    %1836 = vmatprep.subr.mxu0 0.0
    %1837 = vmatpush1.xpose.msra.mxu0 %v1718
    %1838 = vmatprep.subr.mxu0 0.0
    %1839 = vmatpush1.xpose.msra.mxu0 %v1721
    %1840 = vmatprep.subr.mxu0 0.0
    %1841 = vmatpush1.xpose.msra.mxu0 %v1724
    %1842 = vmatprep.subr.mxu0 0.0
    %1843 = vmatpush1.xpose.msra.mxu0 %v1727
    %1844 = vmatprep.subr.mxu0 0.0
    %1845 = vmatpush1.xpose.msra.mxu0 0.0
    %1846 = vmatprep.subr.mxu0 0.0
    %1847 = vmatpush1.xpose.msra.mxu0 0.0
    %1848 = vmatprep.subr.mxu0 0.0
    %1849 = vmatpush1.xpose.msra.mxu0 0.0
    %1850 = vmatprep.subr.mxu0 0.0
    %1851 = vmatpush1.xpose.msra.mxu0 0.0
    %1852 = vmatprep.subr.mxu0 0.0
    %1853 = vmatpush1.xpose.msra.mxu0 0.0
    %1854 = vmatprep.subr.mxu0 0.0
    %1855 = vmatpush1.xpose.msra.mxu0 0.0
    %1856 = vmatprep.subr.mxu0 0.0
    %1857 = vmatpush1.xpose.msra.mxu0 0.0
    %1858 = vmatprep.subr.mxu0 0.0
    %1859 = vmatpush1.xpose.msra.mxu0 0.0
    %1860 = vmatprep.subr.mxu0 0.0
    %1861 = vmatpush1.xpose.msra.mxu0 0.0
    %1862 = vmatprep.subr.mxu0 0.0
    %1863 = vmatpush1.xpose.msra.mxu0 0.0
    %1864 = vmatprep.subr.mxu0 0.0
    %1865 = vmatpush1.xpose.msra.mxu0 0.0
    %1866 = vmatprep.subr.mxu0 0.0
    %1867 = vmatpush1.xpose.msra.mxu0 0.0
    %1868 = vmatprep.subr.mxu0 0.0
    %1869 = vmatpush1.xpose.msra.mxu0 0.0
    %1870 = vmatprep.subr.mxu0 0.0
    %1871 = vmatpush1.xpose.msra.mxu0 0.0
    %1872 = vmatprep.subr.mxu0 0.0
    %1873 = vmatpush1.xpose.msra.mxu0 0.0
    %1874 = vmatprep.subr.mxu0 0.0
    %1875 = vmatpush1.xpose.msra.mxu0 0.0
    %1876 = vmatprep.subr.mxu0 0.0
    %1877 = vmatpush1.xpose.msra.mxu0 0.0
    %1878 = vmatprep.subr.mxu0 0.0
    %1879 = vmatpush1.xpose.msra.mxu0 0.0
    %1880 = vmatprep.subr.mxu0 0.0
    %1881 = vmatpush1.xpose.msra.mxu0 0.0
    %1882 = vmatprep.subr.mxu0 0.0
    %1883 = vmatpush1.xpose.msra.mxu0 0.0
    %1884 = vmatprep.subr.mxu0 0.0
    %1885 = vmatpush1.xpose.msra.mxu0 0.0
    %1886 = vmatprep.subr.mxu0 0.0
    %1887 = vmatpush1.xpose.msra.mxu0 0.0
    %1888 = vmatprep.subr.mxu0 0.0
    %1889 = vmatpush1.xpose.msra.mxu0 0.0
    %1890 = vmatprep.subr.mxu0 0.0
    %1891 = vmatpush1.xpose.msra.mxu0 0.0
    %1892 = vmatprep.subr.mxu0 0.0
    %1893 = vmatpush1.xpose.msra.mxu0 0.0
    %1894 = vmatprep.mubr.f32.mxu0 0.0
    %1895 = vmatmul.mubr.f32.gmra.mrb[0].mxu0 %v1819
    %v1896 = vpop.f32.mrb[0].mxu0
    %v1897 = vadd.f32 0.0, %v1896
    %v1898 = vpop.f32.mrb[0].mxu0
    %1899 = vmatprep.mubr.f32.mxu0 0.0
    %1900 = vmatmul.mubr.f32.gmra.mrb[0].mxu0 %v1822
    %v1901 = vpop.f32.mrb[0].mxu0
    %v1902 = vadd.f32 0.0, %v1901
    %v1903 = vpop.f32.mrb[0].mxu0
    %1904 = vmatprep.mubr.f32.mxu0 0.0
    %1905 = vmatmul.mubr.f32.gmra.mrb[0].mxu0 %v1825
    %v1906 = vpop.f32.mrb[0].mxu0
    %v1907 = vadd.f32 0.0, %v1906
    %v1908 = vpop.f32.mrb[0].mxu0
    %1909 = vmatprep.mubr.f32.mxu0 0.0
    %1910 = vmatmul.mubr.f32.gmra.mrb[0].mxu0 %v1828
    %v1911 = vpop.f32.mrb[0].mxu0
    %v1912 = vadd.f32 0.0, %v1911
    %v1913 = vpop.f32.mrb[0].mxu0
    %1914 = vdwg.mxu0
    %v1915 = vld [vmem:[%s2] sm:$0xff]
    %v1916 = vld [vmem:[%s2 + $0x8] sm:$0xff]
    %v1917 = vld [vmem:[%s2 + $0x10] sm:$0xff]
    %v1918 = vld [vmem:[%s2 + $0x18] sm:$0xff]
    %v1919 = vld [vmem:[%s2 + $0x20] sm:$0xff]
    %v1920 = vld [vmem:[%s2 + $0x28] sm:$0xff]
    %v1921 = vld [vmem:[%s2 + $0x30] sm:$0xff]
    %v1922 = vld [vmem:[%s2 + $0x38] sm:$0xff]
    %v1923 = vld [vmem:[%s2 + $0x40] sm:$0xff]
    %v1924 = vld [vmem:[%s2 + $0x48] sm:$0xff]
    %v1925 = vld [vmem:[%s2 + $0x50] sm:$0xff]
    %v1926 = vld [vmem:[%s2 + $0x58] sm:$0xff]
    %v1927 = vld [vmem:[%s2 + $0x60] sm:$0xff]
    %v1928 = vld [vmem:[%s2 + $0x68] sm:$0xff]
    %v1929 = vld [vmem:[%s2 + $0x70] sm:$0xff]
    %v1930 = vld [vmem:[%s2 + $0x78] sm:$0xff]
    %v1931 = vld [vmem:[%s2 + $0x80] sm:$0xff]
    %v1932 = vld [vmem:[%s2 + $0x88] sm:$0xff]
    %v1933 = vld [vmem:[%s2 + $0x90] sm:$0xff]
    %v1934 = vld [vmem:[%s2 + $0x98] sm:$0xff]
    %v1935 = vld [vmem:[%s2 + $0xa0] sm:$0xff]
    %v1936 = vld [vmem:[%s2 + $0xa8] sm:$0xff]
    %v1937 = vld [vmem:[%s2 + $0xb0] sm:$0xff]
    %v1938 = vld [vmem:[%s2 + $0xb8] sm:$0xff]
    %v1939 = vld [vmem:[%s2 + $0xc0] sm:$0x3]
    %v1940 = vld [vmem:[%s2 + $0xc8] sm:$0x3]
    %v1941 = vld [vmem:[%s2 + $0xd0] sm:$0x3]
    %v1942 = vld [vmem:[%s2 + $0xd8] sm:$0x3]
    %v1943 = vld [vmem:[#allocation6] sm:$0xff]
    %v1944 = vld [vmem:[#allocation6 + $0x8] sm:$0xff]
    %v1945 = vld [vmem:[#allocation6 + $0x10] sm:$0xff]
    %v1946 = vld [vmem:[#allocation6 + $0x18] sm:$0xff]
    %v1947 = vld [vmem:[#allocation6 + $0x20] sm:$0xff]
    %v1948 = vld [vmem:[#allocation6 + $0x28] sm:$0xff]
    %v1949 = vld [vmem:[#allocation6 + $0x30] sm:$0xff]
    %v1950 = vld [vmem:[#allocation6 + $0x38] sm:$0xff]
    %v1951 = vld [vmem:[#allocation6 + $0x40] sm:$0xff]
    %v1952 = vld [vmem:[#allocation6 + $0x48] sm:$0xff]
    %v1953 = vld [vmem:[#allocation6 + $0x50] sm:$0xff]
    %v1954 = vld [vmem:[#allocation6 + $0x58] sm:$0xff]
    %v1955 = vld [vmem:[#allocation6 + $0x60] sm:$0xff]
    %v1956 = vld [vmem:[#allocation6 + $0x68] sm:$0xff]
    %v1957 = vld [vmem:[#allocation6 + $0x70] sm:$0xff]
    %v1958 = vld [vmem:[#allocation6 + $0x78] sm:$0xff]
    %v1959 = vld [vmem:[#allocation6 + $0x80] sm:$0xff]
    %v1960 = vld [vmem:[#allocation6 + $0x88] sm:$0xff]
    %v1961 = vld [vmem:[#allocation6 + $0x90] sm:$0xff]
    %v1962 = vld [vmem:[#allocation6 + $0x98] sm:$0xff]
    %v1963 = vld [vmem:[#allocation6 + $0xa0] sm:$0xff]
    %v1964 = vld [vmem:[#allocation6 + $0xa8] sm:$0xff]
    %v1965 = vld [vmem:[#allocation6 + $0xb0] sm:$0xff]
    %v1966 = vld [vmem:[#allocation6 + $0xb8] sm:$0xff]
    %v1967 = vld [vmem:[#allocation6 + $0xc0] sm:$0x3]
    %v1968 = vld [vmem:[#allocation6 + $0xc8] sm:$0x3]
    %v1969 = vld [vmem:[#allocation6 + $0xd0] sm:$0x3]
    %v1970 = vld [vmem:[#allocation6 + $0xd8] sm:$0x3]
    %v1972 = vsel %vm442, %v1897, 0
    %v1975 = vsel %vm442, %v1902, 0
    %v1978 = vsel %vm442, %v1907, 0
    %v1981 = vsel %vm442, %v1912, 0
    %v1984 = vsel %vm535, %v1967, 0
    %v1987 = vsel %vm535, %v1968, 0
    %v1990 = vsel %vm535, %v1969, 0
    %v1993 = vsel %vm535, %v1970, 0
    %1995 = vmatprep.subr.mxu0 %v1944
    %1996 = vmatpush1.msra.mxu0 %v1943
    %1997 = vmatprep.subr.mxu0 %v1948
    %1998 = vmatpush1.msra.mxu0 %v1947
    %1999 = vmatprep.subr.mxu0 %v1952
    %2000 = vmatpush1.msra.mxu0 %v1951
    %2001 = vmatprep.subr.mxu0 %v1956
    %2002 = vmatpush1.msra.mxu0 %v1955
    %2003 = vmatprep.subr.mxu0 %v1960
    %2004 = vmatpush1.msra.mxu0 %v1959
    %2005 = vmatprep.subr.mxu0 %v1964
    %2006 = vmatpush1.msra.mxu0 %v1963
    %2007 = vmatprep.subr.mxu0 %v1987
    %2008 = vmatpush1.msra.mxu0 %v1984
    %2009 = vmatprep.subr.mxu0 0.0
    %2010 = vmatpush1.msra.mxu0 0.0
    %2011 = vmatprep.subr.mxu0 0.0
    %2012 = vmatpush1.msra.mxu0 0.0
    %2013 = vmatprep.subr.mxu0 0.0
    %2014 = vmatpush1.msra.mxu0 0.0
    %2015 = vmatprep.subr.mxu0 0.0
    %2016 = vmatpush1.msra.mxu0 0.0
    %2017 = vmatprep.subr.mxu0 0.0
    %2018 = vmatpush1.msra.mxu0 0.0
    %2019 = vmatprep.subr.mxu0 0.0
    %2020 = vmatpush1.msra.mxu0 0.0
    %2021 = vmatprep.subr.mxu0 0.0
    %2022 = vmatpush1.msra.mxu0 0.0
    %2023 = vmatprep.subr.mxu0 0.0
    %2024 = vmatpush1.msra.mxu0 0.0
    %2025 = vmatprep.subr.mxu0 0.0
    %2026 = vmatpush1.msra.mxu0 0.0
    %2027 = vmatprep.subr.mxu0 0.0
    %2028 = vmatpush1.msra.mxu0 0.0
    %2029 = vmatprep.subr.mxu0 0.0
    %2030 = vmatpush1.msra.mxu0 0.0
    %2031 = vmatprep.subr.mxu0 0.0
    %2032 = vmatpush1.msra.mxu0 0.0
    %2033 = vmatprep.subr.mxu0 0.0
    %2034 = vmatpush1.msra.mxu0 0.0
    %2035 = vmatprep.subr.mxu0 0.0
    %2036 = vmatpush1.msra.mxu0 0.0
    %2037 = vmatprep.subr.mxu0 0.0
    %2038 = vmatpush1.msra.mxu0 0.0
    %2039 = vmatprep.subr.mxu0 0.0
    %2040 = vmatpush1.msra.mxu0 0.0
    %2041 = vmatprep.subr.mxu0 0.0
    %2042 = vmatpush1.msra.mxu0 0.0
    %2043 = vmatprep.subr.mxu0 0.0
    %2044 = vmatpush1.msra.mxu0 0.0
    %2045 = vmatprep.subr.mxu0 0.0
    %2046 = vmatpush1.msra.mxu0 0.0
    %2047 = vmatprep.subr.mxu0 0.0
    %2048 = vmatpush1.msra.mxu0 0.0
    %2049 = vmatprep.subr.mxu0 0.0
    %2050 = vmatpush1.msra.mxu0 0.0
    %2051 = vmatprep.subr.mxu0 0.0
    %2052 = vmatpush1.msra.mxu0 0.0
    %2053 = vmatprep.subr.mxu0 0.0
    %2054 = vmatpush1.msra.mxu0 0.0
    %2055 = vmatprep.subr.mxu0 0.0
    %2056 = vmatpush1.msra.mxu0 0.0
    %2057 = vmatprep.subr.mxu0 0.0
    %2058 = vmatpush1.msra.mxu0 0.0
    %2059 = vmatprep.mubr.f32.mxu0 0.0
    %2060 = vmatmul.mubr.f32.gmra.mrb[0].mxu0 %v1972
    %v2061 = vpop.f32.mrb[0].mxu0
    %v2062 = vadd.f32 0.0, %v2061
    %v2063 = vpop.f32.mrb[0].mxu0
    %v2064 = vadd.f32 0.0, %v2063
    %2065 = vmatprep.mubr.f32.mxu0 0.0
    %2066 = vmatmul.mubr.f32.gmra.mrb[0].mxu0 %v1975
    %v2067 = vpop.f32.mrb[0].mxu0
    %v2068 = vadd.f32 0.0, %v2067
    %v2069 = vpop.f32.mrb[0].mxu0
    %v2070 = vadd.f32 0.0, %v2069
    %2071 = vmatprep.mubr.f32.mxu0 0.0
    %2072 = vmatmul.mubr.f32.gmra.mrb[0].mxu0 %v1978
    %v2073 = vpop.f32.mrb[0].mxu0
    %v2074 = vadd.f32 0.0, %v2073
    %v2075 = vpop.f32.mrb[0].mxu0
    %v2076 = vadd.f32 0.0, %v2075
    %2077 = vmatprep.mubr.f32.mxu0 0.0
    %2078 = vmatmul.mubr.f32.gmra.mrb[0].mxu0 %v1981
    %v2079 = vpop.f32.mrb[0].mxu0
    %v2080 = vadd.f32 0.0, %v2079
    %v2081 = vpop.f32.mrb[0].mxu0
    %v2082 = vadd.f32 0.0, %v2081
    %2083 = vdwg.mxu0
    %2084 = vmatprep.subr.mxu0 %v1946
    %2085 = vmatpush1.msra.mxu0 %v1945
    %2086 = vmatprep.subr.mxu0 %v1950
    %2087 = vmatpush1.msra.mxu0 %v1949
    %2088 = vmatprep.subr.mxu0 %v1954
    %2089 = vmatpush1.msra.mxu0 %v1953
    %2090 = vmatprep.subr.mxu0 %v1958
    %2091 = vmatpush1.msra.mxu0 %v1957
    %2092 = vmatprep.subr.mxu0 %v1962
    %2093 = vmatpush1.msra.mxu0 %v1961
    %2094 = vmatprep.subr.mxu0 %v1966
    %2095 = vmatpush1.msra.mxu0 %v1965
    %2096 = vmatprep.subr.mxu0 %v1993
    %2097 = vmatpush1.msra.mxu0 %v1990
    %2098 = vmatprep.subr.mxu0 0.0
    %2099 = vmatpush1.msra.mxu0 0.0
    %2100 = vmatprep.subr.mxu0 0.0
    %2101 = vmatpush1.msra.mxu0 0.0
    %2102 = vmatprep.subr.mxu0 0.0
    %2103 = vmatpush1.msra.mxu0 0.0
    %2104 = vmatprep.subr.mxu0 0.0
    %2105 = vmatpush1.msra.mxu0 0.0
    %2106 = vmatprep.subr.mxu0 0.0
    %2107 = vmatpush1.msra.mxu0 0.0
    %2108 = vmatprep.subr.mxu0 0.0
    %2109 = vmatpush1.msra.mxu0 0.0
    %2110 = vmatprep.subr.mxu0 0.0
    %2111 = vmatpush1.msra.mxu0 0.0
    %2112 = vmatprep.subr.mxu0 0.0
    %2113 = vmatpush1.msra.mxu0 0.0
    %2114 = vmatprep.subr.mxu0 0.0
    %2115 = vmatpush1.msra.mxu0 0.0
    %2116 = vmatprep.subr.mxu0 0.0
    %2117 = vmatpush1.msra.mxu0 0.0
    %2118 = vmatprep.subr.mxu0 0.0
    %2119 = vmatpush1.msra.mxu0 0.0
    %2120 = vmatprep.subr.mxu0 0.0
    %2121 = vmatpush1.msra.mxu0 0.0
    %2122 = vmatprep.subr.mxu0 0.0
    %2123 = vmatpush1.msra.mxu0 0.0
    %2124 = vmatprep.subr.mxu0 0.0
    %2125 = vmatpush1.msra.mxu0 0.0
    %2126 = vmatprep.subr.mxu0 0.0
    %2127 = vmatpush1.msra.mxu0 0.0
    %2128 = vmatprep.subr.mxu0 0.0
    %2129 = vmatpush1.msra.mxu0 0.0
    %2130 = vmatprep.subr.mxu0 0.0
    %2131 = vmatpush1.msra.mxu0 0.0
    %2132 = vmatprep.subr.mxu0 0.0
    %2133 = vmatpush1.msra.mxu0 0.0
    %2134 = vmatprep.subr.mxu0 0.0
    %2135 = vmatpush1.msra.mxu0 0.0
    %2136 = vmatprep.subr.mxu0 0.0
    %2137 = vmatpush1.msra.mxu0 0.0
    %2138 = vmatprep.subr.mxu0 0.0
    %2139 = vmatpush1.msra.mxu0 0.0
    %2140 = vmatprep.subr.mxu0 0.0
    %2141 = vmatpush1.msra.mxu0 0.0
    %2142 = vmatprep.subr.mxu0 0.0
    %2143 = vmatpush1.msra.mxu0 0.0
    %2144 = vmatprep.subr.mxu0 0.0
    %2145 = vmatpush1.msra.mxu0 0.0
    %2146 = vmatprep.subr.mxu0 0.0
    %2147 = vmatpush1.msra.mxu0 0.0
    %2148 = vmatprep.mubr.f32.mxu0 0.0
    %2149 = vmatmul.mubr.f32.gmra.mrb[0].mxu0 %v1972
    %v2150 = vpop.f32.mrb[0].mxu0
    %v2151 = vadd.f32 0.0, %v2150
    %v2152 = vpop.f32.mrb[0].mxu0
    %v2153 = vadd.f32 0.0, %v2152
    %2154 = vmatprep.mubr.f32.mxu0 0.0
    %2155 = vmatmul.mubr.f32.gmra.mrb[0].mxu0 %v1975
    %v2156 = vpop.f32.mrb[0].mxu0
    %v2157 = vadd.f32 0.0, %v2156
    %v2158 = vpop.f32.mrb[0].mxu0
    %v2159 = vadd.f32 0.0, %v2158
    %2160 = vmatprep.mubr.f32.mxu0 0.0
    %2161 = vmatmul.mubr.f32.gmra.mrb[0].mxu0 %v1978
    %v2162 = vpop.f32.mrb[0].mxu0
    %v2163 = vadd.f32 0.0, %v2162
    %v2164 = vpop.f32.mrb[0].mxu0
    %v2165 = vadd.f32 0.0, %v2164
    %2166 = vmatprep.mubr.f32.mxu0 0.0
    %2167 = vmatmul.mubr.f32.gmra.mrb[0].mxu0 %v1981
    %v2168 = vpop.f32.mrb[0].mxu0
    %v2169 = vadd.f32 0.0, %v2168
    %v2170 = vpop.f32.mrb[0].mxu0
    %v2171 = vadd.f32 0.0, %v2170
    %2172 = vdwg.mxu0
    %v2174 = vsel %vm442, %v1796, 0
    %v2177 = vsel %vm442, %v1801, 0
    %v2180 = vsel %vm442, %v1806, 0
    %v2183 = vsel %vm442, %v1811, 0
    %v2186 = vsel %vm535, %v1939, 0
    %v2189 = vsel %vm535, %v1940, 0
    %v2192 = vsel %vm535, %v1941, 0
    %v2195 = vsel %vm535, %v1942, 0
    %2197 = vmatprep.subr.mxu0 %v1916
    %2198 = vmatpush1.msra.mxu0 %v1915
    %2199 = vmatprep.subr.mxu0 %v1920
    %2200 = vmatpush1.msra.mxu0 %v1919
    %2201 = vmatprep.subr.mxu0 %v1924
    %2202 = vmatpush1.msra.mxu0 %v1923
    %2203 = vmatprep.subr.mxu0 %v1928
    %2204 = vmatpush1.msra.mxu0 %v1927
    %2205 = vmatprep.subr.mxu0 %v1932
    %2206 = vmatpush1.msra.mxu0 %v1931
    %2207 = vmatprep.subr.mxu0 %v1936
    %2208 = vmatpush1.msra.mxu0 %v1935
    %2209 = vmatprep.subr.mxu0 %v2189
    %2210 = vmatpush1.msra.mxu0 %v2186
    %2211 = vmatprep.subr.mxu0 0.0
    %2212 = vmatpush1.msra.mxu0 0.0
    %2213 = vmatprep.subr.mxu0 0.0
    %2214 = vmatpush1.msra.mxu0 0.0
    %2215 = vmatprep.subr.mxu0 0.0
    %2216 = vmatpush1.msra.mxu0 0.0
    %2217 = vmatprep.subr.mxu0 0.0
    %2218 = vmatpush1.msra.mxu0 0.0
    %2219 = vmatprep.subr.mxu0 0.0
    %2220 = vmatpush1.msra.mxu0 0.0
    %2221 = vmatprep.subr.mxu0 0.0
    %2222 = vmatpush1.msra.mxu0 0.0
    %2223 = vmatprep.subr.mxu0 0.0
    %2224 = vmatpush1.msra.mxu0 0.0
    %2225 = vmatprep.subr.mxu0 0.0
    %2226 = vmatpush1.msra.mxu0 0.0
    %2227 = vmatprep.subr.mxu0 0.0
    %2228 = vmatpush1.msra.mxu0 0.0
    %2229 = vmatprep.subr.mxu0 0.0
    %2230 = vmatpush1.msra.mxu0 0.0
    %2231 = vmatprep.subr.mxu0 0.0
    %2232 = vmatpush1.msra.mxu0 0.0
    %2233 = vmatprep.subr.mxu0 0.0
    %2234 = vmatpush1.msra.mxu0 0.0
    %2235 = vmatprep.subr.mxu0 0.0
    %2236 = vmatpush1.msra.mxu0 0.0
    %2237 = vmatprep.subr.mxu0 0.0
    %2238 = vmatpush1.msra.mxu0 0.0
    %2239 = vmatprep.subr.mxu0 0.0
    %2240 = vmatpush1.msra.mxu0 0.0
    %2241 = vmatprep.subr.mxu0 0.0
    %2242 = vmatpush1.msra.mxu0 0.0
    %2243 = vmatprep.subr.mxu0 0.0
    %2244 = vmatpush1.msra.mxu0 0.0
    %2245 = vmatprep.subr.mxu0 0.0
    %2246 = vmatpush1.msra.mxu0 0.0
    %2247 = vmatprep.subr.mxu0 0.0
    %2248 = vmatpush1.msra.mxu0 0.0
    %2249 = vmatprep.subr.mxu0 0.0
    %2250 = vmatpush1.msra.mxu0 0.0
    %2251 = vmatprep.subr.mxu0 0.0
    %2252 = vmatpush1.msra.mxu0 0.0
    %2253 = vmatprep.subr.mxu0 0.0
    %2254 = vmatpush1.msra.mxu0 0.0
    %2255 = vmatprep.subr.mxu0 0.0
    %2256 = vmatpush1.msra.mxu0 0.0
    %2257 = vmatprep.subr.mxu0 0.0
    %2258 = vmatpush1.msra.mxu0 0.0
    %2259 = vmatprep.subr.mxu0 0.0
    %2260 = vmatpush1.msra.mxu0 0.0
    %2261 = vmatprep.mubr.f32.mxu0 0.0
    %2262 = vmatmul.mubr.f32.gmra.mrb[0].mxu0 %v2174
    %v2263 = vpop.f32.mrb[0].mxu0
    %v2264 = vadd.f32 %v2062, %v2263
    %v2265 = vpop.f32.mrb[0].mxu0
    %v2266 = vadd.f32 %v2064, %v2265
    %2267 = vmatprep.mubr.f32.mxu0 0.0
    %2268 = vmatmul.mubr.f32.gmra.mrb[0].mxu0 %v2177
    %v2269 = vpop.f32.mrb[0].mxu0
    %v2270 = vadd.f32 %v2068, %v2269
    %v2271 = vpop.f32.mrb[0].mxu0
    %v2272 = vadd.f32 %v2070, %v2271
    %2273 = vmatprep.mubr.f32.mxu0 0.0
    %2274 = vmatmul.mubr.f32.gmra.mrb[0].mxu0 %v2180
    %v2275 = vpop.f32.mrb[0].mxu0
    %v2276 = vadd.f32 %v2074, %v2275
    %v2277 = vpop.f32.mrb[0].mxu0
    %v2278 = vadd.f32 %v2076, %v2277
    %2279 = vmatprep.mubr.f32.mxu0 0.0
    %2280 = vmatmul.mubr.f32.gmra.mrb[0].mxu0 %v2183
    %v2281 = vpop.f32.mrb[0].mxu0
    %v2282 = vadd.f32 %v2080, %v2281
    %v2283 = vpop.f32.mrb[0].mxu0
    %v2284 = vadd.f32 %v2082, %v2283
    %2285 = vdwg.mxu0
    %2286 = vmatprep.subr.mxu0 %v1918
    %2287 = vmatpush1.msra.mxu0 %v1917
    %2288 = vmatprep.subr.mxu0 %v1922
    %2289 = vmatpush1.msra.mxu0 %v1921
    %2290 = vmatprep.subr.mxu0 %v1926
    %2291 = vmatpush1.msra.mxu0 %v1925
    %2292 = vmatprep.subr.mxu0 %v1930
    %2293 = vmatpush1.msra.mxu0 %v1929
    %2294 = vmatprep.subr.mxu0 %v1934
    %2295 = vmatpush1.msra.mxu0 %v1933
    %2296 = vmatprep.subr.mxu0 %v1938
    %2297 = vmatpush1.msra.mxu0 %v1937
    %2298 = vmatprep.subr.mxu0 %v2195
    %2299 = vmatpush1.msra.mxu0 %v2192
    %2300 = vmatprep.subr.mxu0 0.0
    %2301 = vmatpush1.msra.mxu0 0.0
    %2302 = vmatprep.subr.mxu0 0.0
    %2303 = vmatpush1.msra.mxu0 0.0
    %2304 = vmatprep.subr.mxu0 0.0
    %2305 = vmatpush1.msra.mxu0 0.0
    %2306 = vmatprep.subr.mxu0 0.0
    %2307 = vmatpush1.msra.mxu0 0.0
    %2308 = vmatprep.subr.mxu0 0.0
    %2309 = vmatpush1.msra.mxu0 0.0
    %2310 = vmatprep.subr.mxu0 0.0
    %2311 = vmatpush1.msra.mxu0 0.0
    %2312 = vmatprep.subr.mxu0 0.0
    %2313 = vmatpush1.msra.mxu0 0.0
    %2314 = vmatprep.subr.mxu0 0.0
    %2315 = vmatpush1.msra.mxu0 0.0
    %2316 = vmatprep.subr.mxu0 0.0
    %2317 = vmatpush1.msra.mxu0 0.0
    %2318 = vmatprep.subr.mxu0 0.0
    %2319 = vmatpush1.msra.mxu0 0.0
    %2320 = vmatprep.subr.mxu0 0.0
    %2321 = vmatpush1.msra.mxu0 0.0
    %2322 = vmatprep.subr.mxu0 0.0
    %2323 = vmatpush1.msra.mxu0 0.0
    %2324 = vmatprep.subr.mxu0 0.0
    %2325 = vmatpush1.msra.mxu0 0.0
    %2326 = vmatprep.subr.mxu0 0.0
    %2327 = vmatpush1.msra.mxu0 0.0
    %2328 = vmatprep.subr.mxu0 0.0
    %2329 = vmatpush1.msra.mxu0 0.0
    %2330 = vmatprep.subr.mxu0 0.0
    %2331 = vmatpush1.msra.mxu0 0.0
    %2332 = vmatprep.subr.mxu0 0.0
    %2333 = vmatpush1.msra.mxu0 0.0
    %2334 = vmatprep.subr.mxu0 0.0
    %2335 = vmatpush1.msra.mxu0 0.0
    %2336 = vmatprep.subr.mxu0 0.0
    %2337 = vmatpush1.msra.mxu0 0.0
    %2338 = vmatprep.subr.mxu0 0.0
    %2339 = vmatpush1.msra.mxu0 0.0
    %2340 = vmatprep.subr.mxu0 0.0
    %2341 = vmatpush1.msra.mxu0 0.0
    %2342 = vmatprep.subr.mxu0 0.0
    %2343 = vmatpush1.msra.mxu0 0.0
    %2344 = vmatprep.subr.mxu0 0.0
    %2345 = vmatpush1.msra.mxu0 0.0
    %2346 = vmatprep.subr.mxu0 0.0
    %2347 = vmatpush1.msra.mxu0 0.0
    %2348 = vmatprep.subr.mxu0 0.0
    %2349 = vmatpush1.msra.mxu0 0.0
    %2350 = vmatprep.mubr.f32.mxu0 0.0
    %2351 = vmatmul.mubr.f32.gmra.mrb[0].mxu0 %v2174
    %v2352 = vpop.f32.mrb[0].mxu0
    %v2353 = vadd.f32 %v2151, %v2352
    %v2354 = vpop.f32.mrb[0].mxu0
    %v2355 = vadd.f32 %v2153, %v2354
    %2356 = vmatprep.mubr.f32.mxu0 0.0
    %2357 = vmatmul.mubr.f32.gmra.mrb[0].mxu0 %v2177
    %v2358 = vpop.f32.mrb[0].mxu0
    %v2359 = vadd.f32 %v2157, %v2358
    %v2360 = vpop.f32.mrb[0].mxu0
    %v2361 = vadd.f32 %v2159, %v2360
    %2362 = vmatprep.mubr.f32.mxu0 0.0
    %2363 = vmatmul.mubr.f32.gmra.mrb[0].mxu0 %v2180
    %v2364 = vpop.f32.mrb[0].mxu0
    %v2365 = vadd.f32 %v2163, %v2364
    %v2366 = vpop.f32.mrb[0].mxu0
    %v2367 = vadd.f32 %v2165, %v2366
    %2368 = vmatprep.mubr.f32.mxu0 0.0
    %2369 = vmatmul.mubr.f32.gmra.mrb[0].mxu0 %v2183
    %v2370 = vpop.f32.mrb[0].mxu0
    %v2371 = vadd.f32 %v2169, %v2370
    %v2372 = vpop.f32.mrb[0].mxu0
    %v2373 = vadd.f32 %v2171, %v2372
    %2374 = vdwg.mxu0
    %v2375 = vld [vmem:[%s14] sm:$0xff]
    %v2376 = vld [vmem:[%s14 + $0x8] sm:$0xff]
    %v2377 = vld [vmem:[%s14 + $0x10] sm:$0xff]
    %v2378 = vld [vmem:[%s14 + $0x18] sm:$0xff]
    %2380 = vset.pattern.permute.xlu0 0
    %2381 = vperm.xlu0 %2380, %v2375
    %v2382 = vpop.permute.xlu0 %2381
    %2385 = vset.pattern.permute.xlu0 0
    %2386 = vperm.xlu0 %2385, %v2376
    %v2387 = vpop.permute.xlu0 %2386
    %2390 = vset.pattern.permute.xlu0 0
    %2391 = vperm.xlu0 %2390, %v2377
    %v2392 = vpop.permute.xlu0 %2391
    %2395 = vset.pattern.permute.xlu0 0
    %2396 = vperm.xlu0 %2395, %v2378
    %v2397 = vpop.permute.xlu0 %2396
    %v2399 = vadd.f32 %v2264, %v2382
    %v2400 = vadd.f32 %v2266, %v2382
    %v2401 = vadd.f32 %v2353, %v2382
    %v2402 = vadd.f32 %v2355, %v2382
    %v2403 = vadd.f32 %v2270, %v2387
    %v2404 = vadd.f32 %v2272, %v2387
    %v2405 = vadd.f32 %v2359, %v2387
    %v2406 = vadd.f32 %v2361, %v2387
    %v2407 = vadd.f32 %v2276, %v2392
    %v2408 = vadd.f32 %v2278, %v2392
    %v2409 = vadd.f32 %v2365, %v2392
    %v2410 = vadd.f32 %v2367, %v2392
    %v2411 = vadd.f32 %v2282, %v2397
    %v2412 = vadd.f32 %v2284, %v2397
    %v2413 = vadd.f32 %v2371, %v2397
    %v2414 = vadd.f32 %v2373, %v2397
    %v2415 = vmax.f32 %v2399, 0.0
    %v2416 = vmax.f32 %v2400, 0.0
    %v2417 = vmax.f32 %v2401, 0.0
    %v2418 = vmax.f32 %v2402, 0.0
    %v2419 = vmax.f32 %v2403, 0.0
    %v2420 = vmax.f32 %v2404, 0.0
    %v2421 = vmax.f32 %v2405, 0.0
    %v2422 = vmax.f32 %v2406, 0.0
    %v2423 = vmax.f32 %v2407, 0.0
    %v2424 = vmax.f32 %v2408, 0.0
    %v2425 = vmax.f32 %v2409, 0.0
    %v2426 = vmax.f32 %v2410, 0.0
    %v2427 = vmax.f32 %v2411, 0.0
    %v2428 = vmax.f32 %v2412, 0.0
    %v2429 = vmax.f32 %v2413, 0.0
    %v2430 = vmax.f32 %v2414, 0.0
    %v2431 = vld [vmem:[#allocation14] sm:$0xff]
    %v2432 = vld [vmem:[#allocation14 + $0x8] sm:$0xff]
    %v2433 = vld [vmem:[#allocation14 + $0x10] sm:$0xff]
    %v2434 = vld [vmem:[#allocation14 + $0x18] sm:$0xff]
    %v2435 = vld [vmem:[%s16] sm:$0xff]
    %v2436 = vld [vmem:[%s16 + $0x8] sm:$0xff]
    %v2437 = vld [vmem:[%s16 + $0x10] sm:$0xff]
    %v2438 = vld [vmem:[%s16 + $0x18] sm:$0xff]
    %2440 = vset.pattern.permute.xlu0 0
    %2441 = vperm.xlu0 %2440, %v2435
    %v2442 = vpop.permute.xlu0 %2441
    %2445 = vset.pattern.permute.xlu0 0
    %2446 = vperm.xlu0 %2445, %v2436
    %v2447 = vpop.permute.xlu0 %2446
    %2450 = vset.pattern.permute.xlu0 0
    %2451 = vperm.xlu0 %2450, %v2437
    %v2452 = vpop.permute.xlu0 %2451
    %2455 = vset.pattern.permute.xlu0 0
    %2456 = vperm.xlu0 %2455, %v2438
    %v2457 = vpop.permute.xlu0 %2456
    %v2460 = vsel %vm313, %v2431, 0
    %v2463 = vsel %vm313, %v2432, 0
    %v2466 = vsel %vm313, %v2433, 0
    %v2469 = vsel %vm313, %v2434, 0
    %2471 = vmatprep.subr.mxu0 %v2416
    %2472 = vmatpush1.msra.mxu0 %v2415
    %2473 = vmatprep.subr.mxu0 %v2420
    %2474 = vmatpush1.msra.mxu0 %v2419
    %2475 = vmatprep.subr.mxu0 %v2424
    %2476 = vmatpush1.msra.mxu0 %v2423
    %2477 = vmatprep.subr.mxu0 %v2428
    %2478 = vmatpush1.msra.mxu0 %v2427
    %2479 = vmatprep.subr.mxu0 0.0
    %2480 = vmatpush1.msra.mxu0 0.0
    %2481 = vmatprep.subr.mxu0 0.0
    %2482 = vmatpush1.msra.mxu0 0.0
    %2483 = vmatprep.subr.mxu0 0.0
    %2484 = vmatpush1.msra.mxu0 0.0
    %2485 = vmatprep.subr.mxu0 0.0
    %2486 = vmatpush1.msra.mxu0 0.0
    %2487 = vmatprep.subr.mxu0 0.0
    %2488 = vmatpush1.msra.mxu0 0.0
    %2489 = vmatprep.subr.mxu0 0.0
    %2490 = vmatpush1.msra.mxu0 0.0
    %2491 = vmatprep.subr.mxu0 0.0
    %2492 = vmatpush1.msra.mxu0 0.0
    %2493 = vmatprep.subr.mxu0 0.0
    %2494 = vmatpush1.msra.mxu0 0.0
    %2495 = vmatprep.subr.mxu0 0.0
    %2496 = vmatpush1.msra.mxu0 0.0
    %2497 = vmatprep.subr.mxu0 0.0
    %2498 = vmatpush1.msra.mxu0 0.0
    %2499 = vmatprep.subr.mxu0 0.0
    %2500 = vmatpush1.msra.mxu0 0.0
    %2501 = vmatprep.subr.mxu0 0.0
    %2502 = vmatpush1.msra.mxu0 0.0
    %2503 = vmatprep.subr.mxu0 0.0
    %2504 = vmatpush1.msra.mxu0 0.0
    %2505 = vmatprep.subr.mxu0 0.0
    %2506 = vmatpush1.msra.mxu0 0.0
    %2507 = vmatprep.subr.mxu0 0.0
    %2508 = vmatpush1.msra.mxu0 0.0
    %2509 = vmatprep.subr.mxu0 0.0
    %2510 = vmatpush1.msra.mxu0 0.0
    %2511 = vmatprep.subr.mxu0 0.0
    %2512 = vmatpush1.msra.mxu0 0.0
    %2513 = vmatprep.subr.mxu0 0.0
    %2514 = vmatpush1.msra.mxu0 0.0
    %2515 = vmatprep.subr.mxu0 0.0
    %2516 = vmatpush1.msra.mxu0 0.0
    %2517 = vmatprep.subr.mxu0 0.0
    %2518 = vmatpush1.msra.mxu0 0.0
    %2519 = vmatprep.subr.mxu0 0.0
    %2520 = vmatpush1.msra.mxu0 0.0
    %2521 = vmatprep.subr.mxu0 0.0
    %2522 = vmatpush1.msra.mxu0 0.0
    %2523 = vmatprep.subr.mxu0 0.0
    %2524 = vmatpush1.msra.mxu0 0.0
    %2525 = vmatprep.subr.mxu0 0.0
    %2526 = vmatpush1.msra.mxu0 0.0
    %2527 = vmatprep.subr.mxu0 0.0
    %2528 = vmatpush1.msra.mxu0 0.0
    %2529 = vmatprep.subr.mxu0 0.0
    %2530 = vmatpush1.msra.mxu0 0.0
    %2531 = vmatprep.subr.mxu0 0.0
    %2532 = vmatpush1.msra.mxu0 0.0
    %2533 = vmatprep.subr.mxu0 0.0
    %2534 = vmatpush1.msra.mxu0 0.0
    %2535 = vmatprep.mubr.f32.mxu0 0.0
    %2536 = vmatmul.mubr.f32.gmra.mrb[0].mxu0 %v2460
    %v2537 = vpop.f32.mrb[0].mxu0
    %v2538 = vadd.f32 %v2442, %v2537
    %v2539 = vpop.f32.mrb[0].mxu0
    %v2540 = vadd.f32 %v2442, %v2539
    %2541 = vmatprep.mubr.f32.mxu0 0.0
    %2542 = vmatmul.mubr.f32.gmra.mrb[0].mxu0 %v2463
    %v2543 = vpop.f32.mrb[0].mxu0
    %v2544 = vadd.f32 %v2447, %v2543
    %v2545 = vpop.f32.mrb[0].mxu0
    %v2546 = vadd.f32 %v2447, %v2545
    %2547 = vmatprep.mubr.f32.mxu0 0.0
    %2548 = vmatmul.mubr.f32.gmra.mrb[0].mxu0 %v2466
    %v2549 = vpop.f32.mrb[0].mxu0
    %v2550 = vadd.f32 %v2452, %v2549
    %v2551 = vpop.f32.mrb[0].mxu0
    %v2552 = vadd.f32 %v2452, %v2551
    %2553 = vmatprep.mubr.f32.mxu0 0.0
    %2554 = vmatmul.mubr.f32.gmra.mrb[0].mxu0 %v2469
    %v2555 = vpop.f32.mrb[0].mxu0
    %v2556 = vadd.f32 %v2457, %v2555
    %v2557 = vpop.f32.mrb[0].mxu0
    %v2558 = vadd.f32 %v2457, %v2557
    %2559 = vdwg.mxu0
    %2560 = vmatprep.subr.mxu0 %v2418
    %2561 = vmatpush1.msra.mxu0 %v2417
    %2562 = vmatprep.subr.mxu0 %v2422
    %2563 = vmatpush1.msra.mxu0 %v2421
    %2564 = vmatprep.subr.mxu0 %v2426
    %2565 = vmatpush1.msra.mxu0 %v2425
    %2566 = vmatprep.subr.mxu0 %v2430
    %2567 = vmatpush1.msra.mxu0 %v2429
    %2568 = vmatprep.subr.mxu0 0.0
    %2569 = vmatpush1.msra.mxu0 0.0
    %2570 = vmatprep.subr.mxu0 0.0
    %2571 = vmatpush1.msra.mxu0 0.0
    %2572 = vmatprep.subr.mxu0 0.0
    %2573 = vmatpush1.msra.mxu0 0.0
    %2574 = vmatprep.subr.mxu0 0.0
    %2575 = vmatpush1.msra.mxu0 0.0
    %2576 = vmatprep.subr.mxu0 0.0
    %2577 = vmatpush1.msra.mxu0 0.0
    %2578 = vmatprep.subr.mxu0 0.0
    %2579 = vmatpush1.msra.mxu0 0.0
    %2580 = vmatprep.subr.mxu0 0.0
    %2581 = vmatpush1.msra.mxu0 0.0
    %2582 = vmatprep.subr.mxu0 0.0
    %2583 = vmatpush1.msra.mxu0 0.0
    %2584 = vmatprep.subr.mxu0 0.0
    %2585 = vmatpush1.msra.mxu0 0.0
    %2586 = vmatprep.subr.mxu0 0.0
    %2587 = vmatpush1.msra.mxu0 0.0
    %2588 = vmatprep.subr.mxu0 0.0
    %2589 = vmatpush1.msra.mxu0 0.0
    %2590 = vmatprep.subr.mxu0 0.0
    %2591 = vmatpush1.msra.mxu0 0.0
    %2592 = vmatprep.subr.mxu0 0.0
    %2593 = vmatpush1.msra.mxu0 0.0
    %2594 = vmatprep.subr.mxu0 0.0
    %2595 = vmatpush1.msra.mxu0 0.0
    %2596 = vmatprep.subr.mxu0 0.0
    %2597 = vmatpush1.msra.mxu0 0.0
    %2598 = vmatprep.subr.mxu0 0.0
    %2599 = vmatpush1.msra.mxu0 0.0
    %2600 = vmatprep.subr.mxu0 0.0
    %2601 = vmatpush1.msra.mxu0 0.0
    %2602 = vmatprep.subr.mxu0 0.0
    %2603 = vmatpush1.msra.mxu0 0.0
    %2604 = vmatprep.subr.mxu0 0.0
    %2605 = vmatpush1.msra.mxu0 0.0
    %2606 = vmatprep.subr.mxu0 0.0
    %2607 = vmatpush1.msra.mxu0 0.0
    %2608 = vmatprep.subr.mxu0 0.0
    %2609 = vmatpush1.msra.mxu0 0.0
    %2610 = vmatprep.subr.mxu0 0.0
    %2611 = vmatpush1.msra.mxu0 0.0
    %2612 = vmatprep.subr.mxu0 0.0
    %2613 = vmatpush1.msra.mxu0 0.0
    %2614 = vmatprep.subr.mxu0 0.0
    %2615 = vmatpush1.msra.mxu0 0.0
    %2616 = vmatprep.subr.mxu0 0.0
    %2617 = vmatpush1.msra.mxu0 0.0
    %2618 = vmatprep.subr.mxu0 0.0
    %2619 = vmatpush1.msra.mxu0 0.0
    %2620 = vmatprep.subr.mxu0 0.0
    %2621 = vmatpush1.msra.mxu0 0.0
    %2622 = vmatprep.subr.mxu0 0.0
    %2623 = vmatpush1.msra.mxu0 0.0
    %2624 = vmatprep.mubr.f32.mxu0 0.0
    %2625 = vmatmul.mubr.f32.gmra.mrb[0].mxu0 %v2460
    %v2626 = vpop.f32.mrb[0].mxu0
    %v2627 = vadd.f32 %v2442, %v2626
    %v2628 = vpop.f32.mrb[0].mxu0
    %v2629 = vadd.f32 %v2442, %v2628
    %2630 = vmatprep.mubr.f32.mxu0 0.0
    %2631 = vmatmul.mubr.f32.gmra.mrb[0].mxu0 %v2463
    %v2632 = vpop.f32.mrb[0].mxu0
    %v2633 = vadd.f32 %v2447, %v2632
    %v2634 = vpop.f32.mrb[0].mxu0
    %v2635 = vadd.f32 %v2447, %v2634
    %2636 = vmatprep.mubr.f32.mxu0 0.0
    %2637 = vmatmul.mubr.f32.gmra.mrb[0].mxu0 %v2466
    %v2638 = vpop.f32.mrb[0].mxu0
    %v2639 = vadd.f32 %v2452, %v2638
    %v2640 = vpop.f32.mrb[0].mxu0
    %v2641 = vadd.f32 %v2452, %v2640
    %2642 = vmatprep.mubr.f32.mxu0 0.0
    %2643 = vmatmul.mubr.f32.gmra.mrb[0].mxu0 %v2469
    %v2644 = vpop.f32.mrb[0].mxu0
    %v2645 = vadd.f32 %v2457, %v2644
    %v2646 = vpop.f32.mrb[0].mxu0
    %v2647 = vadd.f32 %v2457, %v2646
    %2648 = vdwg.mxu0
    %v2649 = vmax.f32 %v2538, 0.0
    %v2650 = vmax.f32 %v2540, 0.0
    %v2651 = vmax.f32 %v2627, 0.0
    %v2652 = vmax.f32 %v2629, 0.0
    %v2653 = vmax.f32 %v2544, 0.0
    %v2654 = vmax.f32 %v2546, 0.0
    %v2655 = vmax.f32 %v2633, 0.0
    %v2656 = vmax.f32 %v2635, 0.0
    %v2657 = vmax.f32 %v2550, 0.0
    %v2658 = vmax.f32 %v2552, 0.0
    %v2659 = vmax.f32 %v2639, 0.0
    %v2660 = vmax.f32 %v2641, 0.0
    %v2661 = vmax.f32 %v2556, 0.0
    %v2662 = vmax.f32 %v2558, 0.0
    %v2663 = vmax.f32 %v2645, 0.0
    %v2664 = vmax.f32 %v2647, 0.0
    %v2665 = vld [vmem:[%s17] sm:$0xff]
    %v2666 = vld [vmem:[%s17 + $0x8] sm:$0xff]
    %v2667 = vld [vmem:[%s17 + $0x10] sm:$0xff]
    %v2668 = vld [vmem:[%s17 + $0x18] sm:$0xff]
    %v2669 = vld [vmem:[%s18] sm:$0xff]
    %v2670 = vld [vmem:[%s18 + $0x8] sm:$0xff]
    %v2671 = vld [vmem:[%s18 + $0x10] sm:$0xff]
    %v2672 = vld [vmem:[%s18 + $0x18] sm:$0xff]
    %2674 = vset.pattern.permute.xlu0 0
    %2675 = vperm.xlu0 %2674, %v2669
    %v2676 = vpop.permute.xlu0 %2675
    %2679 = vset.pattern.permute.xlu0 0
    %2680 = vperm.xlu0 %2679, %v2670
    %v2681 = vpop.permute.xlu0 %2680
    %2684 = vset.pattern.permute.xlu0 0
    %2685 = vperm.xlu0 %2684, %v2671
    %v2686 = vpop.permute.xlu0 %2685
    %2689 = vset.pattern.permute.xlu0 0
    %2690 = vperm.xlu0 %2689, %v2672
    %v2691 = vpop.permute.xlu0 %2690
    %v2694 = vsel %vm313, %v2665, 0
    %v2697 = vsel %vm313, %v2666, 0
    %v2700 = vsel %vm313, %v2667, 0
    %v2703 = vsel %vm313, %v2668, 0
    %2705 = vmatprep.subr.mxu0 %v2650
    %2706 = vmatpush1.msra.mxu0 %v2649
    %2707 = vmatprep.subr.mxu0 %v2654
    %2708 = vmatpush1.msra.mxu0 %v2653
    %2709 = vmatprep.subr.mxu0 %v2658
    %2710 = vmatpush1.msra.mxu0 %v2657
    %2711 = vmatprep.subr.mxu0 %v2662
    %2712 = vmatpush1.msra.mxu0 %v2661
    %2713 = vmatprep.subr.mxu0 0.0
    %2714 = vmatpush1.msra.mxu0 0.0
    %2715 = vmatprep.subr.mxu0 0.0
    %2716 = vmatpush1.msra.mxu0 0.0
    %2717 = vmatprep.subr.mxu0 0.0
    %2718 = vmatpush1.msra.mxu0 0.0
    %2719 = vmatprep.subr.mxu0 0.0
    %2720 = vmatpush1.msra.mxu0 0.0
    %2721 = vmatprep.subr.mxu0 0.0
    %2722 = vmatpush1.msra.mxu0 0.0
    %2723 = vmatprep.subr.mxu0 0.0
    %2724 = vmatpush1.msra.mxu0 0.0
    %2725 = vmatprep.subr.mxu0 0.0
    %2726 = vmatpush1.msra.mxu0 0.0
    %2727 = vmatprep.subr.mxu0 0.0
    %2728 = vmatpush1.msra.mxu0 0.0
    %2729 = vmatprep.subr.mxu0 0.0
    %2730 = vmatpush1.msra.mxu0 0.0
    %2731 = vmatprep.subr.mxu0 0.0
    %2732 = vmatpush1.msra.mxu0 0.0
    %2733 = vmatprep.subr.mxu0 0.0
    %2734 = vmatpush1.msra.mxu0 0.0
    %2735 = vmatprep.subr.mxu0 0.0
    %2736 = vmatpush1.msra.mxu0 0.0
    %2737 = vmatprep.subr.mxu0 0.0
    %2738 = vmatpush1.msra.mxu0 0.0
    %2739 = vmatprep.subr.mxu0 0.0
    %2740 = vmatpush1.msra.mxu0 0.0
    %2741 = vmatprep.subr.mxu0 0.0
    %2742 = vmatpush1.msra.mxu0 0.0
    %2743 = vmatprep.subr.mxu0 0.0
    %2744 = vmatpush1.msra.mxu0 0.0
    %2745 = vmatprep.subr.mxu0 0.0
    %2746 = vmatpush1.msra.mxu0 0.0
    %2747 = vmatprep.subr.mxu0 0.0
    %2748 = vmatpush1.msra.mxu0 0.0
    %2749 = vmatprep.subr.mxu0 0.0
    %2750 = vmatpush1.msra.mxu0 0.0
    %2751 = vmatprep.subr.mxu0 0.0
    %2752 = vmatpush1.msra.mxu0 0.0
    %2753 = vmatprep.subr.mxu0 0.0
    %2754 = vmatpush1.msra.mxu0 0.0
    %2755 = vmatprep.subr.mxu0 0.0
    %2756 = vmatpush1.msra.mxu0 0.0
    %2757 = vmatprep.subr.mxu0 0.0
    %2758 = vmatpush1.msra.mxu0 0.0
    %2759 = vmatprep.subr.mxu0 0.0
    %2760 = vmatpush1.msra.mxu0 0.0
    %2761 = vmatprep.subr.mxu0 0.0
    %2762 = vmatpush1.msra.mxu0 0.0
    %2763 = vmatprep.subr.mxu0 0.0
    %2764 = vmatpush1.msra.mxu0 0.0
    %2765 = vmatprep.subr.mxu0 0.0
    %2766 = vmatpush1.msra.mxu0 0.0
    %2767 = vmatprep.subr.mxu0 0.0
    %2768 = vmatpush1.msra.mxu0 0.0
    %2769 = vmatprep.mubr.f32.mxu0 0.0
    %2770 = vmatmul.mubr.f32.gmra.mrb[0].mxu0 %v2694
    %v2771 = vpop.f32.mrb[0].mxu0
    %v2772 = vadd.f32 %v2676, %v2771
    %v2773 = vpop.f32.mrb[0].mxu0
    %v2774 = vadd.f32 %v2676, %v2773
    %2775 = vmatprep.mubr.f32.mxu0 0.0
    %2776 = vmatmul.mubr.f32.gmra.mrb[0].mxu0 %v2697
    %v2777 = vpop.f32.mrb[0].mxu0
    %v2778 = vadd.f32 %v2681, %v2777
    %v2779 = vpop.f32.mrb[0].mxu0
    %v2780 = vadd.f32 %v2681, %v2779
    %2781 = vmatprep.mubr.f32.mxu0 0.0
    %2782 = vmatmul.mubr.f32.gmra.mrb[0].mxu0 %v2700
    %v2783 = vpop.f32.mrb[0].mxu0
    %v2784 = vadd.f32 %v2686, %v2783
    %v2785 = vpop.f32.mrb[0].mxu0
    %v2786 = vadd.f32 %v2686, %v2785
    %2787 = vmatprep.mubr.f32.mxu0 0.0
    %2788 = vmatmul.mubr.f32.gmra.mrb[0].mxu0 %v2703
    %v2789 = vpop.f32.mrb[0].mxu0
    %v2790 = vadd.f32 %v2691, %v2789
    %v2791 = vpop.f32.mrb[0].mxu0
    %v2792 = vadd.f32 %v2691, %v2791
    %2793 = vdwg.mxu0
    %2794 = vmatprep.subr.mxu0 %v2652
    %2795 = vmatpush1.msra.mxu0 %v2651
    %2796 = vmatprep.subr.mxu0 %v2656
    %2797 = vmatpush1.msra.mxu0 %v2655
    %2798 = vmatprep.subr.mxu0 %v2660
    %2799 = vmatpush1.msra.mxu0 %v2659
    %2800 = vmatprep.subr.mxu0 %v2664
    %2801 = vmatpush1.msra.mxu0 %v2663
    %2802 = vmatprep.subr.mxu0 0.0
    %2803 = vmatpush1.msra.mxu0 0.0
    %2804 = vmatprep.subr.mxu0 0.0
    %2805 = vmatpush1.msra.mxu0 0.0
    %2806 = vmatprep.subr.mxu0 0.0
    %2807 = vmatpush1.msra.mxu0 0.0
    %2808 = vmatprep.subr.mxu0 0.0
    %2809 = vmatpush1.msra.mxu0 0.0
    %2810 = vmatprep.subr.mxu0 0.0
    %2811 = vmatpush1.msra.mxu0 0.0
    %2812 = vmatprep.subr.mxu0 0.0
    %2813 = vmatpush1.msra.mxu0 0.0
    %2814 = vmatprep.subr.mxu0 0.0
    %2815 = vmatpush1.msra.mxu0 0.0
    %2816 = vmatprep.subr.mxu0 0.0
    %2817 = vmatpush1.msra.mxu0 0.0
    %2818 = vmatprep.subr.mxu0 0.0
    %2819 = vmatpush1.msra.mxu0 0.0
    %2820 = vmatprep.subr.mxu0 0.0
    %2821 = vmatpush1.msra.mxu0 0.0
    %2822 = vmatprep.subr.mxu0 0.0
    %2823 = vmatpush1.msra.mxu0 0.0
    %2824 = vmatprep.subr.mxu0 0.0
    %2825 = vmatpush1.msra.mxu0 0.0
    %2826 = vmatprep.subr.mxu0 0.0
    %2827 = vmatpush1.msra.mxu0 0.0
    %2828 = vmatprep.subr.mxu0 0.0
    %2829 = vmatpush1.msra.mxu0 0.0
    %2830 = vmatprep.subr.mxu0 0.0
    %2831 = vmatpush1.msra.mxu0 0.0
    %2832 = vmatprep.subr.mxu0 0.0
    %2833 = vmatpush1.msra.mxu0 0.0
    %2834 = vmatprep.subr.mxu0 0.0
    %2835 = vmatpush1.msra.mxu0 0.0
    %2836 = vmatprep.subr.mxu0 0.0
    %2837 = vmatpush1.msra.mxu0 0.0
    %2838 = vmatprep.subr.mxu0 0.0
    %2839 = vmatpush1.msra.mxu0 0.0
    %2840 = vmatprep.subr.mxu0 0.0
    %2841 = vmatpush1.msra.mxu0 0.0
    %2842 = vmatprep.subr.mxu0 0.0
    %2843 = vmatpush1.msra.mxu0 0.0
    %2844 = vmatprep.subr.mxu0 0.0
    %2845 = vmatpush1.msra.mxu0 0.0
    %2846 = vmatprep.subr.mxu0 0.0
    %2847 = vmatpush1.msra.mxu0 0.0
    %2848 = vmatprep.subr.mxu0 0.0
    %2849 = vmatpush1.msra.mxu0 0.0
    %2850 = vmatprep.subr.mxu0 0.0
    %2851 = vmatpush1.msra.mxu0 0.0
    %2852 = vmatprep.subr.mxu0 0.0
    %2853 = vmatpush1.msra.mxu0 0.0
    %2854 = vmatprep.subr.mxu0 0.0
    %2855 = vmatpush1.msra.mxu0 0.0
    %2856 = vmatprep.subr.mxu0 0.0
    %2857 = vmatpush1.msra.mxu0 0.0
    %2858 = vmatprep.mubr.f32.mxu0 0.0
    %2859 = vmatmul.mubr.f32.gmra.mrb[0].mxu0 %v2694
    %v2860 = vpop.f32.mrb[0].mxu0
    %v2861 = vadd.f32 %v2676, %v2860
    %v2862 = vpop.f32.mrb[0].mxu0
    %v2863 = vadd.f32 %v2676, %v2862
    %2864 = vmatprep.mubr.f32.mxu0 0.0
    %2865 = vmatmul.mubr.f32.gmra.mrb[0].mxu0 %v2697
    %v2866 = vpop.f32.mrb[0].mxu0
    %v2867 = vadd.f32 %v2681, %v2866
    %v2868 = vpop.f32.mrb[0].mxu0
    %v2869 = vadd.f32 %v2681, %v2868
    %2870 = vmatprep.mubr.f32.mxu0 0.0
    %2871 = vmatmul.mubr.f32.gmra.mrb[0].mxu0 %v2700
    %v2872 = vpop.f32.mrb[0].mxu0
    %v2873 = vadd.f32 %v2686, %v2872
    %v2874 = vpop.f32.mrb[0].mxu0
    %v2875 = vadd.f32 %v2686, %v2874
    %2876 = vmatprep.mubr.f32.mxu0 0.0
    %2877 = vmatmul.mubr.f32.gmra.mrb[0].mxu0 %v2703
    %v2878 = vpop.f32.mrb[0].mxu0
    %v2879 = vadd.f32 %v2691, %v2878
    %v2880 = vpop.f32.mrb[0].mxu0
    %v2881 = vadd.f32 %v2691, %v2880
    %2882 = vdwg.mxu0
    %v2883 = vmax.f32 %v2772, 0.0
    %v2884 = vmax.f32 %v2774, 0.0
    %v2885 = vmax.f32 %v2861, 0.0
    %v2886 = vmax.f32 %v2863, 0.0
    %v2887 = vmax.f32 %v2778, 0.0
    %v2888 = vmax.f32 %v2780, 0.0
    %v2889 = vmax.f32 %v2867, 0.0
    %v2890 = vmax.f32 %v2869, 0.0
    %v2891 = vmax.f32 %v2784, 0.0
    %v2892 = vmax.f32 %v2786, 0.0
    %v2893 = vmax.f32 %v2873, 0.0
    %v2894 = vmax.f32 %v2875, 0.0
    %v2895 = vmax.f32 %v2790, 0.0
    %v2896 = vmax.f32 %v2792, 0.0
    %v2897 = vmax.f32 %v2879, 0.0
    %v2898 = vmax.f32 %v2881, 0.0
    %v2899 = vld [vmem:[%s19] sm:$0x1]
    %v2900 = vld [vmem:[#allocation2] sm:$0x1]
    %2902 = vset.pattern.permute.xlu0 0
    %2903 = vperm.xlu0 %2902, %v2900
    %v2904 = vpop.permute.xlu0 %2903
    %v2906 = vlaneseq
    %v2907 = vshrl.u32 %v2906, 7
    %v2908 = vsub.s32 0, %v2907
    %v2909 = vrot.slane %v2904, %v2908
    %v2911 = vsel %vm313, %v2899, 0
    %2913 = vmatprep.subr.mxu0 %v2884
    %2914 = vmatpush1.msra.mxu0 %v2883
    %2915 = vmatprep.subr.mxu0 %v2888
    %2916 = vmatpush1.msra.mxu0 %v2887
    %2917 = vmatprep.subr.mxu0 %v2892
    %2918 = vmatpush1.msra.mxu0 %v2891
    %2919 = vmatprep.subr.mxu0 %v2896
    %2920 = vmatpush1.msra.mxu0 %v2895
    %2921 = vmatprep.subr.mxu0 0.0
    %2922 = vmatpush1.msra.mxu0 0.0
    %2923 = vmatprep.subr.mxu0 0.0
    %2924 = vmatpush1.msra.mxu0 0.0
    %2925 = vmatprep.subr.mxu0 0.0
    %2926 = vmatpush1.msra.mxu0 0.0
    %2927 = vmatprep.subr.mxu0 0.0
    %2928 = vmatpush1.msra.mxu0 0.0
    %2929 = vmatprep.subr.mxu0 0.0
    %2930 = vmatpush1.msra.mxu0 0.0
    %2931 = vmatprep.subr.mxu0 0.0
    %2932 = vmatpush1.msra.mxu0 0.0
    %2933 = vmatprep.subr.mxu0 0.0
    %2934 = vmatpush1.msra.mxu0 0.0
    %2935 = vmatprep.subr.mxu0 0.0
    %2936 = vmatpush1.msra.mxu0 0.0
    %2937 = vmatprep.subr.mxu0 0.0
    %2938 = vmatpush1.msra.mxu0 0.0
    %2939 = vmatprep.subr.mxu0 0.0
    %2940 = vmatpush1.msra.mxu0 0.0
    %2941 = vmatprep.subr.mxu0 0.0
    %2942 = vmatpush1.msra.mxu0 0.0
    %2943 = vmatprep.subr.mxu0 0.0
    %2944 = vmatpush1.msra.mxu0 0.0
    %2945 = vmatprep.subr.mxu0 0.0
    %2946 = vmatpush1.msra.mxu0 0.0
    %2947 = vmatprep.subr.mxu0 0.0
    %2948 = vmatpush1.msra.mxu0 0.0
    %2949 = vmatprep.subr.mxu0 0.0
    %2950 = vmatpush1.msra.mxu0 0.0
    %2951 = vmatprep.subr.mxu0 0.0
    %2952 = vmatpush1.msra.mxu0 0.0
    %2953 = vmatprep.subr.mxu0 0.0
    %2954 = vmatpush1.msra.mxu0 0.0
    %2955 = vmatprep.subr.mxu0 0.0
    %2956 = vmatpush1.msra.mxu0 0.0
    %2957 = vmatprep.subr.mxu0 0.0
    %2958 = vmatpush1.msra.mxu0 0.0
    %2959 = vmatprep.subr.mxu0 0.0
    %2960 = vmatpush1.msra.mxu0 0.0
    %2961 = vmatprep.subr.mxu0 0.0
    %2962 = vmatpush1.msra.mxu0 0.0
    %2963 = vmatprep.subr.mxu0 0.0
    %2964 = vmatpush1.msra.mxu0 0.0
    %2965 = vmatprep.subr.mxu0 0.0
    %2966 = vmatpush1.msra.mxu0 0.0
    %2967 = vmatprep.subr.mxu0 0.0
    %2968 = vmatpush1.msra.mxu0 0.0
    %2969 = vmatprep.subr.mxu0 0.0
    %2970 = vmatpush1.msra.mxu0 0.0
    %2971 = vmatprep.subr.mxu0 0.0
    %2972 = vmatpush1.msra.mxu0 0.0
    %2973 = vmatprep.subr.mxu0 0.0
    %2974 = vmatpush1.msra.mxu0 0.0
    %2975 = vmatprep.subr.mxu0 0.0
    %2976 = vmatpush1.msra.mxu0 0.0
    %2977 = vmatprep.mubr.f32.mxu0 0.0
    %2978 = vmatmul.mubr.f32.gmra.mrb[0].mxu0 %v2911
    %v2979 = vpop.f32.mrb[0].mxu0
    %v2980 = vadd.f32 %v2909, %v2979
    %v2981 = vpop.f32.mrb[0].mxu0
    %v2982 = vadd.f32 %v2909, %v2981
    %2983 = vdwg.mxu0
    %2984 = vmatprep.subr.mxu0 %v2886
    %2985 = vmatpush1.msra.mxu0 %v2885
    %2986 = vmatprep.subr.mxu0 %v2890
    %2987 = vmatpush1.msra.mxu0 %v2889
    %2988 = vmatprep.subr.mxu0 %v2894
    %2989 = vmatpush1.msra.mxu0 %v2893
    %2990 = vmatprep.subr.mxu0 %v2898
    %2991 = vmatpush1.msra.mxu0 %v2897
    %2992 = vmatprep.subr.mxu0 0.0
    %2993 = vmatpush1.msra.mxu0 0.0
    %2994 = vmatprep.subr.mxu0 0.0
    %2995 = vmatpush1.msra.mxu0 0.0
    %2996 = vmatprep.subr.mxu0 0.0
    %2997 = vmatpush1.msra.mxu0 0.0
    %2998 = vmatprep.subr.mxu0 0.0
    %2999 = vmatpush1.msra.mxu0 0.0
    %3000 = vmatprep.subr.mxu0 0.0
    %3001 = vmatpush1.msra.mxu0 0.0
    %3002 = vmatprep.subr.mxu0 0.0
    %3003 = vmatpush1.msra.mxu0 0.0
    %3004 = vmatprep.subr.mxu0 0.0
    %3005 = vmatpush1.msra.mxu0 0.0
    %3006 = vmatprep.subr.mxu0 0.0
    %3007 = vmatpush1.msra.mxu0 0.0
    %3008 = vmatprep.subr.mxu0 0.0
    %3009 = vmatpush1.msra.mxu0 0.0
    %3010 = vmatprep.subr.mxu0 0.0
    %3011 = vmatpush1.msra.mxu0 0.0
    %3012 = vmatprep.subr.mxu0 0.0
    %3013 = vmatpush1.msra.mxu0 0.0
    %3014 = vmatprep.subr.mxu0 0.0
    %3015 = vmatpush1.msra.mxu0 0.0
    %3016 = vmatprep.subr.mxu0 0.0
    %3017 = vmatpush1.msra.mxu0 0.0
    %3018 = vmatprep.subr.mxu0 0.0
    %3019 = vmatpush1.msra.mxu0 0.0
    %3020 = vmatprep.subr.mxu0 0.0
    %3021 = vmatpush1.msra.mxu0 0.0
    %3022 = vmatprep.subr.mxu0 0.0
    %3023 = vmatpush1.msra.mxu0 0.0
    %3024 = vmatprep.subr.mxu0 0.0
    %3025 = vmatpush1.msra.mxu0 0.0
    %3026 = vmatprep.subr.mxu0 0.0
    %3027 = vmatpush1.msra.mxu0 0.0
    %3028 = vmatprep.subr.mxu0 0.0
    %3029 = vmatpush1.msra.mxu0 0.0
    %3030 = vmatprep.subr.mxu0 0.0
    %3031 = vmatpush1.msra.mxu0 0.0
    %3032 = vmatprep.subr.mxu0 0.0
    %3033 = vmatpush1.msra.mxu0 0.0
    %3034 = vmatprep.subr.mxu0 0.0
    %3035 = vmatpush1.msra.mxu0 0.0
    %3036 = vmatprep.subr.mxu0 0.0
    %3037 = vmatpush1.msra.mxu0 0.0
    %3038 = vmatprep.subr.mxu0 0.0
    %3039 = vmatpush1.msra.mxu0 0.0
    %3040 = vmatprep.subr.mxu0 0.0
    %3041 = vmatpush1.msra.mxu0 0.0
    %3042 = vmatprep.subr.mxu0 0.0
    %3043 = vmatpush1.msra.mxu0 0.0
    %3044 = vmatprep.subr.mxu0 0.0
    %3045 = vmatpush1.msra.mxu0 0.0
    %3046 = vmatprep.subr.mxu0 0.0
    %3047 = vmatpush1.msra.mxu0 0.0
    %3048 = vmatprep.mubr.f32.mxu0 0.0
    %3049 = vmatmul.mubr.f32.gmra.mrb[0].mxu0 %v2911
    %v3050 = vpop.f32.mrb[0].mxu0
    %v3051 = vadd.f32 %v2909, %v3050
    %v3052 = vpop.f32.mrb[0].mxu0
    %v3053 = vadd.f32 %v2909, %v3052
    %3054 = vdwg.mxu0
    %v3059 = vcombine.low %v2980, %v2982
    %v3060 = vcombine.low %v3051, %v3053
    %v3062 = vunpack.c.l.s4 1966171168
    %v3063 = vunpack.c.0.s8 %v3062
    %v3064 = vlaneseq
    %v3065 = vshrl.u32 %v3064, 7
    %v3066 = vsub.s32 %v3063, %v3065
    %v3067 = vrot.slane %v3059, %v3066
    %v3069 = vunpack.c.l.s4 1966171168
    %v3070 = vunpack.c.0.s8 %v3069
    %v3071 = vlaneseq
    %v3072 = vshrl.u32 %v3071, 7
    %v3073 = vsub.s32 %v3070, %v3072
    %v3074 = vrot.slane %v3060, %v3073
    %v3075 = vcombine.low %v3067, %v3074
    %v3077 = vunpack.c.l.s4 1966171168
    %v3078 = vunpack.c.0.s8 %v3077
    %v3079 = vlaneseq
    %v3080 = vshrl.u32 %v3079, 7
    %v3081 = vsub.s32 %v3078, %v3080
    %v3082 = vrot.slane %v3075, %v3081
    %v3084 = vlaneseq
    %vm3085 = vcmp.ge.s32.totalorder %v3084, 0
    %vm3086 = vcmp.lt.s32.totalorder %v3084, 512
    %vm3087 = vmand %vm3085, %vm3086
    %3088 = vst.msk [vmem:[#allocation15] sm:$0xf] %vm3087, %v3082
    // Predicated region
    $region114: #{foodbank_gnn_forward.1} parent=1 // pred_check
      _
    $region115: #{foodbank_gnn_forward.1} parent=1 // pred_check_branch
      %3090 = sbr.rel (0) target = $region117
    $region116: #{foodbank_gnn_forward.1} parent=1 // pred_region
      %s3092 = ssub.s32 64, 64
      %3093 = vsyncadd [#allocation5], %s3092
      %s3095 = sshll.u32 [#allocation15], 4
      %s3096 = int_to_ptr.vmem [resolvable:$true] %s3095
      %3098 = dma.vmem_to_hbm [thread:$0]  %s3096, 64, %s21, [#allocation5]
    $region117: #{foodbank_gnn_forward.1} parent=1 // pred_fallthru
      _
    // Predicated region
    $region118: #{foodbank_gnn_forward.1} parent=1 // pred_check
      _
    $region119: #{foodbank_gnn_forward.1} parent=1 // pred_check_branch
      %3100 = sbr.rel (0) target = $region121
    $region120: #{foodbank_gnn_forward.1} parent=1 // pred_region
      %3101 = dma.done [#allocation5], 64
    $region121: #{foodbank_gnn_forward.1} parent=1 // pred_fallthru
      _
    %3102 = vsyncpa [#allocation4], 1
    %3103 = vsyncpa [#allocation7], 1
    %3104 = vsyncpa [#allocation10], 1
    %3105 = vsyncpa [#allocation13], 1
    %3106 = vsyncpa [#allocation5], 1

</llo_original>
